<compile_context>
chip_gen: v7x
topology: tpu7x:2x2x1
jax: 0.10.0
libtpu: 0.0.40
codegen_flags: <defaults>
</compile_context>

<pallas_src>
import functools

import jax
import jax.numpy as jnp
from jax import lax
from jax.experimental import pallas as pl
from jax.experimental.pallas import tpu as pltpu


# --------------------------------------------------------------------------- #
# Fused tap-conv Pallas kernel
# --------------------------------------------------------------------------- #
def _tapconv_kernel(*refs, n_src, taps, ho, wo, has_res):
    """out = sum_t relu(src_t * scale + shift) @ W[t]  (+ residual)

    refs (in order): src_0..src_{n_src-1}, w, scale, shift, [res], out
      src_i : (1, Hs, Ws, Cin) f32   padded input (or a stride-2 phase view)
      w     : (ntaps, Cin, Ct) bf16
      scale : (1, Cin) f32           folded BN scale
      shift : (1, Cin) f32           folded BN shift
      res   : (1, ho*wo, Ct) f32     optional fused residual
      out   : (1, ho*wo, Ct) f32
    """
    srcs = refs[:n_src]
    w_ref = refs[n_src]
    scale_ref = refs[n_src + 1]
    shift_ref = refs[n_src + 2]
    res_ref = refs[n_src + 3] if has_res else None
    o_ref = refs[-1]

    cin = srcs[0].shape[-1]
    ct = o_ref.shape[-1]

    if has_res:
        acc = res_ref[0].astype(jnp.float32)            # fused residual (epilogue add)
    else:
        acc = jnp.zeros((ho * wo, ct), jnp.float32)     # no zero DMA from HBM

    scale = scale_ref[...]                              # (1, Cin)
    shift = shift_ref[...]

    # Unrolled 9-tap (or 1-tap) accumulation; BN+ReLU fused on the VPU, matmul on
    # the MXU with bf16 operands and f32 accumulation.
    for t, (si, oy, ox) in enumerate(taps):
        p = srcs[si][0, oy:oy + ho, ox:ox + wo, :]      # (ho, wo, Cin) f32, static slice
        p = jnp.maximum(p * scale + shift, 0.0)         # fused BN(eval) + ReLU prologue
        a = p.reshape(ho * wo, cin).astype(jnp.bfloat16)
        acc = acc + jnp.dot(a, w_ref[t], preferred_element_type=jnp.float32)

    o_ref[0] = acc


def _choose_cout_tile(cout):
    # Lane-dense output tiles when the channel count allows it (real WRN widths);
    # tiny demo widths fall back to the full extent.
    if cout % 256 == 0:
        return 256
    if cout % 128 == 0:
        return 128
    return cout


def _tapconv(srcs, taps, w, scale, shift, residual, ho, wo):
    """Run the fused tap-conv kernel.  Returns (N, ho*wo, Cout) f32."""
    n, _, _, cin = srcs[0].shape
    ntaps, _, cout = w.shape
    assert ntaps == len(taps)
    has_res = residual is not None

    tn = _choose_cout_tile(cout)
    grid = (n, cout // tn)

    inputs, in_specs = [], []
    for s in srcs:
        hs, ws = s.shape[1], s.shape[2]
        inputs.append(s)
        in_specs.append(pl.BlockSpec((1, hs, ws, cin), lambda i, j: (i, 0, 0, 0)))
    inputs.append(w)
    in_specs.append(pl.BlockSpec((ntaps, cin, tn), lambda i, j: (0, 0, j)))
    inputs.append(scale)
    in_specs.append(pl.BlockSpec((1, cin), lambda i, j: (0, 0)))
    inputs.append(shift)
    in_specs.append(pl.BlockSpec((1, cin), lambda i, j: (0, 0)))
    if has_res:
        inputs.append(residual)
        in_specs.append(pl.BlockSpec((1, ho * wo, tn), lambda i, j: (i, 0, j)))

    kernel = functools.partial(
        _tapconv_kernel, n_src=len(srcs), taps=tuple(taps),
        ho=ho, wo=wo, has_res=has_res)

    return pl.pallas_call(
        kernel,
        out_shape=jax.ShapeDtypeStruct((n, ho * wo, cout), jnp.float32),
        grid=grid,
        in_specs=in_specs,
        out_specs=pl.BlockSpec((1, ho * wo, tn), lambda i, j: (i, 0, j)),
        compiler_params=pltpu.CompilerParams(
            dimension_semantics=("parallel", "parallel"),
            vmem_limit_bytes=32 * 1024 * 1024,
        ),
    )(*inputs)


# --------------------------------------------------------------------------- #
# XLA glue: padding + stride-2 phase split (1x activation traffic each)
# --------------------------------------------------------------------------- #
def _pad_for_bnrelu(x, scale, shift):
    """Spatial pad=1 with the per-channel value v = -shift/scale so the fused
    in-kernel relu(x*scale+shift) evaluates to exactly 0 at padded positions
    (reference semantics: zero padding is applied AFTER bn+relu)."""
    pv = (-shift / scale).reshape(1, 1, 1, -1)
    return jnp.pad(x - pv, ((0, 0), (1, 1), (1, 1), (0, 0))) + pv


# --------------------------------------------------------------------------- #
# BasicBlock / NetworkBlock forward (Pallas path, NHWC)
# --------------------------------------------------------------------------- #
def basic_block(x, p, stride):
    n, h, w, cin = x.shape
    cout = p["w1"].shape[-1]
    equal = cin == cout
    assert stride in (1, 2)

    ho = (h + 2 - 3) // stride + 1
    wo = (w + 2 - 3) // stride + 1

    x_pad = _pad_for_bnrelu(x, p["bn1_scale"], p["bn1_shift"])

    if stride == 1:
        conv1_srcs = [x_pad]
        taps3 = [(0, ky, kx) for ky in range(3) for kx in range(3)]
        sc_srcs, sc_tap = [x_pad], [(0, 1, 1)]
    else:
        # Space-to-depth: 4 stride-2 phase views of the padded input; every 3x3 tap
        # then reads a contiguous (ho, wo) window of one phase inside the kernel.
        phases = [x_pad[:, py::2, px::2, :] for py in (0, 1) for px in (0, 1)]
        conv1_srcs = phases
        taps3 = [(2 * (ky % 2) + (kx % 2), ky // 2, kx // 2)
                 for ky in range(3) for kx in range(3)]
        sc_srcs, sc_tap = [phases[3]], [(0, 0, 0)]   # x_pad[1::2, 1::2] == x[::2, ::2]

    # conv1 (3x3, stride) with bn1+relu fused in the prologue; no residual.
    y = _tapconv(conv1_srcs, taps3, p["w1"], p["bn1_scale"], p["bn1_shift"],
                 None, ho, wo)                                  # (n, ho*wo, cout)

    # Shortcut branch.
    if equal:
        shortcut = x.reshape(n, h * w, cin)
    else:
        # 1x1 shortcut conv, bn1+relu recomputed in its prologue (o1 never stored).
        shortcut = _tapconv(sc_srcs, sc_tap, p["ws"], p["bn1_scale"],
                            p["bn1_shift"], None, ho, wo)

    # conv2 (3x3, stride 1) with bn2+relu fused prologue and the shortcut fused
    # into the epilogue (no separate residual-add pass).
    y_pad = _pad_for_bnrelu(y.reshape(n, ho, wo, cout), p["bn2_scale"], p["bn2_shift"])
    taps3_s1 = [(0, ky, kx) for ky in range(3) for kx in range(3)]
    out = _tapconv([y_pad], taps3_s1, p["w2"], p["bn2_scale"], p["bn2_shift"],
                   shortcut, ho, wo)

    # TODO(synk): dropout (dropRate > 0, training mode) not implemented; dropRate=0.0
    #             (the module default) makes it the identity.
    return out.reshape(n, ho, wo, cout)


def network_block_forward(x_nchw, prep_params, stride):
    x = jnp.transpose(x_nchw, (0, 2, 3, 1))  # NCHW -> NHWC
    for i, p in enumerate(prep_params):
        x = basic_block(x, p, stride if i == 0 else 1)
    return jnp.transpose(x, (0, 3, 1, 2))    # NHWC -> NCHW


# --------------------------------------------------------------------------- #
# Parameter prep: weight layout + bf16 cast done ONCE, not per forward
# --------------------------------------------------------------------------- #
def prepare_params(raw_params):
    prepped = []
    for rp in raw_params:
        cout, cin = rp["conv1_w"].shape[0], rp["conv1_w"].shape[1]
        p = {
            "w1": jnp.transpose(rp["conv1_w"], (2, 3, 1, 0))
                  .reshape(9, cin, cout).astype(jnp.bfloat16),
            "w2": jnp.transpose(rp["conv2_w"], (2, 3, 1, 0))
                  .reshape(9, cout, cout).astype(jnp.bfloat16),
            "bn1_scale": rp["bn1_scale"].reshape(1, cin),
            "bn1_shift": rp["bn1_shift"].reshape(1, cin),
            "bn2_scale": rp["bn2_scale"].reshape(1, cout),
            "bn2_shift": rp["bn2_shift"].reshape(1, cout),
        }
        if "convS_w" in rp:
            p["ws"] = jnp.transpose(rp["convS_w"], (2, 3, 1, 0))\
                      .reshape(1, cin, cout).astype(jnp.bfloat16)
        prepped.append(p)
    return prepped


# --------------------------------------------------------------------------- #
# Deterministic parameter init (BatchNorm folded to eval-mode scale/shift)
# --------------------------------------------------------------------------- #
def _fold_bn(gamma, beta, mean, var, eps=1e-5):
    scale = gamma / jnp.sqrt(var + eps)
    return scale, beta - mean * scale


def init_basic_block(key, cin, cout):
    ks = jax.random.split(key, 12)

    def conv_w(k, co, ci, kh, kw):
        fan = ci * kh * kw
        return jax.random.normal(k, (co, ci, kh, kw), jnp.float32) * (2.0 / fan) ** 0.5

    p = {}
    p["conv1_w"] = conv_w(ks[0], cout, cin, 3, 3)
    p["conv2_w"] = conv_w(ks[1], cout, cout, 3, 3)

    g1 = 1.0 + 0.1 * jax.random.normal(ks[2], (cin,), jnp.float32)
    b1 = 0.1 * jax.random.normal(ks[3], (cin,), jnp.float32)
    m1 = 0.1 * jax.random.normal(ks[4], (cin,), jnp.float32)
    v1 = 1.0 + 0.1 * jax.random.uniform(ks[5], (cin,), jnp.float32)
    p["bn1_scale"], p["bn1_shift"] = _fold_bn(g1, b1, m1, v1)

    g2 = 1.0 + 0.1 * jax.random.normal(ks[6], (cout,), jnp.float32)
    b2 = 0.1 * jax.random.normal(ks[7], (cout,), jnp.float32)
    m2 = 0.1 * jax.random.normal(ks[8], (cout,), jnp.float32)
    v2 = 1.0 + 0.1 * jax.random.uniform(ks[9], (cout,), jnp.float32)
    p["bn2_scale"], p["bn2_shift"] = _fold_bn(g2, b2, m2, v2)

    if cin != cout:
        p["convS_w"] = conv_w(ks[10], cout, cin, 1, 1)
    return p


def init_network_block(key, nb_layers, in_planes, out_planes):
    keys = jax.random.split(key, nb_layers)
    params = []
    for i in range(nb_layers):
        cin = in_planes if i == 0 else out_planes
        params.append(init_basic_block(keys[i], cin, out_planes))
    return params


# --------------------------------------------------------------------------- #
# Pure-JAX reference (fp32) for correctness check
# --------------------------------------------------------------------------- #
def _ref_conv(x_nhwc, w_torch, stride, pad):
    return lax.conv_general_dilated(
        x_nhwc,
        jnp.transpose(w_torch, (2, 3, 1, 0)),
        window_strides=(stride, stride),
        padding=[(pad, pad), (pad, pad)],
        dimension_numbers=("NHWC", "HWIO", "NHWC"),
    )


def _ref_basic_block(x, p, stride):
    cin = x.shape[-1]
    cout = p["conv1_w"].shape[0]
    equal = cin == cout
    o1 = jnp.maximum(x * p["bn1_scale"] + p["bn1_shift"], 0.0)
    out = _ref_conv(o1, p["conv1_w"], stride, 1)
    out = jnp.maximum(out * p["bn2_scale"] + p["bn2_shift"], 0.0)
    out = _ref_conv(out, p["conv2_w"], 1, 1)
    short = x if equal else _ref_conv(o1, p["convS_w"], stride, 0)
    return short + out


def network_block_ref(x_nchw, params, stride):
    x = jnp.transpose(x_nchw, (0, 2, 3, 1))
    for i, p in enumerate(params):
        x = _ref_basic_block(x, p, stride if i == 0 else 1)
    return jnp.transpose(x, (0, 3, 1, 2))


# --------------------------------------------------------------------------- #
if __name__ == "__main__":
    key = jax.random.PRNGKey(0)
    kx, kp = jax.random.split(key)

    # NetworkBlock(nb_layers=2, in_planes=4, out_planes=8, block=BasicBlock, stride=2)
    nb_layers, in_planes, out_planes, stride = 2, 4, 8, 2
    x = jax.random.normal(kx, (2, 4, 16, 16), jnp.float32)  # NCHW input
    raw_params = init_network_block(kp, nb_layers, in_planes, out_planes)
    params = prepare_params(raw_params)  # MXU layout + bf16 cast, done once

    fwd = jax.jit(functools.partial(network_block_forward, stride=stride))
    out = jax.block_until_ready(fwd(x, params))

    assert out.shape == (2, out_planes, 8, 8), out.shape
    ref = network_block_ref(x, raw_params, stride)
    max_err = float(jnp.max(jnp.abs(out - ref)))
    # bf16 MXU operands (f32 accumulation) -> looser tolerance than a pure-f32 path.
    assert jnp.allclose(out, ref, atol=5e-2, rtol=5e-2), max_err
    print("KERNEL_OK")
</pallas_src>

<mosaic_0001>
module attributes {stable_mosaic.version = 11 : i64} {
  func.func @_tapconv_kernel(%arg0: i32, %arg1: i32, %arg2: memref<1x9x9x4xf32, #tpu.memory_space<vmem>>, %arg3: memref<1x9x9x4xf32, #tpu.memory_space<vmem>>, %arg4: memref<1x9x9x4xf32, #tpu.memory_space<vmem>>, %arg5: memref<1x9x9x4xf32, #tpu.memory_space<vmem>>, %arg6: memref<9x4x8xbf16, #tpu.memory_space<vmem>>, %arg7: memref<1x4xf32, #tpu.memory_space<vmem>>, %arg8: memref<1x4xf32, #tpu.memory_space<vmem>>, %arg9: memref<1x64x8xf32, #tpu.memory_space<vmem>>) attributes {dimension_semantics = [#tpu.dimension_semantics<parallel>, #tpu.dimension_semantics<parallel>], iteration_bounds = array<i64: 2, 1>, scalar_prefetch = 0 : i64, scratch_operands = 0 : i64, tpu.core_type = #tpu.core_type<tc>, window_params = [{transform_indices = @transform_0, window_bounds = array<i64: 1, 9, 9, 4>}, {transform_indices = @transform_1, window_bounds = array<i64: 1, 9, 9, 4>}, {transform_indices = @transform_2, window_bounds = array<i64: 1, 9, 9, 4>}, {transform_indices = @transform_3, window_bounds = array<i64: 1, 9, 9, 4>}, {transform_indices = @transform_4, window_bounds = array<i64: 9, 4, 8>}, {pipeline_mode = #tpu.pipeline_mode<synchronous>, transform_indices = @transform_5, window_bounds = array<i64: 1, 4>}, {pipeline_mode = #tpu.pipeline_mode<synchronous>, transform_indices = @transform_6, window_bounds = array<i64: 1, 4>}, {transform_indices = @transform_7, window_bounds = array<i64: 1, 64, 8>}]} {
    %cst = arith.constant 0.000000e+00 : f32
    %0 = vector.broadcast %cst : f32 to vector<64x8xf32>
    %c0 = arith.constant 0 : index
    %c0_0 = arith.constant 0 : index
    %1 = vector.load %arg7[%c0, %c0_0] : memref<1x4xf32, #tpu.memory_space<vmem>>, vector<1x4xf32>
    %c0_1 = arith.constant 0 : index
    %c0_2 = arith.constant 0 : index
    %2 = vector.load %arg8[%c0_1, %c0_2] : memref<1x4xf32, #tpu.memory_space<vmem>>, vector<1x4xf32>
    %c0_3 = arith.constant 0 : index
    %c0_4 = arith.constant 0 : index
    %c0_5 = arith.constant 0 : index
    %c0_6 = arith.constant 0 : index
    %3 = vector.load %arg2[%c0_3, %c0_4, %c0_5, %c0_6] : memref<1x9x9x4xf32, #tpu.memory_space<vmem>>, vector<1x8x8x4xf32>
    %4 = vector.shape_cast %3 : vector<1x8x8x4xf32> to vector<8x8x4xf32>
    %5 = vector.shape_cast %1 : vector<1x4xf32> to vector<1x1x4xf32>
    %6 = vector.broadcast %5 : vector<1x1x4xf32> to vector<8x8x4xf32>
    %7 = arith.mulf %4, %6 : vector<8x8x4xf32>
    %8 = vector.shape_cast %2 : vector<1x4xf32> to vector<1x1x4xf32>
    %9 = vector.broadcast %8 : vector<1x1x4xf32> to vector<8x8x4xf32>
    %10 = arith.addf %7, %9 : vector<8x8x4xf32>
    %cst_7 = arith.constant 0.000000e+00 : f32
    %11 = vector.broadcast %cst_7 : f32 to vector<8x8x4xf32>
    %12 = arith.maximumf %10, %11 : vector<8x8x4xf32>
    %13 = vector.shape_cast %12 : vector<8x8x4xf32> to vector<64x4xf32>
    %14 = arith.truncf %13 : vector<64x4xf32> to vector<64x4xbf16>
    %c0_8 = arith.constant 0 : index
    %c0_9 = arith.constant 0 : index
    %c0_10 = arith.constant 0 : index
    %15 = vector.load %arg6[%c0_8, %c0_9, %c0_10] : memref<9x4x8xbf16, #tpu.memory_space<vmem>>, vector<1x4x8xbf16>
    %16 = vector.shape_cast %15 : vector<1x4x8xbf16> to vector<4x8xbf16>
    %cst_11 = arith.constant dense<0.000000e+00> : vector<64x8xf32>
    %17 = tpu.matmul %14, %16, %cst_11 {dimension_numbers = #tpu.dot_dimension_numbers<[1], [0], [0], [1], [0, 0, 1, 1], [], []>} : vector<64x4xbf16>, vector<4x8xbf16>, vector<64x8xf32> -> vector<64x8xf32>
    %18 = arith.addf %0, %17 : vector<64x8xf32>
    %c0_12 = arith.constant 0 : index
    %c0_13 = arith.constant 0 : index
    %c0_14 = arith.constant 0 : index
    %c0_15 = arith.constant 0 : index
    %19 = vector.load %arg3[%c0_12, %c0_13, %c0_14, %c0_15] : memref<1x9x9x4xf32, #tpu.memory_space<vmem>>, vector<1x8x8x4xf32>
    %20 = vector.shape_cast %19 : vector<1x8x8x4xf32> to vector<8x8x4xf32>
    %21 = vector.shape_cast %1 : vector<1x4xf32> to vector<1x1x4xf32>
    %22 = vector.broadcast %21 : vector<1x1x4xf32> to vector<8x8x4xf32>
    %23 = arith.mulf %20, %22 : vector<8x8x4xf32>
    %24 = vector.shape_cast %2 : vector<1x4xf32> to vector<1x1x4xf32>
    %25 = vector.broadcast %24 : vector<1x1x4xf32> to vector<8x8x4xf32>
    %26 = arith.addf %23, %25 : vector<8x8x4xf32>
    %cst_16 = arith.constant 0.000000e+00 : f32
    %27 = vector.broadcast %cst_16 : f32 to vector<8x8x4xf32>
    %28 = arith.maximumf %26, %27 : vector<8x8x4xf32>
    %29 = vector.shape_cast %28 : vector<8x8x4xf32> to vector<64x4xf32>
    %30 = arith.truncf %29 : vector<64x4xf32> to vector<64x4xbf16>
    %c1 = arith.constant 1 : index
    %c0_17 = arith.constant 0 : index
    %c0_18 = arith.constant 0 : index
    %31 = vector.load %arg6[%c1, %c0_17, %c0_18] : memref<9x4x8xbf16, #tpu.memory_space<vmem>>, vector<1x4x8xbf16>
    %32 = vector.shape_cast %31 : vector<1x4x8xbf16> to vector<4x8xbf16>
    %cst_19 = arith.constant dense<0.000000e+00> : vector<64x8xf32>
    %33 = tpu.matmul %30, %32, %cst_19 {dimension_numbers = #tpu.dot_dimension_numbers<[1], [0], [0], [1], [0, 0, 1, 1], [], []>} : vector<64x4xbf16>, vector<4x8xbf16>, vector<64x8xf32> -> vector<64x8xf32>
    %34 = arith.addf %18, %33 : vector<64x8xf32>
    %c0_20 = arith.constant 0 : index
    %c0_21 = arith.constant 0 : index
    %c1_22 = arith.constant 1 : index
    %c0_23 = arith.constant 0 : index
    %35 = vector.load %arg2[%c0_20, %c0_21, %c1_22, %c0_23] : memref<1x9x9x4xf32, #tpu.memory_space<vmem>>, vector<1x8x8x4xf32>
    %36 = vector.shape_cast %35 : vector<1x8x8x4xf32> to vector<8x8x4xf32>
    %37 = vector.shape_cast %1 : vector<1x4xf32> to vector<1x1x4xf32>
    %38 = vector.broadcast %37 : vector<1x1x4xf32> to vector<8x8x4xf32>
    %39 = arith.mulf %36, %38 : vector<8x8x4xf32>
    %40 = vector.shape_cast %2 : vector<1x4xf32> to vector<1x1x4xf32>
    %41 = vector.broadcast %40 : vector<1x1x4xf32> to vector<8x8x4xf32>
    %42 = arith.addf %39, %41 : vector<8x8x4xf32>
    %cst_24 = arith.constant 0.000000e+00 : f32
    %43 = vector.broadcast %cst_24 : f32 to vector<8x8x4xf32>
    %44 = arith.maximumf %42, %43 : vector<8x8x4xf32>
    %45 = vector.shape_cast %44 : vector<8x8x4xf32> to vector<64x4xf32>
    %46 = arith.truncf %45 : vector<64x4xf32> to vector<64x4xbf16>
    %c2 = arith.constant 2 : index
    %c0_25 = arith.constant 0 : index
    %c0_26 = arith.constant 0 : index
    %47 = vector.load %arg6[%c2, %c0_25, %c0_26] : memref<9x4x8xbf16, #tpu.memory_space<vmem>>, vector<1x4x8xbf16>
    %48 = vector.shape_cast %47 : vector<1x4x8xbf16> to vector<4x8xbf16>
    %cst_27 = arith.constant dense<0.000000e+00> : vector<64x8xf32>
    %49 = tpu.matmul %46, %48, %cst_27 {dimension_numbers = #tpu.dot_dimension_numbers<[1], [0], [0], [1], [0, 0, 1, 1], [], []>} : vector<64x4xbf16>, vector<4x8xbf16>, vector<64x8xf32> -> vector<64x8xf32>
    %50 = arith.addf %34, %49 : vector<64x8xf32>
    %c0_28 = arith.constant 0 : index
    %c0_29 = arith.constant 0 : index
    %c0_30 = arith.constant 0 : index
    %c0_31 = arith.constant 0 : index
    %51 = vector.load %arg4[%c0_28, %c0_29, %c0_30, %c0_31] : memref<1x9x9x4xf32, #tpu.memory_space<vmem>>, vector<1x8x8x4xf32>
    %52 = vector.shape_cast %51 : vector<1x8x8x4xf32> to vector<8x8x4xf32>
    %53 = vector.shape_cast %1 : vector<1x4xf32> to vector<1x1x4xf32>
    %54 = vector.broadcast %53 : vector<1x1x4xf32> to vector<8x8x4xf32>
    %55 = arith.mulf %52, %54 : vector<8x8x4xf32>
    %56 = vector.shape_cast %2 : vector<1x4xf32> to vector<1x1x4xf32>
    %57 = vector.broadcast %56 : vector<1x1x4xf32> to vector<8x8x4xf32>
    %58 = arith.addf %55, %57 : vector<8x8x4xf32>
    %cst_32 = arith.constant 0.000000e+00 : f32
    %59 = vector.broadcast %cst_32 : f32 to vector<8x8x4xf32>
    %60 = arith.maximumf %58, %59 : vector<8x8x4xf32>
    %61 = vector.shape_cast %60 : vector<8x8x4xf32> to vector<64x4xf32>
    %62 = arith.truncf %61 : vector<64x4xf32> to vector<64x4xbf16>
    %c3 = arith.constant 3 : index
    %c0_33 = arith.constant 0 : index
    %c0_34 = arith.constant 0 : index
    %63 = vector.load %arg6[%c3, %c0_33, %c0_34] : memref<9x4x8xbf16, #tpu.memory_space<vmem>>, vector<1x4x8xbf16>
    %64 = vector.shape_cast %63 : vector<1x4x8xbf16> to vector<4x8xbf16>
    %cst_35 = arith.constant dense<0.000000e+00> : vector<64x8xf32>
    %65 = tpu.matmul %62, %64, %cst_35 {dimension_numbers = #tpu.dot_dimension_numbers<[1], [0], [0], [1], [0, 0, 1, 1], [], []>} : vector<64x4xbf16>, vector<4x8xbf16>, vector<64x8xf32> -> vector<64x8xf32>
    %66 = arith.addf %50, %65 : vector<64x8xf32>
    %c0_36 = arith.constant 0 : index
    %c0_37 = arith.constant 0 : index
    %c0_38 = arith.constant 0 : index
    %c0_39 = arith.constant 0 : index
    %67 = vector.load %arg5[%c0_36, %c0_37, %c0_38, %c0_39] : memref<1x9x9x4xf32, #tpu.memory_space<vmem>>, vector<1x8x8x4xf32>
    %68 = vector.shape_cast %67 : vector<1x8x8x4xf32> to vector<8x8x4xf32>
    %69 = vector.shape_cast %1 : vector<1x4xf32> to vector<1x1x4xf32>
    %70 = vector.broadcast %69 : vector<1x1x4xf32> to vector<8x8x4xf32>
    %71 = arith.mulf %68, %70 : vector<8x8x4xf32>
    %72 = vector.shape_cast %2 : vector<1x4xf32> to vector<1x1x4xf32>
    %73 = vector.broadcast %72 : vector<1x1x4xf32> to vector<8x8x4xf32>
    %74 = arith.addf %71, %73 : vector<8x8x4xf32>
    %cst_40 = arith.constant 0.000000e+00 : f32
    %75 = vector.broadcast %cst_40 : f32 to vector<8x8x4xf32>
    %76 = arith.maximumf %74, %75 : vector<8x8x4xf32>
    %77 = vector.shape_cast %76 : vector<8x8x4xf32> to vector<64x4xf32>
    %78 = arith.truncf %77 : vector<64x4xf32> to vector<64x4xbf16>
    %c4 = arith.constant 4 : index
    %c0_41 = arith.constant 0 : index
    %c0_42 = arith.constant 0 : index
    %79 = vector.load %arg6[%c4, %c0_41, %c0_42] : memref<9x4x8xbf16, #tpu.memory_space<vmem>>, vector<1x4x8xbf16>
    %80 = vector.shape_cast %79 : vector<1x4x8xbf16> to vector<4x8xbf16>
    %cst_43 = arith.constant dense<0.000000e+00> : vector<64x8xf32>
    %81 = tpu.matmul %78, %80, %cst_43 {dimension_numbers = #tpu.dot_dimension_numbers<[1], [0], [0], [1], [0, 0, 1, 1], [], []>} : vector<64x4xbf16>, vector<4x8xbf16>, vector<64x8xf32> -> vector<64x8xf32>
    %82 = arith.addf %66, %81 : vector<64x8xf32>
    %c0_44 = arith.constant 0 : index
    %c0_45 = arith.constant 0 : index
    %c1_46 = arith.constant 1 : index
    %c0_47 = arith.constant 0 : index
    %83 = vector.load %arg4[%c0_44, %c0_45, %c1_46, %c0_47] : memref<1x9x9x4xf32, #tpu.memory_space<vmem>>, vector<1x8x8x4xf32>
    %84 = vector.shape_cast %83 : vector<1x8x8x4xf32> to vector<8x8x4xf32>
    %85 = vector.shape_cast %1 : vector<1x4xf32> to vector<1x1x4xf32>
    %86 = vector.broadcast %85 : vector<1x1x4xf32> to vector<8x8x4xf32>
    %87 = arith.mulf %84, %86 : vector<8x8x4xf32>
    %88 = vector.shape_cast %2 : vector<1x4xf32> to vector<1x1x4xf32>
    %89 = vector.broadcast %88 : vector<1x1x4xf32> to vector<8x8x4xf32>
    %90 = arith.addf %87, %89 : vector<8x8x4xf32>
    %cst_48 = arith.constant 0.000000e+00 : f32
    %91 = vector.broadcast %cst_48 : f32 to vector<8x8x4xf32>
    %92 = arith.maximumf %90, %91 : vector<8x8x4xf32>
    %93 = vector.shape_cast %92 : vector<8x8x4xf32> to vector<64x4xf32>
    %94 = arith.truncf %93 : vector<64x4xf32> to vector<64x4xbf16>
    %c5 = arith.constant 5 : index
    %c0_49 = arith.constant 0 : index
    %c0_50 = arith.constant 0 : index
    %95 = vector.load %arg6[%c5, %c0_49, %c0_50] : memref<9x4x8xbf16, #tpu.memory_space<vmem>>, vector<1x4x8xbf16>
    %96 = vector.shape_cast %95 : vector<1x4x8xbf16> to vector<4x8xbf16>
    %cst_51 = arith.constant dense<0.000000e+00> : vector<64x8xf32>
    %97 = tpu.matmul %94, %96, %cst_51 {dimension_numbers = #tpu.dot_dimension_numbers<[1], [0], [0], [1], [0, 0, 1, 1], [], []>} : vector<64x4xbf16>, vector<4x8xbf16>, vector<64x8xf32> -> vector<64x8xf32>
    %98 = arith.addf %82, %97 : vector<64x8xf32>
    %c0_52 = arith.constant 0 : index
    %c1_53 = arith.constant 1 : index
    %c0_54 = arith.constant 0 : index
    %c0_55 = arith.constant 0 : index
    %99 = vector.load %arg2[%c0_52, %c1_53, %c0_54, %c0_55] : memref<1x9x9x4xf32, #tpu.memory_space<vmem>>, vector<1x8x8x4xf32>
    %100 = vector.shape_cast %99 : vector<1x8x8x4xf32> to vector<8x8x4xf32>
    %101 = vector.shape_cast %1 : vector<1x4xf32> to vector<1x1x4xf32>
    %102 = vector.broadcast %101 : vector<1x1x4xf32> to vector<8x8x4xf32>
    %103 = arith.mulf %100, %102 : vector<8x8x4xf32>
    %104 = vector.shape_cast %2 : vector<1x4xf32> to vector<1x1x4xf32>
    %105 = vector.broadcast %104 : vector<1x1x4xf32> to vector<8x8x4xf32>
    %106 = arith.addf %103, %105 : vector<8x8x4xf32>
    %cst_56 = arith.constant 0.000000e+00 : f32
    %107 = vector.broadcast %cst_56 : f32 to vector<8x8x4xf32>
    %108 = arith.maximumf %106, %107 : vector<8x8x4xf32>
    %109 = vector.shape_cast %108 : vector<8x8x4xf32> to vector<64x4xf32>
    %110 = arith.truncf %109 : vector<64x4xf32> to vector<64x4xbf16>
    %c6 = arith.constant 6 : index
    %c0_57 = arith.constant 0 : index
    %c0_58 = arith.constant 0 : index
    %111 = vector.load %arg6[%c6, %c0_57, %c0_58] : memref<9x4x8xbf16, #tpu.memory_space<vmem>>, vector<1x4x8xbf16>
    %112 = vector.shape_cast %111 : vector<1x4x8xbf16> to vector<4x8xbf16>
    %cst_59 = arith.constant dense<0.000000e+00> : vector<64x8xf32>
    %113 = tpu.matmul %110, %112, %cst_59 {dimension_numbers = #tpu.dot_dimension_numbers<[1], [0], [0], [1], [0, 0, 1, 1], [], []>} : vector<64x4xbf16>, vector<4x8xbf16>, vector<64x8xf32> -> vector<64x8xf32>
    %114 = arith.addf %98, %113 : vector<64x8xf32>
    %c0_60 = arith.constant 0 : index
    %c1_61 = arith.constant 1 : index
    %c0_62 = arith.constant 0 : index
    %c0_63 = arith.constant 0 : index
    %115 = vector.load %arg3[%c0_60, %c1_61, %c0_62, %c0_63] : memref<1x9x9x4xf32, #tpu.memory_space<vmem>>, vector<1x8x8x4xf32>
    %116 = vector.shape_cast %115 : vector<1x8x8x4xf32> to vector<8x8x4xf32>
    %117 = vector.shape_cast %1 : vector<1x4xf32> to vector<1x1x4xf32>
    %118 = vector.broadcast %117 : vector<1x1x4xf32> to vector<8x8x4xf32>
    %119 = arith.mulf %116, %118 : vector<8x8x4xf32>
    %120 = vector.shape_cast %2 : vector<1x4xf32> to vector<1x1x4xf32>
    %121 = vector.broadcast %120 : vector<1x1x4xf32> to vector<8x8x4xf32>
    %122 = arith.addf %119, %121 : vector<8x8x4xf32>
    %cst_64 = arith.constant 0.000000e+00 : f32
    %123 = vector.broadcast %cst_64 : f32 to vector<8x8x4xf32>
    %124 = arith.maximumf %122, %123 : vector<8x8x4xf32>
    %125 = vector.shape_cast %124 : vector<8x8x4xf32> to vector<64x4xf32>
    %126 = arith.truncf %125 : vector<64x4xf32> to vector<64x4xbf16>
    %c7 = arith.constant 7 : index
    %c0_65 = arith.constant 0 : index
    %c0_66 = arith.constant 0 : index
    %127 = vector.load %arg6[%c7, %c0_65, %c0_66] : memref<9x4x8xbf16, #tpu.memory_space<vmem>>, vector<1x4x8xbf16>
    %128 = vector.shape_cast %127 : vector<1x4x8xbf16> to vector<4x8xbf16>
    %cst_67 = arith.constant dense<0.000000e+00> : vector<64x8xf32>
    %129 = tpu.matmul %126, %128, %cst_67 {dimension_numbers = #tpu.dot_dimension_numbers<[1], [0], [0], [1], [0, 0, 1, 1], [], []>} : vector<64x4xbf16>, vector<4x8xbf16>, vector<64x8xf32> -> vector<64x8xf32>
    %130 = arith.addf %114, %129 : vector<64x8xf32>
    %c0_68 = arith.constant 0 : index
    %c1_69 = arith.constant 1 : index
    %c1_70 = arith.constant 1 : index
    %c0_71 = arith.constant 0 : index
    %131 = vector.load %arg2[%c0_68, %c1_69, %c1_70, %c0_71] : memref<1x9x9x4xf32, #tpu.memory_space<vmem>>, vector<1x8x8x4xf32>
    %132 = vector.shape_cast %131 : vector<1x8x8x4xf32> to vector<8x8x4xf32>
    %133 = vector.shape_cast %1 : vector<1x4xf32> to vector<1x1x4xf32>
    %134 = vector.broadcast %133 : vector<1x1x4xf32> to vector<8x8x4xf32>
    %135 = arith.mulf %132, %134 : vector<8x8x4xf32>
    %136 = vector.shape_cast %2 : vector<1x4xf32> to vector<1x1x4xf32>
    %137 = vector.broadcast %136 : vector<1x1x4xf32> to vector<8x8x4xf32>
    %138 = arith.addf %135, %137 : vector<8x8x4xf32>
    %cst_72 = arith.constant 0.000000e+00 : f32
    %139 = vector.broadcast %cst_72 : f32 to vector<8x8x4xf32>
    %140 = arith.maximumf %138, %139 : vector<8x8x4xf32>
    %141 = vector.shape_cast %140 : vector<8x8x4xf32> to vector<64x4xf32>
    %142 = arith.truncf %141 : vector<64x4xf32> to vector<64x4xbf16>
    %c8 = arith.constant 8 : index
    %c0_73 = arith.constant 0 : index
    %c0_74 = arith.constant 0 : index
    %143 = vector.load %arg6[%c8, %c0_73, %c0_74] : memref<9x4x8xbf16, #tpu.memory_space<vmem>>, vector<1x4x8xbf16>
    %144 = vector.shape_cast %143 : vector<1x4x8xbf16> to vector<4x8xbf16>
    %cst_75 = arith.constant dense<0.000000e+00> : vector<64x8xf32>
    %145 = tpu.matmul %142, %144, %cst_75 {dimension_numbers = #tpu.dot_dimension_numbers<[1], [0], [0], [1], [0, 0, 1, 1], [], []>} : vector<64x4xbf16>, vector<4x8xbf16>, vector<64x8xf32> -> vector<64x8xf32>
    %146 = arith.addf %130, %145 : vector<64x8xf32>
    %c0_76 = arith.constant 0 : index
    %c0_77 = arith.constant 0 : index
    %c0_78 = arith.constant 0 : index
    %147 = vector.load %arg9[%c0_76, %c0_77, %c0_78] : memref<1x64x8xf32, #tpu.memory_space<vmem>>, vector<1x64x8xf32>
    %148 = vector.shape_cast %147 : vector<1x64x8xf32> to vector<64x8xf32>
    %149 = vector.shape_cast %146 : vector<64x8xf32> to vector<1x64x8xf32>
    tpu.vector_store %arg9[%c0_76, %c0_77, %c0_78], %149 {strides = array<i32>} : memref<1x64x8xf32, #tpu.memory_space<vmem>>, vector<1x64x8xf32>,
    return
  }
  func.func @transform_0(%arg0: i32, %arg1: i32) -> (i32, i32, i32, i32) {
    %c0_i32 = arith.constant 0 : i32
    %c0_i32_0 = arith.constant 0 : i32
    %c0_i32_1 = arith.constant 0 : i32
    %c0_i32_2 = arith.constant 0 : i32
    return %arg0, %c0_i32, %c0_i32_0, %c0_i32_1 : i32, i32, i32, i32
  }
  func.func @transform_1(%arg0: i32, %arg1: i32) -> (i32, i32, i32, i32) {
    %c0_i32 = arith.constant 0 : i32
    %c0_i32_0 = arith.constant 0 : i32
    %c0_i32_1 = arith.constant 0 : i32
    %c0_i32_2 = arith.constant 0 : i32
    return %arg0, %c0_i32, %c0_i32_0, %c0_i32_1 : i32, i32, i32, i32
  }
  func.func @transform_2(%arg0: i32, %arg1: i32) -> (i32, i32, i32, i32) {
    %c0_i32 = arith.constant 0 : i32
    %c0_i32_0 = arith.constant 0 : i32
    %c0_i32_1 = arith.constant 0 : i32
    %c0_i32_2 = arith.constant 0 : i32
    return %arg0, %c0_i32, %c0_i32_0, %c0_i32_1 : i32, i32, i32, i32
  }
  func.func @transform_3(%arg0: i32, %arg1: i32) -> (i32, i32, i32, i32) {
    %c0_i32 = arith.constant 0 : i32
    %c0_i32_0 = arith.constant 0 : i32
    %c0_i32_1 = arith.constant 0 : i32
    %c0_i32_2 = arith.constant 0 : i32
    return %arg0, %c0_i32, %c0_i32_0, %c0_i32_1 : i32, i32, i32, i32
  }
  func.func @transform_4(%arg0: i32, %arg1: i32) -> (i32, i32, i32) {
    %c0_i32 = arith.constant 0 : i32
    %c0_i32_0 = arith.constant 0 : i32
    %c0_i32_1 = arith.constant 0 : i32
    return %c0_i32, %c0_i32_0, %arg1 : i32, i32, i32
  }
  func.func @transform_5(%arg0: i32, %arg1: i32) -> (i32, i32) {
    %c0_i32 = arith.constant 0 : i32
    %c0_i32_0 = arith.constant 0 : i32
    %c0_i32_1 = arith.constant 0 : i32
    return %c0_i32, %c0_i32_0 : i32, i32
  }
  func.func @transform_6(%arg0: i32, %arg1: i32) -> (i32, i32) {
    %c0_i32 = arith.constant 0 : i32
    %c0_i32_0 = arith.constant 0 : i32
    %c0_i32_1 = arith.constant 0 : i32
    return %c0_i32, %c0_i32_0 : i32, i32
  }
  func.func @transform_7(%arg0: i32, %arg1: i32) -> (i32, i32, i32) {
    %c0_i32 = arith.constant 0 : i32
    %c0_i32_0 = arith.constant 0 : i32
    return %arg0, %c0_i32, %arg1 : i32, i32, i32
  }
}

module attributes {stable_mosaic.version = 11 : i64} {
  func.func @_tapconv_kernel(%arg0: i32, %arg1: i32, %arg2: memref<1x9x9x4xf32, #tpu.memory_space<vmem>>, %arg3: memref<1x4x8xbf16, #tpu.memory_space<vmem>>, %arg4: memref<1x4xf32, #tpu.memory_space<vmem>>, %arg5: memref<1x4xf32, #tpu.memory_space<vmem>>, %arg6: memref<1x64x8xf32, #tpu.memory_space<vmem>>) attributes {dimension_semantics = [#tpu.dimension_semantics<parallel>, #tpu.dimension_semantics<parallel>], iteration_bounds = array<i64: 2, 1>, scalar_prefetch = 0 : i64, scratch_operands = 0 : i64, tpu.core_type = #tpu.core_type<tc>, window_params = [{transform_indices = @transform_0, window_bounds = array<i64: 1, 9, 9, 4>}, {transform_indices = @transform_1, window_bounds = array<i64: 1, 4, 8>}, {pipeline_mode = #tpu.pipeline_mode<synchronous>, transform_indices = @transform_2, window_bounds = array<i64: 1, 4>}, {pipeline_mode = #tpu.pipeline_mode<synchronous>, transform_indices = @transform_3, window_bounds = array<i64: 1, 4>}, {transform_indices = @transform_4, window_bounds = array<i64: 1, 64, 8>}]} {
    %cst = arith.constant 0.000000e+00 : f32
    %0 = vector.broadcast %cst : f32 to vector<64x8xf32>
    %c0 = arith.constant 0 : index
    %c0_0 = arith.constant 0 : index
    %1 = vector.load %arg4[%c0, %c0_0] : memref<1x4xf32, #tpu.memory_space<vmem>>, vector<1x4xf32>
    %c0_1 = arith.constant 0 : index
    %c0_2 = arith.constant 0 : index
    %2 = vector.load %arg5[%c0_1, %c0_2] : memref<1x4xf32, #tpu.memory_space<vmem>>, vector<1x4xf32>
    %c0_3 = arith.constant 0 : index
    %c0_4 = arith.constant 0 : index
    %c0_5 = arith.constant 0 : index
    %c0_6 = arith.constant 0 : index
    %3 = vector.load %arg2[%c0_3, %c0_4, %c0_5, %c0_6] : memref<1x9x9x4xf32, #tpu.memory_space<vmem>>, vector<1x8x8x4xf32>
    %4 = vector.shape_cast %3 : vector<1x8x8x4xf32> to vector<8x8x4xf32>
    %5 = vector.shape_cast %1 : vector<1x4xf32> to vector<1x1x4xf32>
    %6 = vector.broadcast %5 : vector<1x1x4xf32> to vector<8x8x4xf32>
    %7 = arith.mulf %4, %6 : vector<8x8x4xf32>
    %8 = vector.shape_cast %2 : vector<1x4xf32> to vector<1x1x4xf32>
    %9 = vector.broadcast %8 : vector<1x1x4xf32> to vector<8x8x4xf32>
    %10 = arith.addf %7, %9 : vector<8x8x4xf32>
    %cst_7 = arith.constant 0.000000e+00 : f32
    %11 = vector.broadcast %cst_7 : f32 to vector<8x8x4xf32>
    %12 = arith.maximumf %10, %11 : vector<8x8x4xf32>
    %13 = vector.shape_cast %12 : vector<8x8x4xf32> to vector<64x4xf32>
    %14 = arith.truncf %13 : vector<64x4xf32> to vector<64x4xbf16>
    %c0_8 = arith.constant 0 : index
    %c0_9 = arith.constant 0 : index
    %c0_10 = arith.constant 0 : index
    %15 = vector.load %arg3[%c0_8, %c0_9, %c0_10] : memref<1x4x8xbf16, #tpu.memory_space<vmem>>, vector<1x4x8xbf16>
    %16 = vector.shape_cast %15 : vector<1x4x8xbf16> to vector<4x8xbf16>
    %cst_11 = arith.constant dense<0.000000e+00> : vector<64x8xf32>
    %17 = tpu.matmul %14, %16, %cst_11 {dimension_numbers = #tpu.dot_dimension_numbers<[1], [0], [0], [1], [0, 0, 1, 1], [], []>} : vector<64x4xbf16>, vector<4x8xbf16>, vector<64x8xf32> -> vector<64x8xf32>
    %18 = arith.addf %0, %17 : vector<64x8xf32>
    %c0_12 = arith.constant 0 : index
    %c0_13 = arith.constant 0 : index
    %c0_14 = arith.constant 0 : index
    %19 = vector.load %arg6[%c0_12, %c0_13, %c0_14] : memref<1x64x8xf32, #tpu.memory_space<vmem>>, vector<1x64x8xf32>
    %20 = vector.shape_cast %19 : vector<1x64x8xf32> to vector<64x8xf32>
    %21 = vector.shape_cast %18 : vector<64x8xf32> to vector<1x64x8xf32>
    tpu.vector_store %arg6[%c0_12, %c0_13, %c0_14], %21 {strides = array<i32>} : memref<1x64x8xf32, #tpu.memory_space<vmem>>, vector<1x64x8xf32>,
    return
  }
  func.func @transform_0(%arg0: i32, %arg1: i32) -> (i32, i32, i32, i32) {
    %c0_i32 = arith.constant 0 : i32
    %c0_i32_0 = arith.constant 0 : i32
    %c0_i32_1 = arith.constant 0 : i32
    %c0_i32_2 = arith.constant 0 : i32
    return %arg0, %c0_i32, %c0_i32_0, %c0_i32_1 : i32, i32, i32, i32
  }
  func.func @transform_1(%arg0: i32, %arg1: i32) -> (i32, i32, i32) {
    %c0_i32 = arith.constant 0 : i32
    %c0_i32_0 = arith.constant 0 : i32
    %c0_i32_1 = arith.constant 0 : i32
    return %c0_i32, %c0_i32_0, %arg1 : i32, i32, i32
  }
  func.func @transform_2(%arg0: i32, %arg1: i32) -> (i32, i32) {
    %c0_i32 = arith.constant 0 : i32
    %c0_i32_0 = arith.constant 0 : i32
    %c0_i32_1 = arith.constant 0 : i32
    return %c0_i32, %c0_i32_0 : i32, i32
  }
  func.func @transform_3(%arg0: i32, %arg1: i32) -> (i32, i32) {
    %c0_i32 = arith.constant 0 : i32
    %c0_i32_0 = arith.constant 0 : i32
    %c0_i32_1 = arith.constant 0 : i32
    return %c0_i32, %c0_i32_0 : i32, i32
  }
  func.func @transform_4(%arg0: i32, %arg1: i32) -> (i32, i32, i32) {
    %c0_i32 = arith.constant 0 : i32
    %c0_i32_0 = arith.constant 0 : i32
    return %arg0, %c0_i32, %arg1 : i32, i32, i32
  }
}

module attributes {stable_mosaic.version = 11 : i64} {
  func.func @_tapconv_kernel(%arg0: i32, %arg1: i32, %arg2: memref<1x10x10x8xf32, #tpu.memory_space<vmem>>, %arg3: memref<9x8x8xbf16, #tpu.memory_space<vmem>>, %arg4: memref<1x8xf32, #tpu.memory_space<vmem>>, %arg5: memref<1x8xf32, #tpu.memory_space<vmem>>, %arg6: memref<1x64x8xf32, #tpu.memory_space<vmem>>, %arg7: memref<1x64x8xf32, #tpu.memory_space<vmem>>) attributes {dimension_semantics = [#tpu.dimension_semantics<parallel>, #tpu.dimension_semantics<parallel>], iteration_bounds = array<i64: 2, 1>, scalar_prefetch = 0 : i64, scratch_operands = 0 : i64, tpu.core_type = #tpu.core_type<tc>, window_params = [{transform_indices = @transform_0, window_bounds = array<i64: 1, 10, 10, 8>}, {transform_indices = @transform_1, window_bounds = array<i64: 9, 8, 8>}, {pipeline_mode = #tpu.pipeline_mode<synchronous>, transform_indices = @transform_2, window_bounds = array<i64: 1, 8>}, {pipeline_mode = #tpu.pipeline_mode<synchronous>, transform_indices = @transform_3, window_bounds = array<i64: 1, 8>}, {transform_indices = @transform_4, window_bounds = array<i64: 1, 64, 8>}, {transform_indices = @transform_5, window_bounds = array<i64: 1, 64, 8>}]} {
    %c0 = arith.constant 0 : index
    %c0_0 = arith.constant 0 : index
    %c0_1 = arith.constant 0 : index
    %0 = vector.load %arg6[%c0, %c0_0, %c0_1] : memref<1x64x8xf32, #tpu.memory_space<vmem>>, vector<1x64x8xf32>
    %1 = vector.shape_cast %0 : vector<1x64x8xf32> to vector<64x8xf32>
    %c0_2 = arith.constant 0 : index
    %c0_3 = arith.constant 0 : index
    %2 = vector.load %arg4[%c0_2, %c0_3] : memref<1x8xf32, #tpu.memory_space<vmem>>, vector<1x8xf32>
    %c0_4 = arith.constant 0 : index
    %c0_5 = arith.constant 0 : index
    %3 = vector.load %arg5[%c0_4, %c0_5] : memref<1x8xf32, #tpu.memory_space<vmem>>, vector<1x8xf32>
    %c0_6 = arith.constant 0 : index
    %c0_7 = arith.constant 0 : index
    %c0_8 = arith.constant 0 : index
    %c0_9 = arith.constant 0 : index
    %4 = vector.load %arg2[%c0_6, %c0_7, %c0_8, %c0_9] : memref<1x10x10x8xf32, #tpu.memory_space<vmem>>, vector<1x8x8x8xf32>
    %5 = vector.shape_cast %4 : vector<1x8x8x8xf32> to vector<8x8x8xf32>
    %6 = vector.shape_cast %2 : vector<1x8xf32> to vector<1x1x8xf32>
    %7 = vector.broadcast %6 : vector<1x1x8xf32> to vector<8x8x8xf32>
    %8 = arith.mulf %5, %7 : vector<8x8x8xf32>
    %9 = vector.shape_cast %3 : vector<1x8xf32> to vector<1x1x8xf32>
    %10 = vector.broadcast %9 : vector<1x1x8xf32> to vector<8x8x8xf32>
    %11 = arith.addf %8, %10 : vector<8x8x8xf32>
    %cst = arith.constant 0.000000e+00 : f32
    %12 = vector.broadcast %cst : f32 to vector<8x8x8xf32>
    %13 = arith.maximumf %11, %12 : vector<8x8x8xf32>
    %14 = vector.shape_cast %13 : vector<8x8x8xf32> to vector<64x8xf32>
    %15 = arith.truncf %14 : vector<64x8xf32> to vector<64x8xbf16>
    %c0_10 = arith.constant 0 : index
    %c0_11 = arith.constant 0 : index
    %c0_12 = arith.constant 0 : index
    %16 = vector.load %arg3[%c0_10, %c0_11, %c0_12] : memref<9x8x8xbf16, #tpu.memory_space<vmem>>, vector<1x8x8xbf16>
    %17 = vector.shape_cast %16 : vector<1x8x8xbf16> to vector<8x8xbf16>
    %cst_13 = arith.constant dense<0.000000e+00> : vector<64x8xf32>
    %18 = tpu.matmul %15, %17, %cst_13 {dimension_numbers = #tpu.dot_dimension_numbers<[1], [0], [0], [1], [0, 0, 1, 1], [], []>} : vector<64x8xbf16>, vector<8x8xbf16>, vector<64x8xf32> -> vector<64x8xf32>
    %19 = arith.addf %1, %18 : vector<64x8xf32>
    %c0_14 = arith.constant 0 : index
    %c0_15 = arith.constant 0 : index
    %c1 = arith.constant 1 : index
    %c0_16 = arith.constant 0 : index
    %20 = vector.load %arg2[%c0_14, %c0_15, %c1, %c0_16] : memref<1x10x10x8xf32, #tpu.memory_space<vmem>>, vector<1x8x8x8xf32>
    %21 = vector.shape_cast %20 : vector<1x8x8x8xf32> to vector<8x8x8xf32>
    %22 = vector.shape_cast %2 : vector<1x8xf32> to vector<1x1x8xf32>
    %23 = vector.broadcast %22 : vector<1x1x8xf32> to vector<8x8x8xf32>
    %24 = arith.mulf %21, %23 : vector<8x8x8xf32>
    %25 = vector.shape_cast %3 : vector<1x8xf32> to vector<1x1x8xf32>
    %26 = vector.broadcast %25 : vector<1x1x8xf32> to vector<8x8x8xf32>
    %27 = arith.addf %24, %26 : vector<8x8x8xf32>
    %cst_17 = arith.constant 0.000000e+00 : f32
    %28 = vector.broadcast %cst_17 : f32 to vector<8x8x8xf32>
    %29 = arith.maximumf %27, %28 : vector<8x8x8xf32>
    %30 = vector.shape_cast %29 : vector<8x8x8xf32> to vector<64x8xf32>
    %31 = arith.truncf %30 : vector<64x8xf32> to vector<64x8xbf16>
    %c1_18 = arith.constant 1 : index
    %c0_19 = arith.constant 0 : index
    %c0_20 = arith.constant 0 : index
    %32 = vector.load %arg3[%c1_18, %c0_19, %c0_20] : memref<9x8x8xbf16, #tpu.memory_space<vmem>>, vector<1x8x8xbf16>
    %33 = vector.shape_cast %32 : vector<1x8x8xbf16> to vector<8x8xbf16>
    %cst_21 = arith.constant dense<0.000000e+00> : vector<64x8xf32>
    %34 = tpu.matmul %31, %33, %cst_21 {dimension_numbers = #tpu.dot_dimension_numbers<[1], [0], [0], [1], [0, 0, 1, 1], [], []>} : vector<64x8xbf16>, vector<8x8xbf16>, vector<64x8xf32> -> vector<64x8xf32>
    %35 = arith.addf %19, %34 : vector<64x8xf32>
    %c0_22 = arith.constant 0 : index
    %c0_23 = arith.constant 0 : index
    %c2 = arith.constant 2 : index
    %c0_24 = arith.constant 0 : index
    %36 = vector.load %arg2[%c0_22, %c0_23, %c2, %c0_24] : memref<1x10x10x8xf32, #tpu.memory_space<vmem>>, vector<1x8x8x8xf32>
    %37 = vector.shape_cast %36 : vector<1x8x8x8xf32> to vector<8x8x8xf32>
    %38 = vector.shape_cast %2 : vector<1x8xf32> to vector<1x1x8xf32>
    %39 = vector.broadcast %38 : vector<1x1x8xf32> to vector<8x8x8xf32>
    %40 = arith.mulf %37, %39 : vector<8x8x8xf32>
    %41 = vector.shape_cast %3 : vector<1x8xf32> to vector<1x1x8xf32>
    %42 = vector.broadcast %41 : vector<1x1x8xf32> to vector<8x8x8xf32>
    %43 = arith.addf %40, %42 : vector<8x8x8xf32>
    %cst_25 = arith.constant 0.000000e+00 : f32
    %44 = vector.broadcast %cst_25 : f32 to vector<8x8x8xf32>
    %45 = arith.maximumf %43, %44 : vector<8x8x8xf32>
    %46 = vector.shape_cast %45 : vector<8x8x8xf32> to vector<64x8xf32>
    %47 = arith.truncf %46 : vector<64x8xf32> to vector<64x8xbf16>
    %c2_26 = arith.constant 2 : index
    %c0_27 = arith.constant 0 : index
    %c0_28 = arith.constant 0 : index
    %48 = vector.load %arg3[%c2_26, %c0_27, %c0_28] : memref<9x8x8xbf16, #tpu.memory_space<vmem>>, vector<1x8x8xbf16>
    %49 = vector.shape_cast %48 : vector<1x8x8xbf16> to vector<8x8xbf16>
    %cst_29 = arith.constant dense<0.000000e+00> : vector<64x8xf32>
    %50 = tpu.matmul %47, %49, %cst_29 {dimension_numbers = #tpu.dot_dimension_numbers<[1], [0], [0], [1], [0, 0, 1, 1], [], []>} : vector<64x8xbf16>, vector<8x8xbf16>, vector<64x8xf32> -> vector<64x8xf32>
    %51 = arith.addf %35, %50 : vector<64x8xf32>
    %c0_30 = arith.constant 0 : index
    %c1_31 = arith.constant 1 : index
    %c0_32 = arith.constant 0 : index
    %c0_33 = arith.constant 0 : index
    %52 = vector.load %arg2[%c0_30, %c1_31, %c0_32, %c0_33] : memref<1x10x10x8xf32, #tpu.memory_space<vmem>>, vector<1x8x8x8xf32>
    %53 = vector.shape_cast %52 : vector<1x8x8x8xf32> to vector<8x8x8xf32>
    %54 = vector.shape_cast %2 : vector<1x8xf32> to vector<1x1x8xf32>
    %55 = vector.broadcast %54 : vector<1x1x8xf32> to vector<8x8x8xf32>
    %56 = arith.mulf %53, %55 : vector<8x8x8xf32>
    %57 = vector.shape_cast %3 : vector<1x8xf32> to vector<1x1x8xf32>
    %58 = vector.broadcast %57 : vector<1x1x8xf32> to vector<8x8x8xf32>
    %59 = arith.addf %56, %58 : vector<8x8x8xf32>
    %cst_34 = arith.constant 0.000000e+00 : f32
    %60 = vector.broadcast %cst_34 : f32 to vector<8x8x8xf32>
    %61 = arith.maximumf %59, %60 : vector<8x8x8xf32>
    %62 = vector.shape_cast %61 : vector<8x8x8xf32> to vector<64x8xf32>
    %63 = arith.truncf %62 : vector<64x8xf32> to vector<64x8xbf16>
    %c3 = arith.constant 3 : index
    %c0_35 = arith.constant 0 : index
    %c0_36 = arith.constant 0 : index
    %64 = vector.load %arg3[%c3, %c0_35, %c0_36] : memref<9x8x8xbf16, #tpu.memory_space<vmem>>, vector<1x8x8xbf16>
    %65 = vector.shape_cast %64 : vector<1x8x8xbf16> to vector<8x8xbf16>
    %cst_37 = arith.constant dense<0.000000e+00> : vector<64x8xf32>
    %66 = tpu.matmul %63, %65, %cst_37 {dimension_numbers = #tpu.dot_dimension_numbers<[1], [0], [0], [1], [0, 0, 1, 1], [], []>} : vector<64x8xbf16>, vector<8x8xbf16>, vector<64x8xf32> -> vector<64x8xf32>
    %67 = arith.addf %51, %66 : vector<64x8xf32>
    %c0_38 = arith.constant 0 : index
    %c1_39 = arith.constant 1 : index
    %c1_40 = arith.constant 1 : index
    %c0_41 = arith.constant 0 : index
    %68 = vector.load %arg2[%c0_38, %c1_39, %c1_40, %c0_41] : memref<1x10x10x8xf32, #tpu.memory_space<vmem>>, vector<1x8x8x8xf32>
    %69 = vector.shape_cast %68 : vector<1x8x8x8xf32> to vector<8x8x8xf32>
    %70 = vector.shape_cast %2 : vector<1x8xf32> to vector<1x1x8xf32>
    %71 = vector.broadcast %70 : vector<1x1x8xf32> to vector<8x8x8xf32>
    %72 = arith.mulf %69, %71 : vector<8x8x8xf32>
    %73 = vector.shape_cast %3 : vector<1x8xf32> to vector<1x1x8xf32>
    %74 = vector.broadcast %73 : vector<1x1x8xf32> to vector<8x8x8xf32>
    %75 = arith.addf %72, %74 : vector<8x8x8xf32>
    %cst_42 = arith.constant 0.000000e+00 : f32
    %76 = vector.broadcast %cst_42 : f32 to vector<8x8x8xf32>
    %77 = arith.maximumf %75, %76 : vector<8x8x8xf32>
    %78 = vector.shape_cast %77 : vector<8x8x8xf32> to vector<64x8xf32>
    %79 = arith.truncf %78 : vector<64x8xf32> to vector<64x8xbf16>
    %c4 = arith.constant 4 : index
    %c0_43 = arith.constant 0 : index
    %c0_44 = arith.constant 0 : index
    %80 = vector.load %arg3[%c4, %c0_43, %c0_44] : memref<9x8x8xbf16, #tpu.memory_space<vmem>>, vector<1x8x8xbf16>
    %81 = vector.shape_cast %80 : vector<1x8x8xbf16> to vector<8x8xbf16>
    %cst_45 = arith.constant dense<0.000000e+00> : vector<64x8xf32>
    %82 = tpu.matmul %79, %81, %cst_45 {dimension_numbers = #tpu.dot_dimension_numbers<[1], [0], [0], [1], [0, 0, 1, 1], [], []>} : vector<64x8xbf16>, vector<8x8xbf16>, vector<64x8xf32> -> vector<64x8xf32>
    %83 = arith.addf %67, %82 : vector<64x8xf32>
    %c0_46 = arith.constant 0 : index
    %c1_47 = arith.constant 1 : index
    %c2_48 = arith.constant 2 : index
    %c0_49 = arith.constant 0 : index
    %84 = vector.load %arg2[%c0_46, %c1_47, %c2_48, %c0_49] : memref<1x10x10x8xf32, #tpu.memory_space<vmem>>, vector<1x8x8x8xf32>
    %85 = vector.shape_cast %84 : vector<1x8x8x8xf32> to vector<8x8x8xf32>
    %86 = vector.shape_cast %2 : vector<1x8xf32> to vector<1x1x8xf32>
    %87 = vector.broadcast %86 : vector<1x1x8xf32> to vector<8x8x8xf32>
    %88 = arith.mulf %85, %87 : vector<8x8x8xf32>
    %89 = vector.shape_cast %3 : vector<1x8xf32> to vector<1x1x8xf32>
    %90 = vector.broadcast %89 : vector<1x1x8xf32> to vector<8x8x8xf32>
    %91 = arith.addf %88, %90 : vector<8x8x8xf32>
    %cst_50 = arith.constant 0.000000e+00 : f32
    %92 = vector.broadcast %cst_50 : f32 to vector<8x8x8xf32>
    %93 = arith.maximumf %91, %92 : vector<8x8x8xf32>
    %94 = vector.shape_cast %93 : vector<8x8x8xf32> to vector<64x8xf32>
    %95 = arith.truncf %94 : vector<64x8xf32> to vector<64x8xbf16>
    %c5 = arith.constant 5 : index
    %c0_51 = arith.constant 0 : index
    %c0_52 = arith.constant 0 : index
    %96 = vector.load %arg3[%c5, %c0_51, %c0_52] : memref<9x8x8xbf16, #tpu.memory_space<vmem>>, vector<1x8x8xbf16>
    %97 = vector.shape_cast %96 : vector<1x8x8xbf16> to vector<8x8xbf16>
    %cst_53 = arith.constant dense<0.000000e+00> : vector<64x8xf32>
    %98 = tpu.matmul %95, %97, %cst_53 {dimension_numbers = #tpu.dot_dimension_numbers<[1], [0], [0], [1], [0, 0, 1, 1], [], []>} : vector<64x8xbf16>, vector<8x8xbf16>, vector<64x8xf32> -> vector<64x8xf32>
    %99 = arith.addf %83, %98 : vector<64x8xf32>
    %c0_54 = arith.constant 0 : index
    %c2_55 = arith.constant 2 : index
    %c0_56 = arith.constant 0 : index
    %c0_57 = arith.constant 0 : index
    %100 = vector.load %arg2[%c0_54, %c2_55, %c0_56, %c0_57] : memref<1x10x10x8xf32, #tpu.memory_space<vmem>>, vector<1x8x8x8xf32>
    %101 = vector.shape_cast %100 : vector<1x8x8x8xf32> to vector<8x8x8xf32>
    %102 = vector.shape_cast %2 : vector<1x8xf32> to vector<1x1x8xf32>
    %103 = vector.broadcast %102 : vector<1x1x8xf32> to vector<8x8x8xf32>
    %104 = arith.mulf %101, %103 : vector<8x8x8xf32>
    %105 = vector.shape_cast %3 : vector<1x8xf32> to vector<1x1x8xf32>
    %106 = vector.broadcast %105 : vector<1x1x8xf32> to vector<8x8x8xf32>
    %107 = arith.addf %104, %106 : vector<8x8x8xf32>
    %cst_58 = arith.constant 0.000000e+00 : f32
    %108 = vector.broadcast %cst_58 : f32 to vector<8x8x8xf32>
    %109 = arith.maximumf %107, %108 : vector<8x8x8xf32>
    %110 = vector.shape_cast %109 : vector<8x8x8xf32> to vector<64x8xf32>
    %111 = arith.truncf %110 : vector<64x8xf32> to vector<64x8xbf16>
    %c6 = arith.constant 6 : index
    %c0_59 = arith.constant 0 : index
    %c0_60 = arith.constant 0 : index
    %112 = vector.load %arg3[%c6, %c0_59, %c0_60] : memref<9x8x8xbf16, #tpu.memory_space<vmem>>, vector<1x8x8xbf16>
    %113 = vector.shape_cast %112 : vector<1x8x8xbf16> to vector<8x8xbf16>
    %cst_61 = arith.constant dense<0.000000e+00> : vector<64x8xf32>
    %114 = tpu.matmul %111, %113, %cst_61 {dimension_numbers = #tpu.dot_dimension_numbers<[1], [0], [0], [1], [0, 0, 1, 1], [], []>} : vector<64x8xbf16>, vector<8x8xbf16>, vector<64x8xf32> -> vector<64x8xf32>
    %115 = arith.addf %99, %114 : vector<64x8xf32>
    %c0_62 = arith.constant 0 : index
    %c2_63 = arith.constant 2 : index
    %c1_64 = arith.constant 1 : index
    %c0_65 = arith.constant 0 : index
    %116 = vector.load %arg2[%c0_62, %c2_63, %c1_64, %c0_65] : memref<1x10x10x8xf32, #tpu.memory_space<vmem>>, vector<1x8x8x8xf32>
    %117 = vector.shape_cast %116 : vector<1x8x8x8xf32> to vector<8x8x8xf32>
    %118 = vector.shape_cast %2 : vector<1x8xf32> to vector<1x1x8xf32>
    %119 = vector.broadcast %118 : vector<1x1x8xf32> to vector<8x8x8xf32>
    %120 = arith.mulf %117, %119 : vector<8x8x8xf32>
    %121 = vector.shape_cast %3 : vector<1x8xf32> to vector<1x1x8xf32>
    %122 = vector.broadcast %121 : vector<1x1x8xf32> to vector<8x8x8xf32>
    %123 = arith.addf %120, %122 : vector<8x8x8xf32>
    %cst_66 = arith.constant 0.000000e+00 : f32
    %124 = vector.broadcast %cst_66 : f32 to vector<8x8x8xf32>
    %125 = arith.maximumf %123, %124 : vector<8x8x8xf32>
    %126 = vector.shape_cast %125 : vector<8x8x8xf32> to vector<64x8xf32>
    %127 = arith.truncf %126 : vector<64x8xf32> to vector<64x8xbf16>
    %c7 = arith.constant 7 : index
    %c0_67 = arith.constant 0 : index
    %c0_68 = arith.constant 0 : index
    %128 = vector.load %arg3[%c7, %c0_67, %c0_68] : memref<9x8x8xbf16, #tpu.memory_space<vmem>>, vector<1x8x8xbf16>
    %129 = vector.shape_cast %128 : vector<1x8x8xbf16> to vector<8x8xbf16>
    %cst_69 = arith.constant dense<0.000000e+00> : vector<64x8xf32>
    %130 = tpu.matmul %127, %129, %cst_69 {dimension_numbers = #tpu.dot_dimension_numbers<[1], [0], [0], [1], [0, 0, 1, 1], [], []>} : vector<64x8xbf16>, vector<8x8xbf16>, vector<64x8xf32> -> vector<64x8xf32>
    %131 = arith.addf %115, %130 : vector<64x8xf32>
    %c0_70 = arith.constant 0 : index
    %c2_71 = arith.constant 2 : index
    %c2_72 = arith.constant 2 : index
    %c0_73 = arith.constant 0 : index
    %132 = vector.load %arg2[%c0_70, %c2_71, %c2_72, %c0_73] : memref<1x10x10x8xf32, #tpu.memory_space<vmem>>, vector<1x8x8x8xf32>
    %133 = vector.shape_cast %132 : vector<1x8x8x8xf32> to vector<8x8x8xf32>
    %134 = vector.shape_cast %2 : vector<1x8xf32> to vector<1x1x8xf32>
    %135 = vector.broadcast %134 : vector<1x1x8xf32> to vector<8x8x8xf32>
    %136 = arith.mulf %133, %135 : vector<8x8x8xf32>
    %137 = vector.shape_cast %3 : vector<1x8xf32> to vector<1x1x8xf32>
    %138 = vector.broadcast %137 : vector<1x1x8xf32> to vector<8x8x8xf32>
    %139 = arith.addf %136, %138 : vector<8x8x8xf32>
    %cst_74 = arith.constant 0.000000e+00 : f32
    %140 = vector.broadcast %cst_74 : f32 to vector<8x8x8xf32>
    %141 = arith.maximumf %139, %140 : vector<8x8x8xf32>
    %142 = vector.shape_cast %141 : vector<8x8x8xf32> to vector<64x8xf32>
    %143 = arith.truncf %142 : vector<64x8xf32> to vector<64x8xbf16>
    %c8 = arith.constant 8 : index
    %c0_75 = arith.constant 0 : index
    %c0_76 = arith.constant 0 : index
    %144 = vector.load %arg3[%c8, %c0_75, %c0_76] : memref<9x8x8xbf16, #tpu.memory_space<vmem>>, vector<1x8x8xbf16>
    %145 = vector.shape_cast %144 : vector<1x8x8xbf16> to vector<8x8xbf16>
    %cst_77 = arith.constant dense<0.000000e+00> : vector<64x8xf32>
    %146 = tpu.matmul %143, %145, %cst_77 {dimension_numbers = #tpu.dot_dimension_numbers<[1], [0], [0], [1], [0, 0, 1, 1], [], []>} : vector<64x8xbf16>, vector<8x8xbf16>, vector<64x8xf32> -> vector<64x8xf32>
    %147 = arith.addf %131, %146 : vector<64x8xf32>
    %c0_78 = arith.constant 0 : index
    %c0_79 = arith.constant 0 : index
    %c0_80 = arith.constant 0 : index
    %148 = vector.load %arg7[%c0_78, %c0_79, %c0_80] : memref<1x64x8xf32, #tpu.memory_space<vmem>>, vector<1x64x8xf32>
    %149 = vector.shape_cast %148 : vector<1x64x8xf32> to vector<64x8xf32>
    %150 = vector.shape_cast %147 : vector<64x8xf32> to vector<1x64x8xf32>
    tpu.vector_store %arg7[%c0_78, %c0_79, %c0_80], %150 {strides = array<i32>} : memref<1x64x8xf32, #tpu.memory_space<vmem>>, vector<1x64x8xf32>,
    return
  }
  func.func @transform_0(%arg0: i32, %arg1: i32) -> (i32, i32, i32, i32) {
    %c0_i32 = arith.constant 0 : i32
    %c0_i32_0 = arith.constant 0 : i32
    %c0_i32_1 = arith.constant 0 : i32
    %c0_i32_2 = arith.constant 0 : i32
    return %arg0, %c0_i32, %c0_i32_0, %c0_i32_1 : i32, i32, i32, i32
  }
  func.func @transform_1(%arg0: i32, %arg1: i32) -> (i32, i32, i32) {
    %c0_i32 = arith.constant 0 : i32
    %c0_i32_0 = arith.constant 0 : i32
    %c0_i32_1 = arith.constant 0 : i32
    return %c0_i32, %c0_i32_0, %arg1 : i32, i32, i32
  }
  func.func @transform_2(%arg0: i32, %arg1: i32) -> (i32, i32) {
    %c0_i32 = arith.constant 0 : i32
    %c0_i32_0 = arith.constant 0 : i32
    %c0_i32_1 = arith.constant 0 : i32
    return %c0_i32, %c0_i32_0 : i32, i32
  }
  func.func @transform_3(%arg0: i32, %arg1: i32) -> (i32, i32) {
    %c0_i32 = arith.constant 0 : i32
    %c0_i32_0 = arith.constant 0 : i32
    %c0_i32_1 = arith.constant 0 : i32
    return %c0_i32, %c0_i32_0 : i32, i32
  }
  func.func @transform_4(%arg0: i32, %arg1: i32) -> (i32, i32, i32) {
    %c0_i32 = arith.constant 0 : i32
    %c0_i32_0 = arith.constant 0 : i32
    return %arg0, %c0_i32, %arg1 : i32, i32, i32
  }
  func.func @transform_5(%arg0: i32, %arg1: i32) -> (i32, i32, i32) {
    %c0_i32 = arith.constant 0 : i32
    %c0_i32_0 = arith.constant 0 : i32
    return %arg0, %c0_i32, %arg1 : i32, i32, i32
  }
}

module attributes {stable_mosaic.version = 11 : i64} {
  func.func @_tapconv_kernel(%arg0: i32, %arg1: i32, %arg2: memref<1x10x10x8xf32, #tpu.memory_space<vmem>>, %arg3: memref<9x8x8xbf16, #tpu.memory_space<vmem>>, %arg4: memref<1x8xf32, #tpu.memory_space<vmem>>, %arg5: memref<1x8xf32, #tpu.memory_space<vmem>>, %arg6: memref<1x64x8xf32, #tpu.memory_space<vmem>>) attributes {dimension_semantics = [#tpu.dimension_semantics<parallel>, #tpu.dimension_semantics<parallel>], iteration_bounds = array<i64: 2, 1>, scalar_prefetch = 0 : i64, scratch_operands = 0 : i64, tpu.core_type = #tpu.core_type<tc>, window_params = [{transform_indices = @transform_0, window_bounds = array<i64: 1, 10, 10, 8>}, {transform_indices = @transform_1, window_bounds = array<i64: 9, 8, 8>}, {pipeline_mode = #tpu.pipeline_mode<synchronous>, transform_indices = @transform_2, window_bounds = array<i64: 1, 8>}, {pipeline_mode = #tpu.pipeline_mode<synchronous>, transform_indices = @transform_3, window_bounds = array<i64: 1, 8>}, {transform_indices = @transform_4, window_bounds = array<i64: 1, 64, 8>}]} {
    %cst = arith.constant 0.000000e+00 : f32
    %0 = vector.broadcast %cst : f32 to vector<64x8xf32>
    %c0 = arith.constant 0 : index
    %c0_0 = arith.constant 0 : index
    %1 = vector.load %arg4[%c0, %c0_0] : memref<1x8xf32, #tpu.memory_space<vmem>>, vector<1x8xf32>
    %c0_1 = arith.constant 0 : index
    %c0_2 = arith.constant 0 : index
    %2 = vector.load %arg5[%c0_1, %c0_2] : memref<1x8xf32, #tpu.memory_space<vmem>>, vector<1x8xf32>
    %c0_3 = arith.constant 0 : index
    %c0_4 = arith.constant 0 : index
    %c0_5 = arith.constant 0 : index
    %c0_6 = arith.constant 0 : index
    %3 = vector.load %arg2[%c0_3, %c0_4, %c0_5, %c0_6] : memref<1x10x10x8xf32, #tpu.memory_space<vmem>>, vector<1x8x8x8xf32>
    %4 = vector.shape_cast %3 : vector<1x8x8x8xf32> to vector<8x8x8xf32>
    %5 = vector.shape_cast %1 : vector<1x8xf32> to vector<1x1x8xf32>
    %6 = vector.broadcast %5 : vector<1x1x8xf32> to vector<8x8x8xf32>
    %7 = arith.mulf %4, %6 : vector<8x8x8xf32>
    %8 = vector.shape_cast %2 : vector<1x8xf32> to vector<1x1x8xf32>
    %9 = vector.broadcast %8 : vector<1x1x8xf32> to vector<8x8x8xf32>
    %10 = arith.addf %7, %9 : vector<8x8x8xf32>
    %cst_7 = arith.constant 0.000000e+00 : f32
    %11 = vector.broadcast %cst_7 : f32 to vector<8x8x8xf32>
    %12 = arith.maximumf %10, %11 : vector<8x8x8xf32>
    %13 = vector.shape_cast %12 : vector<8x8x8xf32> to vector<64x8xf32>
    %14 = arith.truncf %13 : vector<64x8xf32> to vector<64x8xbf16>
    %c0_8 = arith.constant 0 : index
    %c0_9 = arith.constant 0 : index
    %c0_10 = arith.constant 0 : index
    %15 = vector.load %arg3[%c0_8, %c0_9, %c0_10] : memref<9x8x8xbf16, #tpu.memory_space<vmem>>, vector<1x8x8xbf16>
    %16 = vector.shape_cast %15 : vector<1x8x8xbf16> to vector<8x8xbf16>
    %cst_11 = arith.constant dense<0.000000e+00> : vector<64x8xf32>
    %17 = tpu.matmul %14, %16, %cst_11 {dimension_numbers = #tpu.dot_dimension_numbers<[1], [0], [0], [1], [0, 0, 1, 1], [], []>} : vector<64x8xbf16>, vector<8x8xbf16>, vector<64x8xf32> -> vector<64x8xf32>
    %18 = arith.addf %0, %17 : vector<64x8xf32>
    %c0_12 = arith.constant 0 : index
    %c0_13 = arith.constant 0 : index
    %c1 = arith.constant 1 : index
    %c0_14 = arith.constant 0 : index
    %19 = vector.load %arg2[%c0_12, %c0_13, %c1, %c0_14] : memref<1x10x10x8xf32, #tpu.memory_space<vmem>>, vector<1x8x8x8xf32>
    %20 = vector.shape_cast %19 : vector<1x8x8x8xf32> to vector<8x8x8xf32>
    %21 = vector.shape_cast %1 : vector<1x8xf32> to vector<1x1x8xf32>
    %22 = vector.broadcast %21 : vector<1x1x8xf32> to vector<8x8x8xf32>
    %23 = arith.mulf %20, %22 : vector<8x8x8xf32>
    %24 = vector.shape_cast %2 : vector<1x8xf32> to vector<1x1x8xf32>
    %25 = vector.broadcast %24 : vector<1x1x8xf32> to vector<8x8x8xf32>
    %26 = arith.addf %23, %25 : vector<8x8x8xf32>
    %cst_15 = arith.constant 0.000000e+00 : f32
    %27 = vector.broadcast %cst_15 : f32 to vector<8x8x8xf32>
    %28 = arith.maximumf %26, %27 : vector<8x8x8xf32>
    %29 = vector.shape_cast %28 : vector<8x8x8xf32> to vector<64x8xf32>
    %30 = arith.truncf %29 : vector<64x8xf32> to vector<64x8xbf16>
    %c1_16 = arith.constant 1 : index
    %c0_17 = arith.constant 0 : index
    %c0_18 = arith.constant 0 : index
    %31 = vector.load %arg3[%c1_16, %c0_17, %c0_18] : memref<9x8x8xbf16, #tpu.memory_space<vmem>>, vector<1x8x8xbf16>
    %32 = vector.shape_cast %31 : vector<1x8x8xbf16> to vector<8x8xbf16>
    %cst_19 = arith.constant dense<0.000000e+00> : vector<64x8xf32>
    %33 = tpu.matmul %30, %32, %cst_19 {dimension_numbers = #tpu.dot_dimension_numbers<[1], [0], [0], [1], [0, 0, 1, 1], [], []>} : vector<64x8xbf16>, vector<8x8xbf16>, vector<64x8xf32> -> vector<64x8xf32>
    %34 = arith.addf %18, %33 : vector<64x8xf32>
    %c0_20 = arith.constant 0 : index
    %c0_21 = arith.constant 0 : index
    %c2 = arith.constant 2 : index
    %c0_22 = arith.constant 0 : index
    %35 = vector.load %arg2[%c0_20, %c0_21, %c2, %c0_22] : memref<1x10x10x8xf32, #tpu.memory_space<vmem>>, vector<1x8x8x8xf32>
    %36 = vector.shape_cast %35 : vector<1x8x8x8xf32> to vector<8x8x8xf32>
    %37 = vector.shape_cast %1 : vector<1x8xf32> to vector<1x1x8xf32>
    %38 = vector.broadcast %37 : vector<1x1x8xf32> to vector<8x8x8xf32>
    %39 = arith.mulf %36, %38 : vector<8x8x8xf32>
    %40 = vector.shape_cast %2 : vector<1x8xf32> to vector<1x1x8xf32>
    %41 = vector.broadcast %40 : vector<1x1x8xf32> to vector<8x8x8xf32>
    %42 = arith.addf %39, %41 : vector<8x8x8xf32>
    %cst_23 = arith.constant 0.000000e+00 : f32
    %43 = vector.broadcast %cst_23 : f32 to vector<8x8x8xf32>
    %44 = arith.maximumf %42, %43 : vector<8x8x8xf32>
    %45 = vector.shape_cast %44 : vector<8x8x8xf32> to vector<64x8xf32>
    %46 = arith.truncf %45 : vector<64x8xf32> to vector<64x8xbf16>
    %c2_24 = arith.constant 2 : index
    %c0_25 = arith.constant 0 : index
    %c0_26 = arith.constant 0 : index
    %47 = vector.load %arg3[%c2_24, %c0_25, %c0_26] : memref<9x8x8xbf16, #tpu.memory_space<vmem>>, vector<1x8x8xbf16>
    %48 = vector.shape_cast %47 : vector<1x8x8xbf16> to vector<8x8xbf16>
    %cst_27 = arith.constant dense<0.000000e+00> : vector<64x8xf32>
    %49 = tpu.matmul %46, %48, %cst_27 {dimension_numbers = #tpu.dot_dimension_numbers<[1], [0], [0], [1], [0, 0, 1, 1], [], []>} : vector<64x8xbf16>, vector<8x8xbf16>, vector<64x8xf32> -> vector<64x8xf32>
    %50 = arith.addf %34, %49 : vector<64x8xf32>
    %c0_28 = arith.constant 0 : index
    %c1_29 = arith.constant 1 : index
    %c0_30 = arith.constant 0 : index
    %c0_31 = arith.constant 0 : index
    %51 = vector.load %arg2[%c0_28, %c1_29, %c0_30, %c0_31] : memref<1x10x10x8xf32, #tpu.memory_space<vmem>>, vector<1x8x8x8xf32>
    %52 = vector.shape_cast %51 : vector<1x8x8x8xf32> to vector<8x8x8xf32>
    %53 = vector.shape_cast %1 : vector<1x8xf32> to vector<1x1x8xf32>
    %54 = vector.broadcast %53 : vector<1x1x8xf32> to vector<8x8x8xf32>
    %55 = arith.mulf %52, %54 : vector<8x8x8xf32>
    %56 = vector.shape_cast %2 : vector<1x8xf32> to vector<1x1x8xf32>
    %57 = vector.broadcast %56 : vector<1x1x8xf32> to vector<8x8x8xf32>
    %58 = arith.addf %55, %57 : vector<8x8x8xf32>
    %cst_32 = arith.constant 0.000000e+00 : f32
    %59 = vector.broadcast %cst_32 : f32 to vector<8x8x8xf32>
    %60 = arith.maximumf %58, %59 : vector<8x8x8xf32>
    %61 = vector.shape_cast %60 : vector<8x8x8xf32> to vector<64x8xf32>
    %62 = arith.truncf %61 : vector<64x8xf32> to vector<64x8xbf16>
    %c3 = arith.constant 3 : index
    %c0_33 = arith.constant 0 : index
    %c0_34 = arith.constant 0 : index
    %63 = vector.load %arg3[%c3, %c0_33, %c0_34] : memref<9x8x8xbf16, #tpu.memory_space<vmem>>, vector<1x8x8xbf16>
    %64 = vector.shape_cast %63 : vector<1x8x8xbf16> to vector<8x8xbf16>
    %cst_35 = arith.constant dense<0.000000e+00> : vector<64x8xf32>
    %65 = tpu.matmul %62, %64, %cst_35 {dimension_numbers = #tpu.dot_dimension_numbers<[1], [0], [0], [1], [0, 0, 1, 1], [], []>} : vector<64x8xbf16>, vector<8x8xbf16>, vector<64x8xf32> -> vector<64x8xf32>
    %66 = arith.addf %50, %65 : vector<64x8xf32>
    %c0_36 = arith.constant 0 : index
    %c1_37 = arith.constant 1 : index
    %c1_38 = arith.constant 1 : index
    %c0_39 = arith.constant 0 : index
    %67 = vector.load %arg2[%c0_36, %c1_37, %c1_38, %c0_39] : memref<1x10x10x8xf32, #tpu.memory_space<vmem>>, vector<1x8x8x8xf32>
    %68 = vector.shape_cast %67 : vector<1x8x8x8xf32> to vector<8x8x8xf32>
    %69 = vector.shape_cast %1 : vector<1x8xf32> to vector<1x1x8xf32>
    %70 = vector.broadcast %69 : vector<1x1x8xf32> to vector<8x8x8xf32>
    %71 = arith.mulf %68, %70 : vector<8x8x8xf32>
    %72 = vector.shape_cast %2 : vector<1x8xf32> to vector<1x1x8xf32>
    %73 = vector.broadcast %72 : vector<1x1x8xf32> to vector<8x8x8xf32>
    %74 = arith.addf %71, %73 : vector<8x8x8xf32>
    %cst_40 = arith.constant 0.000000e+00 : f32
    %75 = vector.broadcast %cst_40 : f32 to vector<8x8x8xf32>
    %76 = arith.maximumf %74, %75 : vector<8x8x8xf32>
    %77 = vector.shape_cast %76 : vector<8x8x8xf32> to vector<64x8xf32>
    %78 = arith.truncf %77 : vector<64x8xf32> to vector<64x8xbf16>
    %c4 = arith.constant 4 : index
    %c0_41 = arith.constant 0 : index
    %c0_42 = arith.constant 0 : index
    %79 = vector.load %arg3[%c4, %c0_41, %c0_42] : memref<9x8x8xbf16, #tpu.memory_space<vmem>>, vector<1x8x8xbf16>
    %80 = vector.shape_cast %79 : vector<1x8x8xbf16> to vector<8x8xbf16>
    %cst_43 = arith.constant dense<0.000000e+00> : vector<64x8xf32>
    %81 = tpu.matmul %78, %80, %cst_43 {dimension_numbers = #tpu.dot_dimension_numbers<[1], [0], [0], [1], [0, 0, 1, 1], [], []>} : vector<64x8xbf16>, vector<8x8xbf16>, vector<64x8xf32> -> vector<64x8xf32>
    %82 = arith.addf %66, %81 : vector<64x8xf32>
    %c0_44 = arith.constant 0 : index
    %c1_45 = arith.constant 1 : index
    %c2_46 = arith.constant 2 : index
    %c0_47 = arith.constant 0 : index
    %83 = vector.load %arg2[%c0_44, %c1_45, %c2_46, %c0_47] : memref<1x10x10x8xf32, #tpu.memory_space<vmem>>, vector<1x8x8x8xf32>
    %84 = vector.shape_cast %83 : vector<1x8x8x8xf32> to vector<8x8x8xf32>
    %85 = vector.shape_cast %1 : vector<1x8xf32> to vector<1x1x8xf32>
    %86 = vector.broadcast %85 : vector<1x1x8xf32> to vector<8x8x8xf32>
    %87 = arith.mulf %84, %86 : vector<8x8x8xf32>
    %88 = vector.shape_cast %2 : vector<1x8xf32> to vector<1x1x8xf32>
    %89 = vector.broadcast %88 : vector<1x1x8xf32> to vector<8x8x8xf32>
    %90 = arith.addf %87, %89 : vector<8x8x8xf32>
    %cst_48 = arith.constant 0.000000e+00 : f32
    %91 = vector.broadcast %cst_48 : f32 to vector<8x8x8xf32>
    %92 = arith.maximumf %90, %91 : vector<8x8x8xf32>
    %93 = vector.shape_cast %92 : vector<8x8x8xf32> to vector<64x8xf32>
    %94 = arith.truncf %93 : vector<64x8xf32> to vector<64x8xbf16>
    %c5 = arith.constant 5 : index
    %c0_49 = arith.constant 0 : index
    %c0_50 = arith.constant 0 : index
    %95 = vector.load %arg3[%c5, %c0_49, %c0_50] : memref<9x8x8xbf16, #tpu.memory_space<vmem>>, vector<1x8x8xbf16>
    %96 = vector.shape_cast %95 : vector<1x8x8xbf16> to vector<8x8xbf16>
    %cst_51 = arith.constant dense<0.000000e+00> : vector<64x8xf32>
    %97 = tpu.matmul %94, %96, %cst_51 {dimension_numbers = #tpu.dot_dimension_numbers<[1], [0], [0], [1], [0, 0, 1, 1], [], []>} : vector<64x8xbf16>, vector<8x8xbf16>, vector<64x8xf32> -> vector<64x8xf32>
    %98 = arith.addf %82, %97 : vector<64x8xf32>
    %c0_52 = arith.constant 0 : index
    %c2_53 = arith.constant 2 : index
    %c0_54 = arith.constant 0 : index
    %c0_55 = arith.constant 0 : index
    %99 = vector.load %arg2[%c0_52, %c2_53, %c0_54, %c0_55] : memref<1x10x10x8xf32, #tpu.memory_space<vmem>>, vector<1x8x8x8xf32>
    %100 = vector.shape_cast %99 : vector<1x8x8x8xf32> to vector<8x8x8xf32>
    %101 = vector.shape_cast %1 : vector<1x8xf32> to vector<1x1x8xf32>
    %102 = vector.broadcast %101 : vector<1x1x8xf32> to vector<8x8x8xf32>
    %103 = arith.mulf %100, %102 : vector<8x8x8xf32>
    %104 = vector.shape_cast %2 : vector<1x8xf32> to vector<1x1x8xf32>
    %105 = vector.broadcast %104 : vector<1x1x8xf32> to vector<8x8x8xf32>
    %106 = arith.addf %103, %105 : vector<8x8x8xf32>
    %cst_56 = arith.constant 0.000000e+00 : f32
    %107 = vector.broadcast %cst_56 : f32 to vector<8x8x8xf32>
    %108 = arith.maximumf %106, %107 : vector<8x8x8xf32>
    %109 = vector.shape_cast %108 : vector<8x8x8xf32> to vector<64x8xf32>
    %110 = arith.truncf %109 : vector<64x8xf32> to vector<64x8xbf16>
    %c6 = arith.constant 6 : index
    %c0_57 = arith.constant 0 : index
    %c0_58 = arith.constant 0 : index
    %111 = vector.load %arg3[%c6, %c0_57, %c0_58] : memref<9x8x8xbf16, #tpu.memory_space<vmem>>, vector<1x8x8xbf16>
    %112 = vector.shape_cast %111 : vector<1x8x8xbf16> to vector<8x8xbf16>
    %cst_59 = arith.constant dense<0.000000e+00> : vector<64x8xf32>
    %113 = tpu.matmul %110, %112, %cst_59 {dimension_numbers = #tpu.dot_dimension_numbers<[1], [0], [0], [1], [0, 0, 1, 1], [], []>} : vector<64x8xbf16>, vector<8x8xbf16>, vector<64x8xf32> -> vector<64x8xf32>
    %114 = arith.addf %98, %113 : vector<64x8xf32>
    %c0_60 = arith.constant 0 : index
    %c2_61 = arith.constant 2 : index
    %c1_62 = arith.constant 1 : index
    %c0_63 = arith.constant 0 : index
    %115 = vector.load %arg2[%c0_60, %c2_61, %c1_62, %c0_63] : memref<1x10x10x8xf32, #tpu.memory_space<vmem>>, vector<1x8x8x8xf32>
    %116 = vector.shape_cast %115 : vector<1x8x8x8xf32> to vector<8x8x8xf32>
    %117 = vector.shape_cast %1 : vector<1x8xf32> to vector<1x1x8xf32>
    %118 = vector.broadcast %117 : vector<1x1x8xf32> to vector<8x8x8xf32>
    %119 = arith.mulf %116, %118 : vector<8x8x8xf32>
    %120 = vector.shape_cast %2 : vector<1x8xf32> to vector<1x1x8xf32>
    %121 = vector.broadcast %120 : vector<1x1x8xf32> to vector<8x8x8xf32>
    %122 = arith.addf %119, %121 : vector<8x8x8xf32>
    %cst_64 = arith.constant 0.000000e+00 : f32
    %123 = vector.broadcast %cst_64 : f32 to vector<8x8x8xf32>
    %124 = arith.maximumf %122, %123 : vector<8x8x8xf32>
    %125 = vector.shape_cast %124 : vector<8x8x8xf32> to vector<64x8xf32>
    %126 = arith.truncf %125 : vector<64x8xf32> to vector<64x8xbf16>
    %c7 = arith.constant 7 : index
    %c0_65 = arith.constant 0 : index
    %c0_66 = arith.constant 0 : index
    %127 = vector.load %arg3[%c7, %c0_65, %c0_66] : memref<9x8x8xbf16, #tpu.memory_space<vmem>>, vector<1x8x8xbf16>
    %128 = vector.shape_cast %127 : vector<1x8x8xbf16> to vector<8x8xbf16>
    %cst_67 = arith.constant dense<0.000000e+00> : vector<64x8xf32>
    %129 = tpu.matmul %126, %128, %cst_67 {dimension_numbers = #tpu.dot_dimension_numbers<[1], [0], [0], [1], [0, 0, 1, 1], [], []>} : vector<64x8xbf16>, vector<8x8xbf16>, vector<64x8xf32> -> vector<64x8xf32>
    %130 = arith.addf %114, %129 : vector<64x8xf32>
    %c0_68 = arith.constant 0 : index
    %c2_69 = arith.constant 2 : index
    %c2_70 = arith.constant 2 : index
    %c0_71 = arith.constant 0 : index
    %131 = vector.load %arg2[%c0_68, %c2_69, %c2_70, %c0_71] : memref<1x10x10x8xf32, #tpu.memory_space<vmem>>, vector<1x8x8x8xf32>
    %132 = vector.shape_cast %131 : vector<1x8x8x8xf32> to vector<8x8x8xf32>
    %133 = vector.shape_cast %1 : vector<1x8xf32> to vector<1x1x8xf32>
    %134 = vector.broadcast %133 : vector<1x1x8xf32> to vector<8x8x8xf32>
    %135 = arith.mulf %132, %134 : vector<8x8x8xf32>
    %136 = vector.shape_cast %2 : vector<1x8xf32> to vector<1x1x8xf32>
    %137 = vector.broadcast %136 : vector<1x1x8xf32> to vector<8x8x8xf32>
    %138 = arith.addf %135, %137 : vector<8x8x8xf32>
    %cst_72 = arith.constant 0.000000e+00 : f32
    %139 = vector.broadcast %cst_72 : f32 to vector<8x8x8xf32>
    %140 = arith.maximumf %138, %139 : vector<8x8x8xf32>
    %141 = vector.shape_cast %140 : vector<8x8x8xf32> to vector<64x8xf32>
    %142 = arith.truncf %141 : vector<64x8xf32> to vector<64x8xbf16>
    %c8 = arith.constant 8 : index
    %c0_73 = arith.constant 0 : index
    %c0_74 = arith.constant 0 : index
    %143 = vector.load %arg3[%c8, %c0_73, %c0_74] : memref<9x8x8xbf16, #tpu.memory_space<vmem>>, vector<1x8x8xbf16>
    %144 = vector.shape_cast %143 : vector<1x8x8xbf16> to vector<8x8xbf16>
    %cst_75 = arith.constant dense<0.000000e+00> : vector<64x8xf32>
    %145 = tpu.matmul %142, %144, %cst_75 {dimension_numbers = #tpu.dot_dimension_numbers<[1], [0], [0], [1], [0, 0, 1, 1], [], []>} : vector<64x8xbf16>, vector<8x8xbf16>, vector<64x8xf32> -> vector<64x8xf32>
    %146 = arith.addf %130, %145 : vector<64x8xf32>
    %c0_76 = arith.constant 0 : index
    %c0_77 = arith.constant 0 : index
    %c0_78 = arith.constant 0 : index
    %147 = vector.load %arg6[%c0_76, %c0_77, %c0_78] : memref<1x64x8xf32, #tpu.memory_space<vmem>>, vector<1x64x8xf32>
    %148 = vector.shape_cast %147 : vector<1x64x8xf32> to vector<64x8xf32>
    %149 = vector.shape_cast %146 : vector<64x8xf32> to vector<1x64x8xf32>
    tpu.vector_store %arg6[%c0_76, %c0_77, %c0_78], %149 {strides = array<i32>} : memref<1x64x8xf32, #tpu.memory_space<vmem>>, vector<1x64x8xf32>,
    return
  }
  func.func @transform_0(%arg0: i32, %arg1: i32) -> (i32, i32, i32, i32) {
    %c0_i32 = arith.constant 0 : i32
    %c0_i32_0 = arith.constant 0 : i32
    %c0_i32_1 = arith.constant 0 : i32
    %c0_i32_2 = arith.constant 0 : i32
    return %arg0, %c0_i32, %c0_i32_0, %c0_i32_1 : i32, i32, i32, i32
  }
  func.func @transform_1(%arg0: i32, %arg1: i32) -> (i32, i32, i32) {
    %c0_i32 = arith.constant 0 : i32
    %c0_i32_0 = arith.constant 0 : i32
    %c0_i32_1 = arith.constant 0 : i32
    return %c0_i32, %c0_i32_0, %arg1 : i32, i32, i32
  }
  func.func @transform_2(%arg0: i32, %arg1: i32) -> (i32, i32) {
    %c0_i32 = arith.constant 0 : i32
    %c0_i32_0 = arith.constant 0 : i32
    %c0_i32_1 = arith.constant 0 : i32
    return %c0_i32, %c0_i32_0 : i32, i32
  }
  func.func @transform_3(%arg0: i32, %arg1: i32) -> (i32, i32) {
    %c0_i32 = arith.constant 0 : i32
    %c0_i32_0 = arith.constant 0 : i32
    %c0_i32_1 = arith.constant 0 : i32
    return %c0_i32, %c0_i32_0 : i32, i32
  }
  func.func @transform_4(%arg0: i32, %arg1: i32) -> (i32, i32, i32) {
    %c0_i32 = arith.constant 0 : i32
    %c0_i32_0 = arith.constant 0 : i32
    return %arg0, %c0_i32, %arg1 : i32, i32, i32
  }
}

</mosaic_0001>

<llo_original>
// kernel: network_block_forward.6
$region0: #{network_block_forward.6}
  #allocation0 [shape = 'u32[]', space=smem, size = 0x4, offset = 0x4, fixed_abs, tag = 'smem constant byte address 0x4 - core index']
  #allocation1 [shape = 'u32[144,128]{1,0:T(1,128)}', space=vmem, size = 0x12000, scoped, tag = 'internal scratch']
  %s0 = inlined_call_operand.vmem [shape: f32[2,9,9,4], index: 0, kind: input, shape index: {}]
  %s1 = inlined_call_operand.vmem [shape: bf16[1,4,8], index: 1, kind: input, shape index: {}]
  %s2 = inlined_call_operand.vmem [shape: f32[1,4], index: 2, kind: input, shape index: {}]
  %s3 = inlined_call_operand.vmem [shape: f32[1,4], index: 3, kind: input, shape index: {}]
  %s4 = inlined_call_operand.vmem [shape: f32[2,64,8], index: 4, kind: output, shape index: {}]
  %s5 = sld [smem:[#allocation0]]
  $region49: #{network_block_forward.6} parent=0
    _
  %s7 = ssub.s32 1, %s5
  %s8 = scalar_select 0, %s7, %s5
  loop: start=0, step=1, limit=4
  $region2: #{network_block_forward.6} parent=0 // loop_pre_header
    _
  $region3: #{network_block_forward.6} parent=0 // loop_header
    %s10 = sphi 0, %s14
    %p11 = scmp.ge.s32.totalorder %s10, 4
    %s17 = sphi 0, %s29
    %s18 = sphi 0, %s25
    %s19 = sphi 0, %s17
    %s20 = sphi 0, %s18
    %s21 = sphi 0, %s19
    %s22 = sphi 0, %s20
    %s32 = sphi 0, %s34
    %s35 = sphi 0, %s32
    %s36 = sphi 0, %s35
    %s52 = sphi 0, %s36
    %s58 = sphi 0, %s60
    %s61 = sphi 0, %s58
    %s62 = sphi 0, %s61
    %s78 = sphi 0, %s62
    %s82 = sphi 0, %s82
    %s84 = sphi 0, %s82
    %s85 = sphi 0, %s84
    %s99 = sphi 0, %s85
    %s103 = sphi 0, %s103
    %s105 = sphi 0, %s103
    %s106 = sphi 0, %s105
    %s120 = sphi 0, %s106
    %s128 = sphi 0, %s130
    %s131 = sphi 0, %s128
    %s132 = sphi 0, %s131
    %s148 = sphi 0, %s132
  $region4: #{network_block_forward.6} parent=0 // loop_header_branch
    %13 = sbr.rel (%p11) target = $region8
  $region5: #{network_block_forward.6} parent=0 // loop_body
    %s15 = ssub.s32 %s10, 1
    %s16 = ssub.s32 %s10, 2
    %s23 = sadd.s32 1, %s18
    %p24 = scmp.ge.s32.totalorder %s23, 1
    %s25 = scalar_select %p24, 0, %s23
    %s26 = sadd.s32 1, %s17
    %s27 = scalar_select %p24, %s26, %s17
    %p28 = scmp.ge.s32.totalorder %s27, 2
    %s29 = scalar_select %p28, 0, %s27
    %s30 = ssub.s32 %s17, %s29
    %p31 = scmp.eq.s32.totalorder %s30, 0
    %s33 = sadd.s32 %s32, 1
    %s34 = scalar_select %p31, %s32, %s33
    %p37 = pneg %p31
    %p38 = scmp.eq.s32.totalorder %s10, 1
    %p39 = por %p37, %p38
    %p40 = scmp.ne.s32.totalorder %s32, %s35
    %p41 = scmp.eq.s32.totalorder %s10, 0
    %p42 = por %p40, %p41
    %p43 = scmp.ne.s32.totalorder %s32, %s35
    %p44 = scmp.eq.s32.totalorder %s15, 1
    %p45 = por %p43, %p44
    %p46 = scmp.ne.s32.totalorder %s35, %s36
    %p47 = scmp.eq.s32.totalorder %s15, 0
    %p48 = por %p46, %p47
    %p49 = scmp.ne.s32.totalorder %s35, %s36
    %p50 = scmp.eq.s32.totalorder %s16, 1
    %p51 = por %p49, %p50
    %p53 = scmp.ne.s32.totalorder %s36, %s52
    %p54 = scmp.eq.s32.totalorder %s16, 0
    %p55 = por %p53, %p54
    %s56 = ssub.s32 %s18, %s25
    %p57 = scmp.eq.s32.totalorder %s56, 0
    %s59 = sadd.s32 %s58, 1
    %s60 = scalar_select %p57, %s58, %s59
    %p63 = pneg %p57
    %p64 = scmp.eq.s32.totalorder %s10, 1
    %p65 = por %p63, %p64
    %p66 = scmp.ne.s32.totalorder %s58, %s61
    %p67 = scmp.eq.s32.totalorder %s10, 0
    %p68 = por %p66, %p67
    %p69 = scmp.ne.s32.totalorder %s58, %s61
    %p70 = scmp.eq.s32.totalorder %s15, 1
    %p71 = por %p69, %p70
    %p72 = scmp.ne.s32.totalorder %s61, %s62
    %p73 = scmp.eq.s32.totalorder %s15, 0
    %p74 = por %p72, %p73
    %p75 = scmp.ne.s32.totalorder %s61, %s62
    %p76 = scmp.eq.s32.totalorder %s16, 1
    %p77 = por %p75, %p76
    %p79 = scmp.ne.s32.totalorder %s62, %s78
    %p80 = scmp.eq.s32.totalorder %s16, 0
    %p81 = por %p79, %p80
    %s83 = sadd.s32 %s82, 1
    %p86 = scmp.eq.s32.totalorder %s10, 1
    %p87 = scmp.ne.s32.totalorder %s82, %s84
    %p88 = scmp.eq.s32.totalorder %s10, 0
    %p89 = por %p87, %p88
    %p90 = scmp.ne.s32.totalorder %s82, %s84
    %p91 = scmp.eq.s32.totalorder %s15, 1
    %p92 = por %p90, %p91
    %p93 = scmp.ne.s32.totalorder %s84, %s85
    %p94 = scmp.eq.s32.totalorder %s15, 0
    %p95 = por %p93, %p94
    %p96 = scmp.ne.s32.totalorder %s84, %s85
    %p97 = scmp.eq.s32.totalorder %s16, 1
    %p98 = por %p96, %p97
    %p100 = scmp.ne.s32.totalorder %s85, %s99
    %p101 = scmp.eq.s32.totalorder %s16, 0
    %p102 = por %p100, %p101
    %s104 = sadd.s32 %s103, 1
    %p107 = scmp.eq.s32.totalorder %s10, 1
    %p108 = scmp.ne.s32.totalorder %s103, %s105
    %p109 = scmp.eq.s32.totalorder %s10, 0
    %p110 = por %p108, %p109
    %p111 = scmp.ne.s32.totalorder %s103, %s105
    %p112 = scmp.eq.s32.totalorder %s15, 1
    %p113 = por %p111, %p112
    %p114 = scmp.ne.s32.totalorder %s105, %s106
    %p115 = scmp.eq.s32.totalorder %s15, 0
    %p116 = por %p114, %p115
    %p117 = scmp.ne.s32.totalorder %s105, %s106
    %p118 = scmp.eq.s32.totalorder %s16, 1
    %p119 = por %p117, %p118
    %p121 = scmp.ne.s32.totalorder %s106, %s120
    %p122 = scmp.eq.s32.totalorder %s16, 0
    %p123 = por %p121, %p122
    %s124 = ssub.s32 %s17, %s29
    %s125 = ssub.s32 %s18, %s25
    %s126 = sor.u32 %s124, %s125
    %p127 = scmp.eq.s32.totalorder %s126, 0
    %s129 = sadd.s32 %s128, 1
    %s130 = scalar_select %p127, %s128, %s129
    %p133 = pneg %p127
    %p134 = scmp.eq.s32.totalorder %s10, 1
    %p135 = por %p133, %p134
    %p136 = scmp.ne.s32.totalorder %s128, %s131
    %p137 = scmp.eq.s32.totalorder %s10, 0
    %p138 = por %p136, %p137
    %p139 = scmp.ne.s32.totalorder %s128, %s131
    %p140 = scmp.eq.s32.totalorder %s15, 1
    %p141 = por %p139, %p140
    %p142 = scmp.ne.s32.totalorder %s131, %s132
    %p143 = scmp.eq.s32.totalorder %s15, 0
    %p144 = por %p142, %p143
    %p145 = scmp.ne.s32.totalorder %s131, %s132
    %p146 = scmp.eq.s32.totalorder %s16, 1
    %p147 = por %p145, %p146
    %p149 = scmp.ne.s32.totalorder %s132, %s148
    %p150 = scmp.eq.s32.totalorder %s16, 0
    %p151 = por %p149, %p150
    %p152 = scmp.le.s32.totalorder 1, %s10
    %p153 = scmp.lt.s32.totalorder %s10, 3
    %p154 = pnand %p152, %p153
    %p155 = pneg %p154
    // Predicated region
    $region9: #{network_block_forward.6} parent=5 // pred_check
      _
    $region10: #{network_block_forward.6} parent=5 // pred_check_branch
      %157 = sbr.rel (%p154) target = $region12
    $region11: #{network_block_forward.6} parent=5 // pred_region
      %s158 = ssub.s32 %s10, 1
      // Predicated region
      $region13: #{network_block_forward.6} parent=11 // pred_check
        %p159 = pneg %p74
      $region14: #{network_block_forward.6} parent=11 // pred_check_branch
        %161 = sbr.rel (%p159) target = $region16
      $region15: #{network_block_forward.6} parent=11 // pred_region
        %p162 = scmp.lt.s32.totalorder %s20, 0
        %s163 = scalar_select %p162, %s20, 0
        %s164 = smul.addr %s163, 2
        %s165 = scalar_lea.vmem %s1, %s164
      $region16: #{network_block_forward.6} parent=11 // pred_fallthru
        _
      // Predicated region
      $region17: #{network_block_forward.6} parent=11 // pred_check
        %p166 = pneg %p95
      $region18: #{network_block_forward.6} parent=11 // pred_check_branch
        %168 = sbr.rel (%p166) target = $region20
      $region19: #{network_block_forward.6} parent=11 // pred_region
        _
      $region20: #{network_block_forward.6} parent=11 // pred_fallthru
        _
      // Predicated region
      $region21: #{network_block_forward.6} parent=11 // pred_check
        %p169 = pneg %p116
      $region22: #{network_block_forward.6} parent=11 // pred_check_branch
        %171 = sbr.rel (%p169) target = $region24
      $region23: #{network_block_forward.6} parent=11 // pred_region
        _
      $region24: #{network_block_forward.6} parent=11 // pred_fallthru
        _
    $region12: #{network_block_forward.6} parent=5 // pred_fallthru
      _
    %p172 = scmp.lt.s32.totalorder %s10, 2
    // Predicated region
    $region25: #{network_block_forward.6} parent=5 // pred_check
      %p173 = pneg %p172
    $region26: #{network_block_forward.6} parent=5 // pred_check_branch
      %175 = sbr.rel (%p173) target = $region28
    $region27: #{network_block_forward.6} parent=5 // pred_region
      // Predicated region
      $region29: #{network_block_forward.6} parent=27 // pred_check
        %p176 = pneg %p42
      $region30: #{network_block_forward.6} parent=27 // pred_check_branch
        %178 = sbr.rel (%p176) target = $region32
      $region31: #{network_block_forward.6} parent=27 // pred_region
        %p179 = scmp.lt.s32.totalorder %s17, 1
        %s180 = scalar_select %p179, %s17, 1
        %s181 = smul.addr %s180, 18
        %s182 = smul.addr %s181, 8
        %s183 = scalar_lea.vmem %s0, %s182
      $region32: #{network_block_forward.6} parent=27 // pred_fallthru
        _
    $region28: #{network_block_forward.6} parent=5 // pred_fallthru
      _
    %p184 = scmp.le.s32.totalorder 1, %s10
    %p185 = scmp.lt.s32.totalorder %s10, 3
    %p186 = pnand %p184, %p185
    %p187 = pneg %p186
    // Predicated region
    $region33: #{network_block_forward.6} parent=5 // pred_check
      _
    $region34: #{network_block_forward.6} parent=5 // pred_check_branch
      %189 = sbr.rel (%p186) target = $region36
    $region35: #{network_block_forward.6} parent=5 // pred_region
      %s190 = ssub.s32 %s10, 1
      %p191 = scmp.lt.s32.totalorder %s19, 1
      %s192 = scalar_select %p191, %s19, 1
      %s193 = smul.addr %s192, 18
      %s194 = smul.addr %s193, 8
      %s195 = scalar_lea.vmem %s0, %s194
      %p196 = pneg %p48
      %p197 = pneg %p45
      %p198 = scmp.lt.s32.totalorder %s20, 0
      %s199 = scalar_select %p198, %s20, 0
      %s200 = smul.addr %s199, 2
      %s201 = scalar_lea.vmem %s1, %s200
      %p202 = pneg %p74
      %p203 = pneg %p71
      %p204 = pneg %p95
      %p205 = pneg %p92
      %p206 = pneg %p116
      %p207 = pneg %p113
      %p208 = pneg %p144
      %p209 = pneg %p141
      %p210 = scmp.lt.s32.totalorder %s19, 1
      %s211 = scalar_select %p210, %s19, 1
      %p212 = scmp.lt.s32.totalorder %s20, 0
      %s213 = scalar_select %p212, %s20, 0
      %s214 = smul.addr %s211, 8
      %s215 = sadd.s32 %s213, %s214
      %s216 = smul.addr %s215, 8
      %s217 = scalar_lea.vmem %s4, %s216
      %p218 = scmp.lt.s32.totalorder %s19, 1
      %s219 = scalar_select %p218, %s19, 1
      %s220 = smul.addr %s219, 18
      %s221 = smul.addr %s220, 8
      %s222 = scalar_lea.vmem %s0, %s221
      %p223 = scmp.lt.s32.totalorder %s20, 0
      %s224 = scalar_select %p223, %s20, 0
      %s225 = smul.addr %s224, 2
      %s226 = scalar_lea.vmem %s1, %s225
      %p227 = scmp.lt.s32.totalorder %s19, 1
      %s228 = scalar_select %p227, %s19, 1
      %p229 = scmp.lt.s32.totalorder %s20, 0
      %s230 = scalar_select %p229, %s20, 0
      %s231 = smul.addr %s228, 8
      %s232 = sadd.s32 %s230, %s231
      %s233 = smul.addr %s232, 8
      %s234 = scalar_lea.vmem %s4, %s233
      %v236 = vld [vmem:[%s2] sm:$0x1]
      %v237 = vld [vmem:[%s3] sm:$0x1]
      %v238 = vld [vmem:[%s222] sm:$0xff]
      %v239 = vld [vmem:[%s222 + $0x10] sm:$0xff]
      %v240 = vld [vmem:[%s222 + $0x20] sm:$0xff]
      %v241 = vld [vmem:[%s222 + $0x30] sm:$0xff]
      %v242 = vld [vmem:[%s222 + $0x40] sm:$0xff]
      %v243 = vld [vmem:[%s222 + $0x50] sm:$0xff]
      %v244 = vld [vmem:[%s222 + $0x60] sm:$0xff]
      %v245 = vld [vmem:[%s222 + $0x70] sm:$0xff]
      %v247 = vlaneseq
      %v248 = vshrl.u32 %v247, 7
      %v249 = vsub.s32 0, %v248
      %v250 = vrot.slane %v236, %v249
      %v252 = vmul.f32 %v238, %v250
      %v253 = vmul.f32 %v239, %v250
      %v254 = vmul.f32 %v240, %v250
      %v255 = vmul.f32 %v241, %v250
      %v256 = vmul.f32 %v242, %v250
      %v257 = vmul.f32 %v243, %v250
      %v258 = vmul.f32 %v244, %v250
      %v259 = vmul.f32 %v245, %v250
      %v261 = vlaneseq
      %v262 = vshrl.u32 %v261, 7
      %v263 = vsub.s32 0, %v262
      %v264 = vrot.slane %v237, %v263
      %v266 = vadd.f32 %v252, %v264
      %v267 = vadd.f32 %v253, %v264
      %v268 = vadd.f32 %v254, %v264
      %v269 = vadd.f32 %v255, %v264
      %v270 = vadd.f32 %v256, %v264
      %v271 = vadd.f32 %v257, %v264
      %v272 = vadd.f32 %v258, %v264
      %v273 = vadd.f32 %v259, %v264
      %v274 = vmax.f32 %v266, 0.0
      %v275 = vmax.f32 %v267, 0.0
      %v276 = vmax.f32 %v268, 0.0
      %v277 = vmax.f32 %v269, 0.0
      %v278 = vmax.f32 %v270, 0.0
      %v279 = vmax.f32 %v271, 0.0
      %v280 = vmax.f32 %v272, 0.0
      %v281 = vmax.f32 %v273, 0.0
      %v282 = vpack.c.bf16 %v275, %v274
      %v283 = vpack.c.bf16 %v277, %v276
      %v284 = vpack.c.bf16 %v279, %v278
      %v285 = vpack.c.bf16 %v281, %v280
      %v286 = vld [vmem:[%s226] sm:$0x3]
      %vm287 = vcmask 31744
      %v289 = vsel %vm287, %v282, 0
      %v292 = vsel %vm287, %v283, 0
      %v295 = vsel %vm287, %v284, 0
      %v298 = vsel %vm287, %v285, 0
      %vm300 = vcmask 1041408
      %v302 = vsel %vm300, %v286, 0
      %304 = vmatprep.subr.bf16.mxu0 0
      %305 = vmatpush1.bf16.msra.mxu0 %v302
      %306 = vmatprep.subr.bf16.mxu0 0
      %307 = vmatpush1.bf16.msra.mxu0 0
      %308 = vmatprep.subr.bf16.mxu0 0
      %309 = vmatpush1.bf16.msra.mxu0 0
      %310 = vmatprep.subr.bf16.mxu0 0
      %311 = vmatpush1.bf16.msra.mxu0 0
      %312 = vmatprep.subr.bf16.mxu0 0
      %313 = vmatpush1.bf16.msra.mxu0 0
      %314 = vmatprep.subr.bf16.mxu0 0
      %315 = vmatpush1.bf16.msra.mxu0 0
      %316 = vmatprep.subr.bf16.mxu0 0
      %317 = vmatpush1.bf16.msra.mxu0 0
      %318 = vmatprep.subr.bf16.mxu0 0
      %319 = vmatpush1.bf16.msra.mxu0 0
      %320 = vmatprep.subr.bf16.mxu0 0
      %321 = vmatpush1.bf16.msra.mxu0 0
      %322 = vmatprep.subr.bf16.mxu0 0
      %323 = vmatpush1.bf16.msra.mxu0 0
      %324 = vmatprep.subr.bf16.mxu0 0
      %325 = vmatpush1.bf16.msra.mxu0 0
      %326 = vmatprep.subr.bf16.mxu0 0
      %327 = vmatpush1.bf16.msra.mxu0 0
      %328 = vmatprep.subr.bf16.mxu0 0
      %329 = vmatpush1.bf16.msra.mxu0 0
      %330 = vmatprep.subr.bf16.mxu0 0
      %331 = vmatpush1.bf16.msra.mxu0 0
      %332 = vmatprep.subr.bf16.mxu0 0
      %333 = vmatpush1.bf16.msra.mxu0 0
      %334 = vmatprep.subr.bf16.mxu0 0
      %335 = vmatpush1.bf16.msra.mxu0 0
      %336 = vmatprep.mubr.bf16.mxu0 0
      %337 = vmatmul.mubr.bf16.gmra.mrb[0].mxu0 %v289
      %v338 = vpop.f32.mrb[0].mxu0
      %v339 = vadd.f32 0.0, %v338
      %v340 = vpop.f32.mrb[0].mxu0
      %v341 = vpop.f32.mrb[0].mxu0
      %v342 = vadd.f32 0.0, %v341
      %v343 = vpop.f32.mrb[0].mxu0
      %344 = vmatprep.mubr.bf16.mxu0 0
      %345 = vmatmul.mubr.bf16.gmra.mrb[0].mxu0 %v292
      %v346 = vpop.f32.mrb[0].mxu0
      %v347 = vadd.f32 0.0, %v346
      %v348 = vpop.f32.mrb[0].mxu0
      %v349 = vpop.f32.mrb[0].mxu0
      %v350 = vadd.f32 0.0, %v349
      %v351 = vpop.f32.mrb[0].mxu0
      %352 = vmatprep.mubr.bf16.mxu0 0
      %353 = vmatmul.mubr.bf16.gmra.mrb[0].mxu0 %v295
      %v354 = vpop.f32.mrb[0].mxu0
      %v355 = vadd.f32 0.0, %v354
      %v356 = vpop.f32.mrb[0].mxu0
      %v357 = vpop.f32.mrb[0].mxu0
      %v358 = vadd.f32 0.0, %v357
      %v359 = vpop.f32.mrb[0].mxu0
      %360 = vmatprep.mubr.bf16.mxu0 0
      %361 = vmatmul.mubr.bf16.gmra.mrb[0].mxu0 %v298
      %v362 = vpop.f32.mrb[0].mxu0
      %v363 = vadd.f32 0.0, %v362
      %v364 = vpop.f32.mrb[0].mxu0
      %v365 = vpop.f32.mrb[0].mxu0
      %v366 = vadd.f32 0.0, %v365
      %v367 = vpop.f32.mrb[0].mxu0
      %368 = vdwg.mxu0
      %vm369 = vcmask 64512
      %370 = vst.msk [vmem:[%s234] sm:$0xff] %vm369, %v339
      %371 = vst.msk [vmem:[%s234 + $0x8] sm:$0xff] %vm369, %v342
      %372 = vst.msk [vmem:[%s234 + $0x10] sm:$0xff] %vm369, %v347
      %373 = vst.msk [vmem:[%s234 + $0x18] sm:$0xff] %vm369, %v350
      %374 = vst.msk [vmem:[%s234 + $0x20] sm:$0xff] %vm369, %v355
      %375 = vst.msk [vmem:[%s234 + $0x28] sm:$0xff] %vm369, %v358
      %376 = vst.msk [vmem:[%s234 + $0x30] sm:$0xff] %vm369, %v363
      %377 = vst.msk [vmem:[%s234 + $0x38] sm:$0xff] %vm369, %v366
      %p378 = scmp.lt.s32.totalorder %s19, 1
      %s379 = scalar_select %p378, %s19, 1
      %p380 = scmp.lt.s32.totalorder %s20, 0
      %s381 = scalar_select %p380, %s20, 0
      %s382 = smul.addr %s379, 8
      %s383 = sadd.s32 %s381, %s382
      %s384 = smul.addr %s383, 8
      %s385 = scalar_lea.vmem %s4, %s384
      // Predicated region
      $region37: #{network_block_forward.6} parent=35 // pred_check
        %p386 = pneg %p141
      $region38: #{network_block_forward.6} parent=35 // pred_check_branch
        %388 = sbr.rel (%p386) target = $region40
      $region39: #{network_block_forward.6} parent=35 // pred_region
        _
      $region40: #{network_block_forward.6} parent=35 // pred_fallthru
        _
    $region36: #{network_block_forward.6} parent=5 // pred_fallthru
      _
    %p389 = scmp.le.s32.totalorder 2, %s10
    // Predicated region
    $region41: #{network_block_forward.6} parent=5 // pred_check
      %p390 = pneg %p389
    $region42: #{network_block_forward.6} parent=5 // pred_check_branch
      %392 = sbr.rel (%p390) target = $region44
    $region43: #{network_block_forward.6} parent=5 // pred_region
      %s393 = ssub.s32 %s10, 2
      // Predicated region
      $region45: #{network_block_forward.6} parent=43 // pred_check
        %p394 = pneg %p147
      $region46: #{network_block_forward.6} parent=43 // pred_check_branch
        %396 = sbr.rel (%p394) target = $region48
      $region47: #{network_block_forward.6} parent=43 // pred_region
        %p397 = scmp.lt.s32.totalorder %s21, 1
        %s398 = scalar_select %p397, %s21, 1
        %p399 = scmp.lt.s32.totalorder %s22, 0
        %s400 = scalar_select %p399, %s22, 0
        %s401 = smul.addr %s398, 8
        %s402 = sadd.s32 %s400, %s401
        %s403 = smul.addr %s402, 8
        %s404 = scalar_lea.vmem %s4, %s403
      $region48: #{network_block_forward.6} parent=43 // pred_fallthru
        _
    $region44: #{network_block_forward.6} parent=5 // pred_fallthru
      _
  $region6: #{network_block_forward.6} parent=0 // loop_footer
    %s14 = sadd.s32 1, %s10
  $region7: #{network_block_forward.6} parent=0 // loop_footer_branch
    %9 = sbr.rel target = $region3
  $region8: #{network_block_forward.6} parent=0 // loop_exit
    _

// kernel: network_block_forward.5
$region0: #{network_block_forward.5}
  #allocation0 [shape = 'u32[]', space=smem, size = 0x4, offset = 0x4, fixed_abs, tag = 'smem constant byte address 0x4 - core index']
  #allocation1 [shape = 'u32[144,128]{1,0:T(1,128)}', space=vmem, size = 0x12000, scoped, tag = 'internal scratch']
  %s0 = inlined_call_operand.vmem [shape: f32[2,9,9,4], index: 0, kind: input, shape index: {}]
  %s1 = inlined_call_operand.vmem [shape: f32[2,9,9,4], index: 1, kind: input, shape index: {}]
  %s2 = inlined_call_operand.vmem [shape: f32[2,9,9,4], index: 2, kind: input, shape index: {}]
  %s3 = inlined_call_operand.vmem [shape: f32[2,9,9,4], index: 3, kind: input, shape index: {}]
  %s4 = inlined_call_operand.vmem [shape: bf16[9,4,8], index: 4, kind: input, shape index: {}]
  %s5 = inlined_call_operand.vmem [shape: f32[1,4], index: 5, kind: input, shape index: {}]
  %s6 = inlined_call_operand.vmem [shape: f32[1,4], index: 6, kind: input, shape index: {}]
  %s7 = inlined_call_operand.vmem [shape: f32[2,64,8], index: 7, kind: output, shape index: {}]
  %s8 = sld [smem:[#allocation0]]
  $region61: #{network_block_forward.5} parent=0
    _
  %s10 = ssub.s32 1, %s8
  %s11 = scalar_select 0, %s10, %s8
  loop: start=0, step=1, limit=4
  $region2: #{network_block_forward.5} parent=0 // loop_pre_header
    _
  $region3: #{network_block_forward.5} parent=0 // loop_header
    %s13 = sphi 0, %s17
    %p14 = scmp.ge.s32.totalorder %s13, 4
    %s20 = sphi 0, %s32
    %s21 = sphi 0, %s28
    %s22 = sphi 0, %s20
    %s23 = sphi 0, %s21
    %s24 = sphi 0, %s22
    %s25 = sphi 0, %s23
    %s35 = sphi 0, %s37
    %s38 = sphi 0, %s35
    %s39 = sphi 0, %s38
    %s55 = sphi 0, %s39
    %s61 = sphi 0, %s63
    %s64 = sphi 0, %s61
    %s65 = sphi 0, %s64
    %s81 = sphi 0, %s65
    %s87 = sphi 0, %s89
    %s90 = sphi 0, %s87
    %s91 = sphi 0, %s90
    %s107 = sphi 0, %s91
    %s113 = sphi 0, %s115
    %s116 = sphi 0, %s113
    %s117 = sphi 0, %s116
    %s133 = sphi 0, %s117
    %s139 = sphi 0, %s141
    %s142 = sphi 0, %s139
    %s143 = sphi 0, %s142
    %s159 = sphi 0, %s143
    %s163 = sphi 0, %s163
    %s165 = sphi 0, %s163
    %s166 = sphi 0, %s165
    %s180 = sphi 0, %s166
    %s184 = sphi 0, %s184
    %s186 = sphi 0, %s184
    %s187 = sphi 0, %s186
    %s201 = sphi 0, %s187
    %s209 = sphi 0, %s211
    %s212 = sphi 0, %s209
    %s213 = sphi 0, %s212
    %s229 = sphi 0, %s213
  $region4: #{network_block_forward.5} parent=0 // loop_header_branch
    %16 = sbr.rel (%p14) target = $region8
  $region5: #{network_block_forward.5} parent=0 // loop_body
    %s18 = ssub.s32 %s13, 1
    %s19 = ssub.s32 %s13, 2
    %s26 = sadd.s32 1, %s21
    %p27 = scmp.ge.s32.totalorder %s26, 1
    %s28 = scalar_select %p27, 0, %s26
    %s29 = sadd.s32 1, %s20
    %s30 = scalar_select %p27, %s29, %s20
    %p31 = scmp.ge.s32.totalorder %s30, 2
    %s32 = scalar_select %p31, 0, %s30
    %s33 = ssub.s32 %s20, %s32
    %p34 = scmp.eq.s32.totalorder %s33, 0
    %s36 = sadd.s32 %s35, 1
    %s37 = scalar_select %p34, %s35, %s36
    %p40 = pneg %p34
    %p41 = scmp.eq.s32.totalorder %s13, 1
    %p42 = por %p40, %p41
    %p43 = scmp.ne.s32.totalorder %s35, %s38
    %p44 = scmp.eq.s32.totalorder %s13, 0
    %p45 = por %p43, %p44
    %p46 = scmp.ne.s32.totalorder %s35, %s38
    %p47 = scmp.eq.s32.totalorder %s18, 1
    %p48 = por %p46, %p47
    %p49 = scmp.ne.s32.totalorder %s38, %s39
    %p50 = scmp.eq.s32.totalorder %s18, 0
    %p51 = por %p49, %p50
    %p52 = scmp.ne.s32.totalorder %s38, %s39
    %p53 = scmp.eq.s32.totalorder %s19, 1
    %p54 = por %p52, %p53
    %p56 = scmp.ne.s32.totalorder %s39, %s55
    %p57 = scmp.eq.s32.totalorder %s19, 0
    %p58 = por %p56, %p57
    %s59 = ssub.s32 %s20, %s32
    %p60 = scmp.eq.s32.totalorder %s59, 0
    %s62 = sadd.s32 %s61, 1
    %s63 = scalar_select %p60, %s61, %s62
    %p66 = pneg %p60
    %p67 = scmp.eq.s32.totalorder %s13, 1
    %p68 = por %p66, %p67
    %p69 = scmp.ne.s32.totalorder %s61, %s64
    %p70 = scmp.eq.s32.totalorder %s13, 0
    %p71 = por %p69, %p70
    %p72 = scmp.ne.s32.totalorder %s61, %s64
    %p73 = scmp.eq.s32.totalorder %s18, 1
    %p74 = por %p72, %p73
    %p75 = scmp.ne.s32.totalorder %s64, %s65
    %p76 = scmp.eq.s32.totalorder %s18, 0
    %p77 = por %p75, %p76
    %p78 = scmp.ne.s32.totalorder %s64, %s65
    %p79 = scmp.eq.s32.totalorder %s19, 1
    %p80 = por %p78, %p79
    %p82 = scmp.ne.s32.totalorder %s65, %s81
    %p83 = scmp.eq.s32.totalorder %s19, 0
    %p84 = por %p82, %p83
    %s85 = ssub.s32 %s20, %s32
    %p86 = scmp.eq.s32.totalorder %s85, 0
    %s88 = sadd.s32 %s87, 1
    %s89 = scalar_select %p86, %s87, %s88
    %p92 = pneg %p86
    %p93 = scmp.eq.s32.totalorder %s13, 1
    %p94 = por %p92, %p93
    %p95 = scmp.ne.s32.totalorder %s87, %s90
    %p96 = scmp.eq.s32.totalorder %s13, 0
    %p97 = por %p95, %p96
    %p98 = scmp.ne.s32.totalorder %s87, %s90
    %p99 = scmp.eq.s32.totalorder %s18, 1
    %p100 = por %p98, %p99
    %p101 = scmp.ne.s32.totalorder %s90, %s91
    %p102 = scmp.eq.s32.totalorder %s18, 0
    %p103 = por %p101, %p102
    %p104 = scmp.ne.s32.totalorder %s90, %s91
    %p105 = scmp.eq.s32.totalorder %s19, 1
    %p106 = por %p104, %p105
    %p108 = scmp.ne.s32.totalorder %s91, %s107
    %p109 = scmp.eq.s32.totalorder %s19, 0
    %p110 = por %p108, %p109
    %s111 = ssub.s32 %s20, %s32
    %p112 = scmp.eq.s32.totalorder %s111, 0
    %s114 = sadd.s32 %s113, 1
    %s115 = scalar_select %p112, %s113, %s114
    %p118 = pneg %p112
    %p119 = scmp.eq.s32.totalorder %s13, 1
    %p120 = por %p118, %p119
    %p121 = scmp.ne.s32.totalorder %s113, %s116
    %p122 = scmp.eq.s32.totalorder %s13, 0
    %p123 = por %p121, %p122
    %p124 = scmp.ne.s32.totalorder %s113, %s116
    %p125 = scmp.eq.s32.totalorder %s18, 1
    %p126 = por %p124, %p125
    %p127 = scmp.ne.s32.totalorder %s116, %s117
    %p128 = scmp.eq.s32.totalorder %s18, 0
    %p129 = por %p127, %p128
    %p130 = scmp.ne.s32.totalorder %s116, %s117
    %p131 = scmp.eq.s32.totalorder %s19, 1
    %p132 = por %p130, %p131
    %p134 = scmp.ne.s32.totalorder %s117, %s133
    %p135 = scmp.eq.s32.totalorder %s19, 0
    %p136 = por %p134, %p135
    %s137 = ssub.s32 %s21, %s28
    %p138 = scmp.eq.s32.totalorder %s137, 0
    %s140 = sadd.s32 %s139, 1
    %s141 = scalar_select %p138, %s139, %s140
    %p144 = pneg %p138
    %p145 = scmp.eq.s32.totalorder %s13, 1
    %p146 = por %p144, %p145
    %p147 = scmp.ne.s32.totalorder %s139, %s142
    %p148 = scmp.eq.s32.totalorder %s13, 0
    %p149 = por %p147, %p148
    %p150 = scmp.ne.s32.totalorder %s139, %s142
    %p151 = scmp.eq.s32.totalorder %s18, 1
    %p152 = por %p150, %p151
    %p153 = scmp.ne.s32.totalorder %s142, %s143
    %p154 = scmp.eq.s32.totalorder %s18, 0
    %p155 = por %p153, %p154
    %p156 = scmp.ne.s32.totalorder %s142, %s143
    %p157 = scmp.eq.s32.totalorder %s19, 1
    %p158 = por %p156, %p157
    %p160 = scmp.ne.s32.totalorder %s143, %s159
    %p161 = scmp.eq.s32.totalorder %s19, 0
    %p162 = por %p160, %p161
    %s164 = sadd.s32 %s163, 1
    %p167 = scmp.eq.s32.totalorder %s13, 1
    %p168 = scmp.ne.s32.totalorder %s163, %s165
    %p169 = scmp.eq.s32.totalorder %s13, 0
    %p170 = por %p168, %p169
    %p171 = scmp.ne.s32.totalorder %s163, %s165
    %p172 = scmp.eq.s32.totalorder %s18, 1
    %p173 = por %p171, %p172
    %p174 = scmp.ne.s32.totalorder %s165, %s166
    %p175 = scmp.eq.s32.totalorder %s18, 0
    %p176 = por %p174, %p175
    %p177 = scmp.ne.s32.totalorder %s165, %s166
    %p178 = scmp.eq.s32.totalorder %s19, 1
    %p179 = por %p177, %p178
    %p181 = scmp.ne.s32.totalorder %s166, %s180
    %p182 = scmp.eq.s32.totalorder %s19, 0
    %p183 = por %p181, %p182
    %s185 = sadd.s32 %s184, 1
    %p188 = scmp.eq.s32.totalorder %s13, 1
    %p189 = scmp.ne.s32.totalorder %s184, %s186
    %p190 = scmp.eq.s32.totalorder %s13, 0
    %p191 = por %p189, %p190
    %p192 = scmp.ne.s32.totalorder %s184, %s186
    %p193 = scmp.eq.s32.totalorder %s18, 1
    %p194 = por %p192, %p193
    %p195 = scmp.ne.s32.totalorder %s186, %s187
    %p196 = scmp.eq.s32.totalorder %s18, 0
    %p197 = por %p195, %p196
    %p198 = scmp.ne.s32.totalorder %s186, %s187
    %p199 = scmp.eq.s32.totalorder %s19, 1
    %p200 = por %p198, %p199
    %p202 = scmp.ne.s32.totalorder %s187, %s201
    %p203 = scmp.eq.s32.totalorder %s19, 0
    %p204 = por %p202, %p203
    %s205 = ssub.s32 %s20, %s32
    %s206 = ssub.s32 %s21, %s28
    %s207 = sor.u32 %s205, %s206
    %p208 = scmp.eq.s32.totalorder %s207, 0
    %s210 = sadd.s32 %s209, 1
    %s211 = scalar_select %p208, %s209, %s210
    %p214 = pneg %p208
    %p215 = scmp.eq.s32.totalorder %s13, 1
    %p216 = por %p214, %p215
    %p217 = scmp.ne.s32.totalorder %s209, %s212
    %p218 = scmp.eq.s32.totalorder %s13, 0
    %p219 = por %p217, %p218
    %p220 = scmp.ne.s32.totalorder %s209, %s212
    %p221 = scmp.eq.s32.totalorder %s18, 1
    %p222 = por %p220, %p221
    %p223 = scmp.ne.s32.totalorder %s212, %s213
    %p224 = scmp.eq.s32.totalorder %s18, 0
    %p225 = por %p223, %p224
    %p226 = scmp.ne.s32.totalorder %s212, %s213
    %p227 = scmp.eq.s32.totalorder %s19, 1
    %p228 = por %p226, %p227
    %p230 = scmp.ne.s32.totalorder %s213, %s229
    %p231 = scmp.eq.s32.totalorder %s19, 0
    %p232 = por %p230, %p231
    %p233 = scmp.le.s32.totalorder 1, %s13
    %p234 = scmp.lt.s32.totalorder %s13, 3
    %p235 = pnand %p233, %p234
    %p236 = pneg %p235
    // Predicated region
    $region9: #{network_block_forward.5} parent=5 // pred_check
      _
    $region10: #{network_block_forward.5} parent=5 // pred_check_branch
      %238 = sbr.rel (%p235) target = $region12
    $region11: #{network_block_forward.5} parent=5 // pred_region
      %s239 = ssub.s32 %s13, 1
      // Predicated region
      $region13: #{network_block_forward.5} parent=11 // pred_check
        %p240 = pneg %p155
      $region14: #{network_block_forward.5} parent=11 // pred_check_branch
        %242 = sbr.rel (%p240) target = $region16
      $region15: #{network_block_forward.5} parent=11 // pred_region
        %p243 = scmp.lt.s32.totalorder %s23, 0
        %s244 = scalar_select %p243, %s23, 0
        %s245 = smul.addr %s244, 2
        %s246 = scalar_lea.vmem %s4, %s245
      $region16: #{network_block_forward.5} parent=11 // pred_fallthru
        _
      // Predicated region
      $region17: #{network_block_forward.5} parent=11 // pred_check
        %p247 = pneg %p176
      $region18: #{network_block_forward.5} parent=11 // pred_check_branch
        %249 = sbr.rel (%p247) target = $region20
      $region19: #{network_block_forward.5} parent=11 // pred_region
        _
      $region20: #{network_block_forward.5} parent=11 // pred_fallthru
        _
      // Predicated region
      $region21: #{network_block_forward.5} parent=11 // pred_check
        %p250 = pneg %p197
      $region22: #{network_block_forward.5} parent=11 // pred_check_branch
        %252 = sbr.rel (%p250) target = $region24
      $region23: #{network_block_forward.5} parent=11 // pred_region
        _
      $region24: #{network_block_forward.5} parent=11 // pred_fallthru
        _
    $region12: #{network_block_forward.5} parent=5 // pred_fallthru
      _
    %p253 = scmp.lt.s32.totalorder %s13, 2
    // Predicated region
    $region25: #{network_block_forward.5} parent=5 // pred_check
      %p254 = pneg %p253
    $region26: #{network_block_forward.5} parent=5 // pred_check_branch
      %256 = sbr.rel (%p254) target = $region28
    $region27: #{network_block_forward.5} parent=5 // pred_region
      // Predicated region
      $region29: #{network_block_forward.5} parent=27 // pred_check
        %p257 = pneg %p45
      $region30: #{network_block_forward.5} parent=27 // pred_check_branch
        %259 = sbr.rel (%p257) target = $region32
      $region31: #{network_block_forward.5} parent=27 // pred_region
        %p260 = scmp.lt.s32.totalorder %s20, 1
        %s261 = scalar_select %p260, %s20, 1
        %s262 = smul.addr %s261, 18
        %s263 = smul.addr %s262, 8
        %s264 = scalar_lea.vmem %s0, %s263
      $region32: #{network_block_forward.5} parent=27 // pred_fallthru
        _
      // Predicated region
      $region33: #{network_block_forward.5} parent=27 // pred_check
        %p265 = pneg %p71
      $region34: #{network_block_forward.5} parent=27 // pred_check_branch
        %267 = sbr.rel (%p265) target = $region36
      $region35: #{network_block_forward.5} parent=27 // pred_region
        %p268 = scmp.lt.s32.totalorder %s20, 1
        %s269 = scalar_select %p268, %s20, 1
        %s270 = smul.addr %s269, 18
        %s271 = smul.addr %s270, 8
        %s272 = scalar_lea.vmem %s1, %s271
      $region36: #{network_block_forward.5} parent=27 // pred_fallthru
        _
      // Predicated region
      $region37: #{network_block_forward.5} parent=27 // pred_check
        %p273 = pneg %p97
      $region38: #{network_block_forward.5} parent=27 // pred_check_branch
        %275 = sbr.rel (%p273) target = $region40
      $region39: #{network_block_forward.5} parent=27 // pred_region
        %p276 = scmp.lt.s32.totalorder %s20, 1
        %s277 = scalar_select %p276, %s20, 1
        %s278 = smul.addr %s277, 18
        %s279 = smul.addr %s278, 8
        %s280 = scalar_lea.vmem %s2, %s279
      $region40: #{network_block_forward.5} parent=27 // pred_fallthru
        _
      // Predicated region
      $region41: #{network_block_forward.5} parent=27 // pred_check
        %p281 = pneg %p123
      $region42: #{network_block_forward.5} parent=27 // pred_check_branch
        %283 = sbr.rel (%p281) target = $region44
      $region43: #{network_block_forward.5} parent=27 // pred_region
        %p284 = scmp.lt.s32.totalorder %s20, 1
        %s285 = scalar_select %p284, %s20, 1
        %s286 = smul.addr %s285, 18
        %s287 = smul.addr %s286, 8
        %s288 = scalar_lea.vmem %s3, %s287
      $region44: #{network_block_forward.5} parent=27 // pred_fallthru
        _
    $region28: #{network_block_forward.5} parent=5 // pred_fallthru
      _
    %p289 = scmp.le.s32.totalorder 1, %s13
    %p290 = scmp.lt.s32.totalorder %s13, 3
    %p291 = pnand %p289, %p290
    %p292 = pneg %p291
    // Predicated region
    $region45: #{network_block_forward.5} parent=5 // pred_check
      _
    $region46: #{network_block_forward.5} parent=5 // pred_check_branch
      %294 = sbr.rel (%p291) target = $region48
    $region47: #{network_block_forward.5} parent=5 // pred_region
      %s295 = ssub.s32 %s13, 1
      %p296 = scmp.lt.s32.totalorder %s22, 1
      %s297 = scalar_select %p296, %s22, 1
      %s298 = smul.addr %s297, 18
      %s299 = smul.addr %s298, 8
      %s300 = scalar_lea.vmem %s0, %s299
      %p301 = pneg %p51
      %p302 = pneg %p48
      %p303 = scmp.lt.s32.totalorder %s22, 1
      %s304 = scalar_select %p303, %s22, 1
      %s305 = smul.addr %s304, 18
      %s306 = smul.addr %s305, 8
      %s307 = scalar_lea.vmem %s1, %s306
      %p308 = pneg %p77
      %p309 = pneg %p74
      %p310 = scmp.lt.s32.totalorder %s22, 1
      %s311 = scalar_select %p310, %s22, 1
      %s312 = smul.addr %s311, 18
      %s313 = smul.addr %s312, 8
      %s314 = scalar_lea.vmem %s2, %s313
      %p315 = pneg %p103
      %p316 = pneg %p100
      %p317 = scmp.lt.s32.totalorder %s22, 1
      %s318 = scalar_select %p317, %s22, 1
      %s319 = smul.addr %s318, 18
      %s320 = smul.addr %s319, 8
      %s321 = scalar_lea.vmem %s3, %s320
      %p322 = pneg %p129
      %p323 = pneg %p126
      %p324 = scmp.lt.s32.totalorder %s23, 0
      %s325 = scalar_select %p324, %s23, 0
      %s326 = smul.addr %s325, 2
      %s327 = scalar_lea.vmem %s4, %s326
      %p328 = pneg %p155
      %p329 = pneg %p152
      %p330 = pneg %p176
      %p331 = pneg %p173
      %p332 = pneg %p197
      %p333 = pneg %p194
      %p334 = pneg %p225
      %p335 = pneg %p222
      %p336 = scmp.lt.s32.totalorder %s22, 1
      %s337 = scalar_select %p336, %s22, 1
      %p338 = scmp.lt.s32.totalorder %s23, 0
      %s339 = scalar_select %p338, %s23, 0
      %s340 = smul.addr %s337, 8
      %s341 = sadd.s32 %s339, %s340
      %s342 = smul.addr %s341, 8
      %s343 = scalar_lea.vmem %s7, %s342
      %p344 = scmp.lt.s32.totalorder %s22, 1
      %s345 = scalar_select %p344, %s22, 1
      %s346 = smul.addr %s345, 18
      %s347 = smul.addr %s346, 8
      %s348 = scalar_lea.vmem %s0, %s347
      %p349 = scmp.lt.s32.totalorder %s22, 1
      %s350 = scalar_select %p349, %s22, 1
      %s351 = smul.addr %s350, 18
      %s352 = smul.addr %s351, 8
      %s353 = scalar_lea.vmem %s1, %s352
      %p354 = scmp.lt.s32.totalorder %s22, 1
      %s355 = scalar_select %p354, %s22, 1
      %s356 = smul.addr %s355, 18
      %s357 = smul.addr %s356, 8
      %s358 = scalar_lea.vmem %s2, %s357
      %p359 = scmp.lt.s32.totalorder %s22, 1
      %s360 = scalar_select %p359, %s22, 1
      %s361 = smul.addr %s360, 18
      %s362 = smul.addr %s361, 8
      %s363 = scalar_lea.vmem %s3, %s362
      %p364 = scmp.lt.s32.totalorder %s23, 0
      %s365 = scalar_select %p364, %s23, 0
      %s366 = smul.addr %s365, 2
      %s367 = scalar_lea.vmem %s4, %s366
      %p368 = scmp.lt.s32.totalorder %s22, 1
      %s369 = scalar_select %p368, %s22, 1
      %p370 = scmp.lt.s32.totalorder %s23, 0
      %s371 = scalar_select %p370, %s23, 0
      %s372 = smul.addr %s369, 8
      %s373 = sadd.s32 %s371, %s372
      %s374 = smul.addr %s373, 8
      %s375 = scalar_lea.vmem %s7, %s374
      %v377 = vld [vmem:[%s5] sm:$0x1]
      %v378 = vld [vmem:[%s6] sm:$0x1]
      %v379 = vld [vmem:[%s348] sm:$0xff]
      %v380 = vld [vmem:[%s348 + $0x10] sm:$0xff]
      %v381 = vld [vmem:[%s348 + $0x20] sm:$0xff]
      %v382 = vld [vmem:[%s348 + $0x30] sm:$0xff]
      %v383 = vld [vmem:[%s348 + $0x40] sm:$0xff]
      %v384 = vld [vmem:[%s348 + $0x50] sm:$0xff]
      %v385 = vld [vmem:[%s348 + $0x60] sm:$0xff]
      %v386 = vld [vmem:[%s348 + $0x70] sm:$0xff]
      %v388 = vlaneseq
      %v389 = vshrl.u32 %v388, 7
      %v390 = vsub.s32 0, %v389
      %v391 = vrot.slane %v377, %v390
      %v393 = vmul.f32 %v379, %v391
      %v394 = vmul.f32 %v380, %v391
      %v395 = vmul.f32 %v381, %v391
      %v396 = vmul.f32 %v382, %v391
      %v397 = vmul.f32 %v383, %v391
      %v398 = vmul.f32 %v384, %v391
      %v399 = vmul.f32 %v385, %v391
      %v400 = vmul.f32 %v386, %v391
      %v402 = vlaneseq
      %v403 = vshrl.u32 %v402, 7
      %v404 = vsub.s32 0, %v403
      %v405 = vrot.slane %v378, %v404
      %v407 = vadd.f32 %v393, %v405
      %v408 = vadd.f32 %v394, %v405
      %v409 = vadd.f32 %v395, %v405
      %v410 = vadd.f32 %v396, %v405
      %v411 = vadd.f32 %v397, %v405
      %v412 = vadd.f32 %v398, %v405
      %v413 = vadd.f32 %v399, %v405
      %v414 = vadd.f32 %v400, %v405
      %v415 = vmax.f32 %v407, 0.0
      %v416 = vmax.f32 %v408, 0.0
      %v417 = vmax.f32 %v409, 0.0
      %v418 = vmax.f32 %v410, 0.0
      %v419 = vmax.f32 %v411, 0.0
      %v420 = vmax.f32 %v412, 0.0
      %v421 = vmax.f32 %v413, 0.0
      %v422 = vmax.f32 %v414, 0.0
      %v423 = vpack.c.bf16 %v416, %v415
      %v424 = vpack.c.bf16 %v418, %v417
      %v425 = vpack.c.bf16 %v420, %v419
      %v426 = vpack.c.bf16 %v422, %v421
      %v427 = vld [vmem:[%s367] sm:$0x3]
      %v428 = vld [vmem:[%s353] sm:$0xff]
      %v429 = vld [vmem:[%s353 + $0x10] sm:$0xff]
      %v430 = vld [vmem:[%s353 + $0x20] sm:$0xff]
      %v431 = vld [vmem:[%s353 + $0x30] sm:$0xff]
      %v432 = vld [vmem:[%s353 + $0x40] sm:$0xff]
      %v433 = vld [vmem:[%s353 + $0x50] sm:$0xff]
      %v434 = vld [vmem:[%s353 + $0x60] sm:$0xff]
      %v435 = vld [vmem:[%s353 + $0x70] sm:$0xff]
      %v436 = vmul.f32 %v428, %v391
      %v437 = vmul.f32 %v429, %v391
      %v438 = vmul.f32 %v430, %v391
      %v439 = vmul.f32 %v431, %v391
      %v440 = vmul.f32 %v432, %v391
      %v441 = vmul.f32 %v433, %v391
      %v442 = vmul.f32 %v434, %v391
      %v443 = vmul.f32 %v435, %v391
      %v444 = vadd.f32 %v436, %v405
      %v445 = vadd.f32 %v437, %v405
      %v446 = vadd.f32 %v438, %v405
      %v447 = vadd.f32 %v439, %v405
      %v448 = vadd.f32 %v440, %v405
      %v449 = vadd.f32 %v441, %v405
      %v450 = vadd.f32 %v442, %v405
      %v451 = vadd.f32 %v443, %v405
      %v452 = vmax.f32 %v444, 0.0
      %v453 = vmax.f32 %v445, 0.0
      %v454 = vmax.f32 %v446, 0.0
      %v455 = vmax.f32 %v447, 0.0
      %v456 = vmax.f32 %v448, 0.0
      %v457 = vmax.f32 %v449, 0.0
      %v458 = vmax.f32 %v450, 0.0
      %v459 = vmax.f32 %v451, 0.0
      %v460 = vpack.c.bf16 %v453, %v452
      %v461 = vpack.c.bf16 %v455, %v454
      %v462 = vpack.c.bf16 %v457, %v456
      %v463 = vpack.c.bf16 %v459, %v458
      %s464 = scalar_lea.vmem %s367, 2
      %v465 = vld [vmem:[%s464] sm:$0x3]
      %vm466 = vcmask 31744
      %v468 = vsel %vm466, %v460, 0
      %v471 = vsel %vm466, %v461, 0
      %v474 = vsel %vm466, %v462, 0
      %v477 = vsel %vm466, %v463, 0
      %vm479 = vcmask 1041408
      %v481 = vsel %vm479, %v465, 0
      %483 = vmatprep.subr.bf16.mxu0 0
      %484 = vmatpush1.bf16.msra.mxu0 %v481
      %485 = vmatprep.subr.bf16.mxu0 0
      %486 = vmatpush1.bf16.msra.mxu0 0
      %487 = vmatprep.subr.bf16.mxu0 0
      %488 = vmatpush1.bf16.msra.mxu0 0
      %489 = vmatprep.subr.bf16.mxu0 0
      %490 = vmatpush1.bf16.msra.mxu0 0
      %491 = vmatprep.subr.bf16.mxu0 0
      %492 = vmatpush1.bf16.msra.mxu0 0
      %493 = vmatprep.subr.bf16.mxu0 0
      %494 = vmatpush1.bf16.msra.mxu0 0
      %495 = vmatprep.subr.bf16.mxu0 0
      %496 = vmatpush1.bf16.msra.mxu0 0
      %497 = vmatprep.subr.bf16.mxu0 0
      %498 = vmatpush1.bf16.msra.mxu0 0
      %499 = vmatprep.subr.bf16.mxu0 0
      %500 = vmatpush1.bf16.msra.mxu0 0
      %501 = vmatprep.subr.bf16.mxu0 0
      %502 = vmatpush1.bf16.msra.mxu0 0
      %503 = vmatprep.subr.bf16.mxu0 0
      %504 = vmatpush1.bf16.msra.mxu0 0
      %505 = vmatprep.subr.bf16.mxu0 0
      %506 = vmatpush1.bf16.msra.mxu0 0
      %507 = vmatprep.subr.bf16.mxu0 0
      %508 = vmatpush1.bf16.msra.mxu0 0
      %509 = vmatprep.subr.bf16.mxu0 0
      %510 = vmatpush1.bf16.msra.mxu0 0
      %511 = vmatprep.subr.bf16.mxu0 0
      %512 = vmatpush1.bf16.msra.mxu0 0
      %513 = vmatprep.subr.bf16.mxu0 0
      %514 = vmatpush1.bf16.msra.mxu0 0
      %515 = vmatprep.mubr.bf16.mxu0 0
      %516 = vmatmul.mubr.bf16.gmra.mrb[0].mxu0 %v468
      %v517 = vpop.f32.mrb[0].mxu0
      %v518 = vadd.f32 0.0, %v517
      %v519 = vpop.f32.mrb[0].mxu0
      %v520 = vpop.f32.mrb[0].mxu0
      %v521 = vadd.f32 0.0, %v520
      %v522 = vpop.f32.mrb[0].mxu0
      %523 = vmatprep.mubr.bf16.mxu0 0
      %524 = vmatmul.mubr.bf16.gmra.mrb[0].mxu0 %v471
      %v525 = vpop.f32.mrb[0].mxu0
      %v526 = vadd.f32 0.0, %v525
      %v527 = vpop.f32.mrb[0].mxu0
      %v528 = vpop.f32.mrb[0].mxu0
      %v529 = vadd.f32 0.0, %v528
      %v530 = vpop.f32.mrb[0].mxu0
      %531 = vmatprep.mubr.bf16.mxu0 0
      %532 = vmatmul.mubr.bf16.gmra.mrb[0].mxu0 %v474
      %v533 = vpop.f32.mrb[0].mxu0
      %v534 = vadd.f32 0.0, %v533
      %v535 = vpop.f32.mrb[0].mxu0
      %v536 = vpop.f32.mrb[0].mxu0
      %v537 = vadd.f32 0.0, %v536
      %v538 = vpop.f32.mrb[0].mxu0
      %539 = vmatprep.mubr.bf16.mxu0 0
      %540 = vmatmul.mubr.bf16.gmra.mrb[0].mxu0 %v477
      %v541 = vpop.f32.mrb[0].mxu0
      %v542 = vadd.f32 0.0, %v541
      %v543 = vpop.f32.mrb[0].mxu0
      %v544 = vpop.f32.mrb[0].mxu0
      %v545 = vadd.f32 0.0, %v544
      %v546 = vpop.f32.mrb[0].mxu0
      %547 = vdwg.mxu0
      %v549 = vsel %vm466, %v423, 0
      %v552 = vsel %vm466, %v424, 0
      %v555 = vsel %vm466, %v425, 0
      %v558 = vsel %vm466, %v426, 0
      %v561 = vsel %vm479, %v427, 0
      %563 = vmatprep.subr.bf16.mxu0 0
      %564 = vmatpush1.bf16.msra.mxu0 %v561
      %565 = vmatprep.subr.bf16.mxu0 0
      %566 = vmatpush1.bf16.msra.mxu0 0
      %567 = vmatprep.subr.bf16.mxu0 0
      %568 = vmatpush1.bf16.msra.mxu0 0
      %569 = vmatprep.subr.bf16.mxu0 0
      %570 = vmatpush1.bf16.msra.mxu0 0
      %571 = vmatprep.subr.bf16.mxu0 0
      %572 = vmatpush1.bf16.msra.mxu0 0
      %573 = vmatprep.subr.bf16.mxu0 0
      %574 = vmatpush1.bf16.msra.mxu0 0
      %575 = vmatprep.subr.bf16.mxu0 0
      %576 = vmatpush1.bf16.msra.mxu0 0
      %577 = vmatprep.subr.bf16.mxu0 0
      %578 = vmatpush1.bf16.msra.mxu0 0
      %579 = vmatprep.subr.bf16.mxu0 0
      %580 = vmatpush1.bf16.msra.mxu0 0
      %581 = vmatprep.subr.bf16.mxu0 0
      %582 = vmatpush1.bf16.msra.mxu0 0
      %583 = vmatprep.subr.bf16.mxu0 0
      %584 = vmatpush1.bf16.msra.mxu0 0
      %585 = vmatprep.subr.bf16.mxu0 0
      %586 = vmatpush1.bf16.msra.mxu0 0
      %587 = vmatprep.subr.bf16.mxu0 0
      %588 = vmatpush1.bf16.msra.mxu0 0
      %589 = vmatprep.subr.bf16.mxu0 0
      %590 = vmatpush1.bf16.msra.mxu0 0
      %591 = vmatprep.subr.bf16.mxu0 0
      %592 = vmatpush1.bf16.msra.mxu0 0
      %593 = vmatprep.subr.bf16.mxu0 0
      %594 = vmatpush1.bf16.msra.mxu0 0
      %595 = vmatprep.mubr.bf16.mxu0 0
      %596 = vmatmul.mubr.bf16.gmra.mrb[0].mxu0 %v549
      %v597 = vpop.f32.mrb[0].mxu0
      %v598 = vadd.f32 %v518, %v597
      %v599 = vpop.f32.mrb[0].mxu0
      %v600 = vpop.f32.mrb[0].mxu0
      %v601 = vadd.f32 %v521, %v600
      %v602 = vpop.f32.mrb[0].mxu0
      %603 = vmatprep.mubr.bf16.mxu0 0
      %604 = vmatmul.mubr.bf16.gmra.mrb[0].mxu0 %v552
      %v605 = vpop.f32.mrb[0].mxu0
      %v606 = vadd.f32 %v526, %v605
      %v607 = vpop.f32.mrb[0].mxu0
      %v608 = vpop.f32.mrb[0].mxu0
      %v609 = vadd.f32 %v529, %v608
      %v610 = vpop.f32.mrb[0].mxu0
      %611 = vmatprep.mubr.bf16.mxu0 0
      %612 = vmatmul.mubr.bf16.gmra.mrb[0].mxu0 %v555
      %v613 = vpop.f32.mrb[0].mxu0
      %v614 = vadd.f32 %v534, %v613
      %v615 = vpop.f32.mrb[0].mxu0
      %v616 = vpop.f32.mrb[0].mxu0
      %v617 = vadd.f32 %v537, %v616
      %v618 = vpop.f32.mrb[0].mxu0
      %619 = vmatprep.mubr.bf16.mxu0 0
      %620 = vmatmul.mubr.bf16.gmra.mrb[0].mxu0 %v558
      %v621 = vpop.f32.mrb[0].mxu0
      %v622 = vadd.f32 %v542, %v621
      %v623 = vpop.f32.mrb[0].mxu0
      %v624 = vpop.f32.mrb[0].mxu0
      %v625 = vadd.f32 %v545, %v624
      %v626 = vpop.f32.mrb[0].mxu0
      %627 = vdwg.mxu0
      %v628 = vld [vmem:[%s348 + $0x1] sm:$0xff]
      %v629 = vld [vmem:[%s348 + $0x11] sm:$0xff]
      %v630 = vld [vmem:[%s348 + $0x21] sm:$0xff]
      %v631 = vld [vmem:[%s348 + $0x31] sm:$0xff]
      %v632 = vld [vmem:[%s348 + $0x41] sm:$0xff]
      %v633 = vld [vmem:[%s348 + $0x51] sm:$0xff]
      %v634 = vld [vmem:[%s348 + $0x61] sm:$0xff]
      %v635 = vld [vmem:[%s348 + $0x71] sm:$0xff]
      %v636 = vmul.f32 %v628, %v391
      %v637 = vmul.f32 %v629, %v391
      %v638 = vmul.f32 %v630, %v391
      %v639 = vmul.f32 %v631, %v391
      %v640 = vmul.f32 %v632, %v391
      %v641 = vmul.f32 %v633, %v391
      %v642 = vmul.f32 %v634, %v391
      %v643 = vmul.f32 %v635, %v391
      %v644 = vadd.f32 %v636, %v405
      %v645 = vadd.f32 %v637, %v405
      %v646 = vadd.f32 %v638, %v405
      %v647 = vadd.f32 %v639, %v405
      %v648 = vadd.f32 %v640, %v405
      %v649 = vadd.f32 %v641, %v405
      %v650 = vadd.f32 %v642, %v405
      %v651 = vadd.f32 %v643, %v405
      %v652 = vmax.f32 %v644, 0.0
      %v653 = vmax.f32 %v645, 0.0
      %v654 = vmax.f32 %v646, 0.0
      %v655 = vmax.f32 %v647, 0.0
      %v656 = vmax.f32 %v648, 0.0
      %v657 = vmax.f32 %v649, 0.0
      %v658 = vmax.f32 %v650, 0.0
      %v659 = vmax.f32 %v651, 0.0
      %v660 = vpack.c.bf16 %v653, %v652
      %v661 = vpack.c.bf16 %v655, %v654
      %v662 = vpack.c.bf16 %v657, %v656
      %v663 = vpack.c.bf16 %v659, %v658
      %s664 = scalar_lea.vmem %s367, 4
      %v665 = vld [vmem:[%s664] sm:$0x3]
      %v667 = vsel %vm466, %v660, 0
      %v670 = vsel %vm466, %v661, 0
      %v673 = vsel %vm466, %v662, 0
      %v676 = vsel %vm466, %v663, 0
      %v679 = vsel %vm479, %v665, 0
      %681 = vmatprep.subr.bf16.mxu0 0
      %682 = vmatpush1.bf16.msra.mxu0 %v679
      %683 = vmatprep.subr.bf16.mxu0 0
      %684 = vmatpush1.bf16.msra.mxu0 0
      %685 = vmatprep.subr.bf16.mxu0 0
      %686 = vmatpush1.bf16.msra.mxu0 0
      %687 = vmatprep.subr.bf16.mxu0 0
      %688 = vmatpush1.bf16.msra.mxu0 0
      %689 = vmatprep.subr.bf16.mxu0 0
      %690 = vmatpush1.bf16.msra.mxu0 0
      %691 = vmatprep.subr.bf16.mxu0 0
      %692 = vmatpush1.bf16.msra.mxu0 0
      %693 = vmatprep.subr.bf16.mxu0 0
      %694 = vmatpush1.bf16.msra.mxu0 0
      %695 = vmatprep.subr.bf16.mxu0 0
      %696 = vmatpush1.bf16.msra.mxu0 0
      %697 = vmatprep.subr.bf16.mxu0 0
      %698 = vmatpush1.bf16.msra.mxu0 0
      %699 = vmatprep.subr.bf16.mxu0 0
      %700 = vmatpush1.bf16.msra.mxu0 0
      %701 = vmatprep.subr.bf16.mxu0 0
      %702 = vmatpush1.bf16.msra.mxu0 0
      %703 = vmatprep.subr.bf16.mxu0 0
      %704 = vmatpush1.bf16.msra.mxu0 0
      %705 = vmatprep.subr.bf16.mxu0 0
      %706 = vmatpush1.bf16.msra.mxu0 0
      %707 = vmatprep.subr.bf16.mxu0 0
      %708 = vmatpush1.bf16.msra.mxu0 0
      %709 = vmatprep.subr.bf16.mxu0 0
      %710 = vmatpush1.bf16.msra.mxu0 0
      %711 = vmatprep.subr.bf16.mxu0 0
      %712 = vmatpush1.bf16.msra.mxu0 0
      %713 = vmatprep.mubr.bf16.mxu0 0
      %714 = vmatmul.mubr.bf16.gmra.mrb[0].mxu0 %v667
      %v715 = vpop.f32.mrb[0].mxu0
      %v716 = vadd.f32 0.0, %v715
      %v717 = vpop.f32.mrb[0].mxu0
      %v718 = vpop.f32.mrb[0].mxu0
      %v719 = vadd.f32 0.0, %v718
      %v720 = vpop.f32.mrb[0].mxu0
      %721 = vmatprep.mubr.bf16.mxu0 0
      %722 = vmatmul.mubr.bf16.gmra.mrb[0].mxu0 %v670
      %v723 = vpop.f32.mrb[0].mxu0
      %v724 = vadd.f32 0.0, %v723
      %v725 = vpop.f32.mrb[0].mxu0
      %v726 = vpop.f32.mrb[0].mxu0
      %v727 = vadd.f32 0.0, %v726
      %v728 = vpop.f32.mrb[0].mxu0
      %729 = vmatprep.mubr.bf16.mxu0 0
      %730 = vmatmul.mubr.bf16.gmra.mrb[0].mxu0 %v673
      %v731 = vpop.f32.mrb[0].mxu0
      %v732 = vadd.f32 0.0, %v731
      %v733 = vpop.f32.mrb[0].mxu0
      %v734 = vpop.f32.mrb[0].mxu0
      %v735 = vadd.f32 0.0, %v734
      %v736 = vpop.f32.mrb[0].mxu0
      %737 = vmatprep.mubr.bf16.mxu0 0
      %738 = vmatmul.mubr.bf16.gmra.mrb[0].mxu0 %v676
      %v739 = vpop.f32.mrb[0].mxu0
      %v740 = vadd.f32 0.0, %v739
      %v741 = vpop.f32.mrb[0].mxu0
      %v742 = vpop.f32.mrb[0].mxu0
      %v743 = vadd.f32 0.0, %v742
      %v744 = vpop.f32.mrb[0].mxu0
      %745 = vdwg.mxu0
      %v746 = vadd.f32 %v598, %v716
      %v747 = vadd.f32 %v601, %v719
      %v748 = vadd.f32 %v606, %v724
      %v749 = vadd.f32 %v609, %v727
      %v750 = vadd.f32 %v614, %v732
      %v751 = vadd.f32 %v617, %v735
      %v752 = vadd.f32 %v622, %v740
      %v753 = vadd.f32 %v625, %v743
      %v754 = vld [vmem:[%s358] sm:$0xff]
      %v755 = vld [vmem:[%s358 + $0x10] sm:$0xff]
      %v756 = vld [vmem:[%s358 + $0x20] sm:$0xff]
      %v757 = vld [vmem:[%s358 + $0x30] sm:$0xff]
      %v758 = vld [vmem:[%s358 + $0x40] sm:$0xff]
      %v759 = vld [vmem:[%s358 + $0x50] sm:$0xff]
      %v760 = vld [vmem:[%s358 + $0x60] sm:$0xff]
      %v761 = vld [vmem:[%s358 + $0x70] sm:$0xff]
      %v762 = vmul.f32 %v754, %v391
      %v763 = vmul.f32 %v755, %v391
      %v764 = vmul.f32 %v756, %v391
      %v765 = vmul.f32 %v757, %v391
      %v766 = vmul.f32 %v758, %v391
      %v767 = vmul.f32 %v759, %v391
      %v768 = vmul.f32 %v760, %v391
      %v769 = vmul.f32 %v761, %v391
      %v770 = vadd.f32 %v762, %v405
      %v771 = vadd.f32 %v763, %v405
      %v772 = vadd.f32 %v764, %v405
      %v773 = vadd.f32 %v765, %v405
      %v774 = vadd.f32 %v766, %v405
      %v775 = vadd.f32 %v767, %v405
      %v776 = vadd.f32 %v768, %v405
      %v777 = vadd.f32 %v769, %v405
      %v778 = vmax.f32 %v770, 0.0
      %v779 = vmax.f32 %v771, 0.0
      %v780 = vmax.f32 %v772, 0.0
      %v781 = vmax.f32 %v773, 0.0
      %v782 = vmax.f32 %v774, 0.0
      %v783 = vmax.f32 %v775, 0.0
      %v784 = vmax.f32 %v776, 0.0
      %v785 = vmax.f32 %v777, 0.0
      %v786 = vpack.c.bf16 %v779, %v778
      %v787 = vpack.c.bf16 %v781, %v780
      %v788 = vpack.c.bf16 %v783, %v782
      %v789 = vpack.c.bf16 %v785, %v784
      %s790 = scalar_lea.vmem %s367, 6
      %v791 = vld [vmem:[%s790] sm:$0x3]
      %v793 = vsel %vm466, %v786, 0
      %v796 = vsel %vm466, %v787, 0
      %v799 = vsel %vm466, %v788, 0
      %v802 = vsel %vm466, %v789, 0
      %v805 = vsel %vm479, %v791, 0
      %807 = vmatprep.subr.bf16.mxu0 0
      %808 = vmatpush1.bf16.msra.mxu0 %v805
      %809 = vmatprep.subr.bf16.mxu0 0
      %810 = vmatpush1.bf16.msra.mxu0 0
      %811 = vmatprep.subr.bf16.mxu0 0
      %812 = vmatpush1.bf16.msra.mxu0 0
      %813 = vmatprep.subr.bf16.mxu0 0
      %814 = vmatpush1.bf16.msra.mxu0 0
      %815 = vmatprep.subr.bf16.mxu0 0
      %816 = vmatpush1.bf16.msra.mxu0 0
      %817 = vmatprep.subr.bf16.mxu0 0
      %818 = vmatpush1.bf16.msra.mxu0 0
      %819 = vmatprep.subr.bf16.mxu0 0
      %820 = vmatpush1.bf16.msra.mxu0 0
      %821 = vmatprep.subr.bf16.mxu0 0
      %822 = vmatpush1.bf16.msra.mxu0 0
      %823 = vmatprep.subr.bf16.mxu0 0
      %824 = vmatpush1.bf16.msra.mxu0 0
      %825 = vmatprep.subr.bf16.mxu0 0
      %826 = vmatpush1.bf16.msra.mxu0 0
      %827 = vmatprep.subr.bf16.mxu0 0
      %828 = vmatpush1.bf16.msra.mxu0 0
      %829 = vmatprep.subr.bf16.mxu0 0
      %830 = vmatpush1.bf16.msra.mxu0 0
      %831 = vmatprep.subr.bf16.mxu0 0
      %832 = vmatpush1.bf16.msra.mxu0 0
      %833 = vmatprep.subr.bf16.mxu0 0
      %834 = vmatpush1.bf16.msra.mxu0 0
      %835 = vmatprep.subr.bf16.mxu0 0
      %836 = vmatpush1.bf16.msra.mxu0 0
      %837 = vmatprep.subr.bf16.mxu0 0
      %838 = vmatpush1.bf16.msra.mxu0 0
      %839 = vmatprep.mubr.bf16.mxu0 0
      %840 = vmatmul.mubr.bf16.gmra.mrb[0].mxu0 %v793
      %v841 = vpop.f32.mrb[0].mxu0
      %v842 = vadd.f32 0.0, %v841
      %v843 = vpop.f32.mrb[0].mxu0
      %v844 = vpop.f32.mrb[0].mxu0
      %v845 = vadd.f32 0.0, %v844
      %v846 = vpop.f32.mrb[0].mxu0
      %847 = vmatprep.mubr.bf16.mxu0 0
      %848 = vmatmul.mubr.bf16.gmra.mrb[0].mxu0 %v796
      %v849 = vpop.f32.mrb[0].mxu0
      %v850 = vadd.f32 0.0, %v849
      %v851 = vpop.f32.mrb[0].mxu0
      %v852 = vpop.f32.mrb[0].mxu0
      %v853 = vadd.f32 0.0, %v852
      %v854 = vpop.f32.mrb[0].mxu0
      %855 = vmatprep.mubr.bf16.mxu0 0
      %856 = vmatmul.mubr.bf16.gmra.mrb[0].mxu0 %v799
      %v857 = vpop.f32.mrb[0].mxu0
      %v858 = vadd.f32 0.0, %v857
      %v859 = vpop.f32.mrb[0].mxu0
      %v860 = vpop.f32.mrb[0].mxu0
      %v861 = vadd.f32 0.0, %v860
      %v862 = vpop.f32.mrb[0].mxu0
      %863 = vmatprep.mubr.bf16.mxu0 0
      %864 = vmatmul.mubr.bf16.gmra.mrb[0].mxu0 %v802
      %v865 = vpop.f32.mrb[0].mxu0
      %v866 = vadd.f32 0.0, %v865
      %v867 = vpop.f32.mrb[0].mxu0
      %v868 = vpop.f32.mrb[0].mxu0
      %v869 = vadd.f32 0.0, %v868
      %v870 = vpop.f32.mrb[0].mxu0
      %871 = vdwg.mxu0
      %v872 = vadd.f32 %v746, %v842
      %v873 = vadd.f32 %v747, %v845
      %v874 = vadd.f32 %v748, %v850
      %v875 = vadd.f32 %v749, %v853
      %v876 = vadd.f32 %v750, %v858
      %v877 = vadd.f32 %v751, %v861
      %v878 = vadd.f32 %v752, %v866
      %v879 = vadd.f32 %v753, %v869
      %v880 = vld [vmem:[%s363] sm:$0xff]
      %v881 = vld [vmem:[%s363 + $0x10] sm:$0xff]
      %v882 = vld [vmem:[%s363 + $0x20] sm:$0xff]
      %v883 = vld [vmem:[%s363 + $0x30] sm:$0xff]
      %v884 = vld [vmem:[%s363 + $0x40] sm:$0xff]
      %v885 = vld [vmem:[%s363 + $0x50] sm:$0xff]
      %v886 = vld [vmem:[%s363 + $0x60] sm:$0xff]
      %v887 = vld [vmem:[%s363 + $0x70] sm:$0xff]
      %v888 = vmul.f32 %v880, %v391
      %v889 = vmul.f32 %v881, %v391
      %v890 = vmul.f32 %v882, %v391
      %v891 = vmul.f32 %v883, %v391
      %v892 = vmul.f32 %v884, %v391
      %v893 = vmul.f32 %v885, %v391
      %v894 = vmul.f32 %v886, %v391
      %v895 = vmul.f32 %v887, %v391
      %v896 = vadd.f32 %v888, %v405
      %v897 = vadd.f32 %v889, %v405
      %v898 = vadd.f32 %v890, %v405
      %v899 = vadd.f32 %v891, %v405
      %v900 = vadd.f32 %v892, %v405
      %v901 = vadd.f32 %v893, %v405
      %v902 = vadd.f32 %v894, %v405
      %v903 = vadd.f32 %v895, %v405
      %v904 = vmax.f32 %v896, 0.0
      %v905 = vmax.f32 %v897, 0.0
      %v906 = vmax.f32 %v898, 0.0
      %v907 = vmax.f32 %v899, 0.0
      %v908 = vmax.f32 %v900, 0.0
      %v909 = vmax.f32 %v901, 0.0
      %v910 = vmax.f32 %v902, 0.0
      %v911 = vmax.f32 %v903, 0.0
      %v912 = vpack.c.bf16 %v905, %v904
      %v913 = vpack.c.bf16 %v907, %v906
      %v914 = vpack.c.bf16 %v909, %v908
      %v915 = vpack.c.bf16 %v911, %v910
      %s916 = scalar_lea.vmem %s367, 8
      %v917 = vld [vmem:[%s916] sm:$0x3]
      %v919 = vsel %vm466, %v912, 0
      %v922 = vsel %vm466, %v913, 0
      %v925 = vsel %vm466, %v914, 0
      %v928 = vsel %vm466, %v915, 0
      %v931 = vsel %vm479, %v917, 0
      %933 = vmatprep.subr.bf16.mxu0 0
      %934 = vmatpush1.bf16.msra.mxu0 %v931
      %935 = vmatprep.subr.bf16.mxu0 0
      %936 = vmatpush1.bf16.msra.mxu0 0
      %937 = vmatprep.subr.bf16.mxu0 0
      %938 = vmatpush1.bf16.msra.mxu0 0
      %939 = vmatprep.subr.bf16.mxu0 0
      %940 = vmatpush1.bf16.msra.mxu0 0
      %941 = vmatprep.subr.bf16.mxu0 0
      %942 = vmatpush1.bf16.msra.mxu0 0
      %943 = vmatprep.subr.bf16.mxu0 0
      %944 = vmatpush1.bf16.msra.mxu0 0
      %945 = vmatprep.subr.bf16.mxu0 0
      %946 = vmatpush1.bf16.msra.mxu0 0
      %947 = vmatprep.subr.bf16.mxu0 0
      %948 = vmatpush1.bf16.msra.mxu0 0
      %949 = vmatprep.subr.bf16.mxu0 0
      %950 = vmatpush1.bf16.msra.mxu0 0
      %951 = vmatprep.subr.bf16.mxu0 0
      %952 = vmatpush1.bf16.msra.mxu0 0
      %953 = vmatprep.subr.bf16.mxu0 0
      %954 = vmatpush1.bf16.msra.mxu0 0
      %955 = vmatprep.subr.bf16.mxu0 0
      %956 = vmatpush1.bf16.msra.mxu0 0
      %957 = vmatprep.subr.bf16.mxu0 0
      %958 = vmatpush1.bf16.msra.mxu0 0
      %959 = vmatprep.subr.bf16.mxu0 0
      %960 = vmatpush1.bf16.msra.mxu0 0
      %961 = vmatprep.subr.bf16.mxu0 0
      %962 = vmatpush1.bf16.msra.mxu0 0
      %963 = vmatprep.subr.bf16.mxu0 0
      %964 = vmatpush1.bf16.msra.mxu0 0
      %965 = vmatprep.mubr.bf16.mxu0 0
      %966 = vmatmul.mubr.bf16.gmra.mrb[0].mxu0 %v919
      %v967 = vpop.f32.mrb[0].mxu0
      %v968 = vadd.f32 0.0, %v967
      %v969 = vpop.f32.mrb[0].mxu0
      %v970 = vpop.f32.mrb[0].mxu0
      %v971 = vadd.f32 0.0, %v970
      %v972 = vpop.f32.mrb[0].mxu0
      %973 = vmatprep.mubr.bf16.mxu0 0
      %974 = vmatmul.mubr.bf16.gmra.mrb[0].mxu0 %v922
      %v975 = vpop.f32.mrb[0].mxu0
      %v976 = vadd.f32 0.0, %v975
      %v977 = vpop.f32.mrb[0].mxu0
      %v978 = vpop.f32.mrb[0].mxu0
      %v979 = vadd.f32 0.0, %v978
      %v980 = vpop.f32.mrb[0].mxu0
      %981 = vmatprep.mubr.bf16.mxu0 0
      %982 = vmatmul.mubr.bf16.gmra.mrb[0].mxu0 %v925
      %v983 = vpop.f32.mrb[0].mxu0
      %v984 = vadd.f32 0.0, %v983
      %v985 = vpop.f32.mrb[0].mxu0
      %v986 = vpop.f32.mrb[0].mxu0
      %v987 = vadd.f32 0.0, %v986
      %v988 = vpop.f32.mrb[0].mxu0
      %989 = vmatprep.mubr.bf16.mxu0 0
      %990 = vmatmul.mubr.bf16.gmra.mrb[0].mxu0 %v928
      %v991 = vpop.f32.mrb[0].mxu0
      %v992 = vadd.f32 0.0, %v991
      %v993 = vpop.f32.mrb[0].mxu0
      %v994 = vpop.f32.mrb[0].mxu0
      %v995 = vadd.f32 0.0, %v994
      %v996 = vpop.f32.mrb[0].mxu0
      %997 = vdwg.mxu0
      %v998 = vadd.f32 %v872, %v968
      %v999 = vadd.f32 %v873, %v971
      %v1000 = vadd.f32 %v874, %v976
      %v1001 = vadd.f32 %v875, %v979
      %v1002 = vadd.f32 %v876, %v984
      %v1003 = vadd.f32 %v877, %v987
      %v1004 = vadd.f32 %v878, %v992
      %v1005 = vadd.f32 %v879, %v995
      %v1006 = vld [vmem:[%s358 + $0x1] sm:$0xff]
      %v1007 = vld [vmem:[%s358 + $0x11] sm:$0xff]
      %v1008 = vld [vmem:[%s358 + $0x21] sm:$0xff]
      %v1009 = vld [vmem:[%s358 + $0x31] sm:$0xff]
      %v1010 = vld [vmem:[%s358 + $0x41] sm:$0xff]
      %v1011 = vld [vmem:[%s358 + $0x51] sm:$0xff]
      %v1012 = vld [vmem:[%s358 + $0x61] sm:$0xff]
      %v1013 = vld [vmem:[%s358 + $0x71] sm:$0xff]
      %v1014 = vmul.f32 %v1006, %v391
      %v1015 = vmul.f32 %v1007, %v391
      %v1016 = vmul.f32 %v1008, %v391
      %v1017 = vmul.f32 %v1009, %v391
      %v1018 = vmul.f32 %v1010, %v391
      %v1019 = vmul.f32 %v1011, %v391
      %v1020 = vmul.f32 %v1012, %v391
      %v1021 = vmul.f32 %v1013, %v391
      %v1022 = vadd.f32 %v1014, %v405
      %v1023 = vadd.f32 %v1015, %v405
      %v1024 = vadd.f32 %v1016, %v405
      %v1025 = vadd.f32 %v1017, %v405
      %v1026 = vadd.f32 %v1018, %v405
      %v1027 = vadd.f32 %v1019, %v405
      %v1028 = vadd.f32 %v1020, %v405
      %v1029 = vadd.f32 %v1021, %v405
      %v1030 = vmax.f32 %v1022, 0.0
      %v1031 = vmax.f32 %v1023, 0.0
      %v1032 = vmax.f32 %v1024, 0.0
      %v1033 = vmax.f32 %v1025, 0.0
      %v1034 = vmax.f32 %v1026, 0.0
      %v1035 = vmax.f32 %v1027, 0.0
      %v1036 = vmax.f32 %v1028, 0.0
      %v1037 = vmax.f32 %v1029, 0.0
      %v1038 = vpack.c.bf16 %v1031, %v1030
      %v1039 = vpack.c.bf16 %v1033, %v1032
      %v1040 = vpack.c.bf16 %v1035, %v1034
      %v1041 = vpack.c.bf16 %v1037, %v1036
      %s1042 = scalar_lea.vmem %s367, 10
      %v1043 = vld [vmem:[%s1042] sm:$0x3]
      %v1045 = vsel %vm466, %v1038, 0
      %v1048 = vsel %vm466, %v1039, 0
      %v1051 = vsel %vm466, %v1040, 0
      %v1054 = vsel %vm466, %v1041, 0
      %v1057 = vsel %vm479, %v1043, 0
      %1059 = vmatprep.subr.bf16.mxu0 0
      %1060 = vmatpush1.bf16.msra.mxu0 %v1057
      %1061 = vmatprep.subr.bf16.mxu0 0
      %1062 = vmatpush1.bf16.msra.mxu0 0
      %1063 = vmatprep.subr.bf16.mxu0 0
      %1064 = vmatpush1.bf16.msra.mxu0 0
      %1065 = vmatprep.subr.bf16.mxu0 0
      %1066 = vmatpush1.bf16.msra.mxu0 0
      %1067 = vmatprep.subr.bf16.mxu0 0
      %1068 = vmatpush1.bf16.msra.mxu0 0
      %1069 = vmatprep.subr.bf16.mxu0 0
      %1070 = vmatpush1.bf16.msra.mxu0 0
      %1071 = vmatprep.subr.bf16.mxu0 0
      %1072 = vmatpush1.bf16.msra.mxu0 0
      %1073 = vmatprep.subr.bf16.mxu0 0
      %1074 = vmatpush1.bf16.msra.mxu0 0
      %1075 = vmatprep.subr.bf16.mxu0 0
      %1076 = vmatpush1.bf16.msra.mxu0 0
      %1077 = vmatprep.subr.bf16.mxu0 0
      %1078 = vmatpush1.bf16.msra.mxu0 0
      %1079 = vmatprep.subr.bf16.mxu0 0
      %1080 = vmatpush1.bf16.msra.mxu0 0
      %1081 = vmatprep.subr.bf16.mxu0 0
      %1082 = vmatpush1.bf16.msra.mxu0 0
      %1083 = vmatprep.subr.bf16.mxu0 0
      %1084 = vmatpush1.bf16.msra.mxu0 0
      %1085 = vmatprep.subr.bf16.mxu0 0
      %1086 = vmatpush1.bf16.msra.mxu0 0
      %1087 = vmatprep.subr.bf16.mxu0 0
      %1088 = vmatpush1.bf16.msra.mxu0 0
      %1089 = vmatprep.subr.bf16.mxu0 0
      %1090 = vmatpush1.bf16.msra.mxu0 0
      %1091 = vmatprep.mubr.bf16.mxu0 0
      %1092 = vmatmul.mubr.bf16.gmra.mrb[0].mxu0 %v1045
      %v1093 = vpop.f32.mrb[0].mxu0
      %v1094 = vadd.f32 0.0, %v1093
      %v1095 = vpop.f32.mrb[0].mxu0
      %v1096 = vpop.f32.mrb[0].mxu0
      %v1097 = vadd.f32 0.0, %v1096
      %v1098 = vpop.f32.mrb[0].mxu0
      %1099 = vmatprep.mubr.bf16.mxu0 0
      %1100 = vmatmul.mubr.bf16.gmra.mrb[0].mxu0 %v1048
      %v1101 = vpop.f32.mrb[0].mxu0
      %v1102 = vadd.f32 0.0, %v1101
      %v1103 = vpop.f32.mrb[0].mxu0
      %v1104 = vpop.f32.mrb[0].mxu0
      %v1105 = vadd.f32 0.0, %v1104
      %v1106 = vpop.f32.mrb[0].mxu0
      %1107 = vmatprep.mubr.bf16.mxu0 0
      %1108 = vmatmul.mubr.bf16.gmra.mrb[0].mxu0 %v1051
      %v1109 = vpop.f32.mrb[0].mxu0
      %v1110 = vadd.f32 0.0, %v1109
      %v1111 = vpop.f32.mrb[0].mxu0
      %v1112 = vpop.f32.mrb[0].mxu0
      %v1113 = vadd.f32 0.0, %v1112
      %v1114 = vpop.f32.mrb[0].mxu0
      %1115 = vmatprep.mubr.bf16.mxu0 0
      %1116 = vmatmul.mubr.bf16.gmra.mrb[0].mxu0 %v1054
      %v1117 = vpop.f32.mrb[0].mxu0
      %v1118 = vadd.f32 0.0, %v1117
      %v1119 = vpop.f32.mrb[0].mxu0
      %v1120 = vpop.f32.mrb[0].mxu0
      %v1121 = vadd.f32 0.0, %v1120
      %v1122 = vpop.f32.mrb[0].mxu0
      %1123 = vdwg.mxu0
      %v1124 = vadd.f32 %v998, %v1094
      %v1125 = vadd.f32 %v999, %v1097
      %v1126 = vadd.f32 %v1000, %v1102
      %v1127 = vadd.f32 %v1001, %v1105
      %v1128 = vadd.f32 %v1002, %v1110
      %v1129 = vadd.f32 %v1003, %v1113
      %v1130 = vadd.f32 %v1004, %v1118
      %v1131 = vadd.f32 %v1005, %v1121
      %s1132 = scalar_lea.vmem %s348, 16
      %v1133 = vld [vmem:[%s1132] sm:$0xff]
      %v1134 = vld [vmem:[%s1132 + $0x10] sm:$0xff]
      %v1135 = vld [vmem:[%s1132 + $0x20] sm:$0xff]
      %v1136 = vld [vmem:[%s1132 + $0x30] sm:$0xff]
      %v1137 = vld [vmem:[%s1132 + $0x40] sm:$0xff]
      %v1138 = vld [vmem:[%s1132 + $0x50] sm:$0xff]
      %v1139 = vld [vmem:[%s1132 + $0x60] sm:$0xff]
      %v1140 = vld [vmem:[%s1132 + $0x70] sm:$0xff]
      %v1141 = vmul.f32 %v1133, %v391
      %v1142 = vmul.f32 %v1134, %v391
      %v1143 = vmul.f32 %v1135, %v391
      %v1144 = vmul.f32 %v1136, %v391
      %v1145 = vmul.f32 %v1137, %v391
      %v1146 = vmul.f32 %v1138, %v391
      %v1147 = vmul.f32 %v1139, %v391
      %v1148 = vmul.f32 %v1140, %v391
      %v1149 = vadd.f32 %v1141, %v405
      %v1150 = vadd.f32 %v1142, %v405
      %v1151 = vadd.f32 %v1143, %v405
      %v1152 = vadd.f32 %v1144, %v405
      %v1153 = vadd.f32 %v1145, %v405
      %v1154 = vadd.f32 %v1146, %v405
      %v1155 = vadd.f32 %v1147, %v405
      %v1156 = vadd.f32 %v1148, %v405
      %v1157 = vmax.f32 %v1149, 0.0
      %v1158 = vmax.f32 %v1150, 0.0
      %v1159 = vmax.f32 %v1151, 0.0
      %v1160 = vmax.f32 %v1152, 0.0
      %v1161 = vmax.f32 %v1153, 0.0
      %v1162 = vmax.f32 %v1154, 0.0
      %v1163 = vmax.f32 %v1155, 0.0
      %v1164 = vmax.f32 %v1156, 0.0
      %v1165 = vpack.c.bf16 %v1158, %v1157
      %v1166 = vpack.c.bf16 %v1160, %v1159
      %v1167 = vpack.c.bf16 %v1162, %v1161
      %v1168 = vpack.c.bf16 %v1164, %v1163
      %s1169 = scalar_lea.vmem %s367, 12
      %v1170 = vld [vmem:[%s1169] sm:$0x3]
      %v1172 = vsel %vm466, %v1165, 0
      %v1175 = vsel %vm466, %v1166, 0
      %v1178 = vsel %vm466, %v1167, 0
      %v1181 = vsel %vm466, %v1168, 0
      %v1184 = vsel %vm479, %v1170, 0
      %1186 = vmatprep.subr.bf16.mxu0 0
      %1187 = vmatpush1.bf16.msra.mxu0 %v1184
      %1188 = vmatprep.subr.bf16.mxu0 0
      %1189 = vmatpush1.bf16.msra.mxu0 0
      %1190 = vmatprep.subr.bf16.mxu0 0
      %1191 = vmatpush1.bf16.msra.mxu0 0
      %1192 = vmatprep.subr.bf16.mxu0 0
      %1193 = vmatpush1.bf16.msra.mxu0 0
      %1194 = vmatprep.subr.bf16.mxu0 0
      %1195 = vmatpush1.bf16.msra.mxu0 0
      %1196 = vmatprep.subr.bf16.mxu0 0
      %1197 = vmatpush1.bf16.msra.mxu0 0
      %1198 = vmatprep.subr.bf16.mxu0 0
      %1199 = vmatpush1.bf16.msra.mxu0 0
      %1200 = vmatprep.subr.bf16.mxu0 0
      %1201 = vmatpush1.bf16.msra.mxu0 0
      %1202 = vmatprep.subr.bf16.mxu0 0
      %1203 = vmatpush1.bf16.msra.mxu0 0
      %1204 = vmatprep.subr.bf16.mxu0 0
      %1205 = vmatpush1.bf16.msra.mxu0 0
      %1206 = vmatprep.subr.bf16.mxu0 0
      %1207 = vmatpush1.bf16.msra.mxu0 0
      %1208 = vmatprep.subr.bf16.mxu0 0
      %1209 = vmatpush1.bf16.msra.mxu0 0
      %1210 = vmatprep.subr.bf16.mxu0 0
      %1211 = vmatpush1.bf16.msra.mxu0 0
      %1212 = vmatprep.subr.bf16.mxu0 0
      %1213 = vmatpush1.bf16.msra.mxu0 0
      %1214 = vmatprep.subr.bf16.mxu0 0
      %1215 = vmatpush1.bf16.msra.mxu0 0
      %1216 = vmatprep.subr.bf16.mxu0 0
      %1217 = vmatpush1.bf16.msra.mxu0 0
      %1218 = vmatprep.mubr.bf16.mxu0 0
      %1219 = vmatmul.mubr.bf16.gmra.mrb[0].mxu0 %v1172
      %v1220 = vpop.f32.mrb[0].mxu0
      %v1221 = vadd.f32 0.0, %v1220
      %v1222 = vpop.f32.mrb[0].mxu0
      %v1223 = vpop.f32.mrb[0].mxu0
      %v1224 = vadd.f32 0.0, %v1223
      %v1225 = vpop.f32.mrb[0].mxu0
      %1226 = vmatprep.mubr.bf16.mxu0 0
      %1227 = vmatmul.mubr.bf16.gmra.mrb[0].mxu0 %v1175
      %v1228 = vpop.f32.mrb[0].mxu0
      %v1229 = vadd.f32 0.0, %v1228
      %v1230 = vpop.f32.mrb[0].mxu0
      %v1231 = vpop.f32.mrb[0].mxu0
      %v1232 = vadd.f32 0.0, %v1231
      %v1233 = vpop.f32.mrb[0].mxu0
      %1234 = vmatprep.mubr.bf16.mxu0 0
      %1235 = vmatmul.mubr.bf16.gmra.mrb[0].mxu0 %v1178
      %v1236 = vpop.f32.mrb[0].mxu0
      %v1237 = vadd.f32 0.0, %v1236
      %v1238 = vpop.f32.mrb[0].mxu0
      %v1239 = vpop.f32.mrb[0].mxu0
      %v1240 = vadd.f32 0.0, %v1239
      %v1241 = vpop.f32.mrb[0].mxu0
      %1242 = vmatprep.mubr.bf16.mxu0 0
      %1243 = vmatmul.mubr.bf16.gmra.mrb[0].mxu0 %v1181
      %v1244 = vpop.f32.mrb[0].mxu0
      %v1245 = vadd.f32 0.0, %v1244
      %v1246 = vpop.f32.mrb[0].mxu0
      %v1247 = vpop.f32.mrb[0].mxu0
      %v1248 = vadd.f32 0.0, %v1247
      %v1249 = vpop.f32.mrb[0].mxu0
      %1250 = vdwg.mxu0
      %v1251 = vadd.f32 %v1124, %v1221
      %v1252 = vadd.f32 %v1125, %v1224
      %v1253 = vadd.f32 %v1126, %v1229
      %v1254 = vadd.f32 %v1127, %v1232
      %v1255 = vadd.f32 %v1128, %v1237
      %v1256 = vadd.f32 %v1129, %v1240
      %v1257 = vadd.f32 %v1130, %v1245
      %v1258 = vadd.f32 %v1131, %v1248
      %s1259 = scalar_lea.vmem %s353, 16
      %v1260 = vld [vmem:[%s1259] sm:$0xff]
      %v1261 = vld [vmem:[%s1259 + $0x10] sm:$0xff]
      %v1262 = vld [vmem:[%s1259 + $0x20] sm:$0xff]
      %v1263 = vld [vmem:[%s1259 + $0x30] sm:$0xff]
      %v1264 = vld [vmem:[%s1259 + $0x40] sm:$0xff]
      %v1265 = vld [vmem:[%s1259 + $0x50] sm:$0xff]
      %v1266 = vld [vmem:[%s1259 + $0x60] sm:$0xff]
      %v1267 = vld [vmem:[%s1259 + $0x70] sm:$0xff]
      %v1268 = vmul.f32 %v1260, %v391
      %v1269 = vmul.f32 %v1261, %v391
      %v1270 = vmul.f32 %v1262, %v391
      %v1271 = vmul.f32 %v1263, %v391
      %v1272 = vmul.f32 %v1264, %v391
      %v1273 = vmul.f32 %v1265, %v391
      %v1274 = vmul.f32 %v1266, %v391
      %v1275 = vmul.f32 %v1267, %v391
      %v1276 = vadd.f32 %v1268, %v405
      %v1277 = vadd.f32 %v1269, %v405
      %v1278 = vadd.f32 %v1270, %v405
      %v1279 = vadd.f32 %v1271, %v405
      %v1280 = vadd.f32 %v1272, %v405
      %v1281 = vadd.f32 %v1273, %v405
      %v1282 = vadd.f32 %v1274, %v405
      %v1283 = vadd.f32 %v1275, %v405
      %v1284 = vmax.f32 %v1276, 0.0
      %v1285 = vmax.f32 %v1277, 0.0
      %v1286 = vmax.f32 %v1278, 0.0
      %v1287 = vmax.f32 %v1279, 0.0
      %v1288 = vmax.f32 %v1280, 0.0
      %v1289 = vmax.f32 %v1281, 0.0
      %v1290 = vmax.f32 %v1282, 0.0
      %v1291 = vmax.f32 %v1283, 0.0
      %v1292 = vpack.c.bf16 %v1285, %v1284
      %v1293 = vpack.c.bf16 %v1287, %v1286
      %v1294 = vpack.c.bf16 %v1289, %v1288
      %v1295 = vpack.c.bf16 %v1291, %v1290
      %s1296 = scalar_lea.vmem %s367, 14
      %v1297 = vld [vmem:[%s1296] sm:$0x3]
      %v1299 = vsel %vm466, %v1292, 0
      %v1302 = vsel %vm466, %v1293, 0
      %v1305 = vsel %vm466, %v1294, 0
      %v1308 = vsel %vm466, %v1295, 0
      %v1311 = vsel %vm479, %v1297, 0
      %1313 = vmatprep.subr.bf16.mxu0 0
      %1314 = vmatpush1.bf16.msra.mxu0 %v1311
      %1315 = vmatprep.subr.bf16.mxu0 0
      %1316 = vmatpush1.bf16.msra.mxu0 0
      %1317 = vmatprep.subr.bf16.mxu0 0
      %1318 = vmatpush1.bf16.msra.mxu0 0
      %1319 = vmatprep.subr.bf16.mxu0 0
      %1320 = vmatpush1.bf16.msra.mxu0 0
      %1321 = vmatprep.subr.bf16.mxu0 0
      %1322 = vmatpush1.bf16.msra.mxu0 0
      %1323 = vmatprep.subr.bf16.mxu0 0
      %1324 = vmatpush1.bf16.msra.mxu0 0
      %1325 = vmatprep.subr.bf16.mxu0 0
      %1326 = vmatpush1.bf16.msra.mxu0 0
      %1327 = vmatprep.subr.bf16.mxu0 0
      %1328 = vmatpush1.bf16.msra.mxu0 0
      %1329 = vmatprep.subr.bf16.mxu0 0
      %1330 = vmatpush1.bf16.msra.mxu0 0
      %1331 = vmatprep.subr.bf16.mxu0 0
      %1332 = vmatpush1.bf16.msra.mxu0 0
      %1333 = vmatprep.subr.bf16.mxu0 0
      %1334 = vmatpush1.bf16.msra.mxu0 0
      %1335 = vmatprep.subr.bf16.mxu0 0
      %1336 = vmatpush1.bf16.msra.mxu0 0
      %1337 = vmatprep.subr.bf16.mxu0 0
      %1338 = vmatpush1.bf16.msra.mxu0 0
      %1339 = vmatprep.subr.bf16.mxu0 0
      %1340 = vmatpush1.bf16.msra.mxu0 0
      %1341 = vmatprep.subr.bf16.mxu0 0
      %1342 = vmatpush1.bf16.msra.mxu0 0
      %1343 = vmatprep.subr.bf16.mxu0 0
      %1344 = vmatpush1.bf16.msra.mxu0 0
      %1345 = vmatprep.mubr.bf16.mxu0 0
      %1346 = vmatmul.mubr.bf16.gmra.mrb[0].mxu0 %v1299
      %v1347 = vpop.f32.mrb[0].mxu0
      %v1348 = vadd.f32 0.0, %v1347
      %v1349 = vpop.f32.mrb[0].mxu0
      %v1350 = vpop.f32.mrb[0].mxu0
      %v1351 = vadd.f32 0.0, %v1350
      %v1352 = vpop.f32.mrb[0].mxu0
      %1353 = vmatprep.mubr.bf16.mxu0 0
      %1354 = vmatmul.mubr.bf16.gmra.mrb[0].mxu0 %v1302
      %v1355 = vpop.f32.mrb[0].mxu0
      %v1356 = vadd.f32 0.0, %v1355
      %v1357 = vpop.f32.mrb[0].mxu0
      %v1358 = vpop.f32.mrb[0].mxu0
      %v1359 = vadd.f32 0.0, %v1358
      %v1360 = vpop.f32.mrb[0].mxu0
      %1361 = vmatprep.mubr.bf16.mxu0 0
      %1362 = vmatmul.mubr.bf16.gmra.mrb[0].mxu0 %v1305
      %v1363 = vpop.f32.mrb[0].mxu0
      %v1364 = vadd.f32 0.0, %v1363
      %v1365 = vpop.f32.mrb[0].mxu0
      %v1366 = vpop.f32.mrb[0].mxu0
      %v1367 = vadd.f32 0.0, %v1366
      %v1368 = vpop.f32.mrb[0].mxu0
      %1369 = vmatprep.mubr.bf16.mxu0 0
      %1370 = vmatmul.mubr.bf16.gmra.mrb[0].mxu0 %v1308
      %v1371 = vpop.f32.mrb[0].mxu0
      %v1372 = vadd.f32 0.0, %v1371
      %v1373 = vpop.f32.mrb[0].mxu0
      %v1374 = vpop.f32.mrb[0].mxu0
      %v1375 = vadd.f32 0.0, %v1374
      %v1376 = vpop.f32.mrb[0].mxu0
      %1377 = vdwg.mxu0
      %v1378 = vadd.f32 %v1251, %v1348
      %v1379 = vadd.f32 %v1252, %v1351
      %v1380 = vadd.f32 %v1253, %v1356
      %v1381 = vadd.f32 %v1254, %v1359
      %v1382 = vadd.f32 %v1255, %v1364
      %v1383 = vadd.f32 %v1256, %v1367
      %v1384 = vadd.f32 %v1257, %v1372
      %v1385 = vadd.f32 %v1258, %v1375
      %v1386 = vld [vmem:[%s1132 + $0x1] sm:$0xff]
      %v1387 = vld [vmem:[%s1132 + $0x11] sm:$0xff]
      %v1388 = vld [vmem:[%s1132 + $0x21] sm:$0xff]
      %v1389 = vld [vmem:[%s1132 + $0x31] sm:$0xff]
      %v1390 = vld [vmem:[%s1132 + $0x41] sm:$0xff]
      %v1391 = vld [vmem:[%s1132 + $0x51] sm:$0xff]
      %v1392 = vld [vmem:[%s1132 + $0x61] sm:$0xff]
      %v1393 = vld [vmem:[%s1132 + $0x71] sm:$0xff]
      %v1394 = vmul.f32 %v1386, %v391
      %v1395 = vmul.f32 %v1387, %v391
      %v1396 = vmul.f32 %v1388, %v391
      %v1397 = vmul.f32 %v1389, %v391
      %v1398 = vmul.f32 %v1390, %v391
      %v1399 = vmul.f32 %v1391, %v391
      %v1400 = vmul.f32 %v1392, %v391
      %v1401 = vmul.f32 %v1393, %v391
      %v1402 = vadd.f32 %v1394, %v405
      %v1403 = vadd.f32 %v1395, %v405
      %v1404 = vadd.f32 %v1396, %v405
      %v1405 = vadd.f32 %v1397, %v405
      %v1406 = vadd.f32 %v1398, %v405
      %v1407 = vadd.f32 %v1399, %v405
      %v1408 = vadd.f32 %v1400, %v405
      %v1409 = vadd.f32 %v1401, %v405
      %v1410 = vmax.f32 %v1402, 0.0
      %v1411 = vmax.f32 %v1403, 0.0
      %v1412 = vmax.f32 %v1404, 0.0
      %v1413 = vmax.f32 %v1405, 0.0
      %v1414 = vmax.f32 %v1406, 0.0
      %v1415 = vmax.f32 %v1407, 0.0
      %v1416 = vmax.f32 %v1408, 0.0
      %v1417 = vmax.f32 %v1409, 0.0
      %v1418 = vpack.c.bf16 %v1411, %v1410
      %v1419 = vpack.c.bf16 %v1413, %v1412
      %v1420 = vpack.c.bf16 %v1415, %v1414
      %v1421 = vpack.c.bf16 %v1417, %v1416
      %s1422 = scalar_lea.vmem %s367, 16
      %v1423 = vld [vmem:[%s1422] sm:$0x3]
      %v1425 = vsel %vm466, %v1418, 0
      %v1428 = vsel %vm466, %v1419, 0
      %v1431 = vsel %vm466, %v1420, 0
      %v1434 = vsel %vm466, %v1421, 0
      %v1437 = vsel %vm479, %v1423, 0
      %1439 = vmatprep.subr.bf16.mxu0 0
      %1440 = vmatpush1.bf16.msra.mxu0 %v1437
      %1441 = vmatprep.subr.bf16.mxu0 0
      %1442 = vmatpush1.bf16.msra.mxu0 0
      %1443 = vmatprep.subr.bf16.mxu0 0
      %1444 = vmatpush1.bf16.msra.mxu0 0
      %1445 = vmatprep.subr.bf16.mxu0 0
      %1446 = vmatpush1.bf16.msra.mxu0 0
      %1447 = vmatprep.subr.bf16.mxu0 0
      %1448 = vmatpush1.bf16.msra.mxu0 0
      %1449 = vmatprep.subr.bf16.mxu0 0
      %1450 = vmatpush1.bf16.msra.mxu0 0
      %1451 = vmatprep.subr.bf16.mxu0 0
      %1452 = vmatpush1.bf16.msra.mxu0 0
      %1453 = vmatprep.subr.bf16.mxu0 0
      %1454 = vmatpush1.bf16.msra.mxu0 0
      %1455 = vmatprep.subr.bf16.mxu0 0
      %1456 = vmatpush1.bf16.msra.mxu0 0
      %1457 = vmatprep.subr.bf16.mxu0 0
      %1458 = vmatpush1.bf16.msra.mxu0 0
      %1459 = vmatprep.subr.bf16.mxu0 0
      %1460 = vmatpush1.bf16.msra.mxu0 0
      %1461 = vmatprep.subr.bf16.mxu0 0
      %1462 = vmatpush1.bf16.msra.mxu0 0
      %1463 = vmatprep.subr.bf16.mxu0 0
      %1464 = vmatpush1.bf16.msra.mxu0 0
      %1465 = vmatprep.subr.bf16.mxu0 0
      %1466 = vmatpush1.bf16.msra.mxu0 0
      %1467 = vmatprep.subr.bf16.mxu0 0
      %1468 = vmatpush1.bf16.msra.mxu0 0
      %1469 = vmatprep.subr.bf16.mxu0 0
      %1470 = vmatpush1.bf16.msra.mxu0 0
      %1471 = vmatprep.mubr.bf16.mxu0 0
      %1472 = vmatmul.mubr.bf16.gmra.mrb[0].mxu0 %v1425
      %v1473 = vpop.f32.mrb[0].mxu0
      %v1474 = vadd.f32 0.0, %v1473
      %v1475 = vpop.f32.mrb[0].mxu0
      %v1476 = vpop.f32.mrb[0].mxu0
      %v1477 = vadd.f32 0.0, %v1476
      %v1478 = vpop.f32.mrb[0].mxu0
      %1479 = vmatprep.mubr.bf16.mxu0 0
      %1480 = vmatmul.mubr.bf16.gmra.mrb[0].mxu0 %v1428
      %v1481 = vpop.f32.mrb[0].mxu0
      %v1482 = vadd.f32 0.0, %v1481
      %v1483 = vpop.f32.mrb[0].mxu0
      %v1484 = vpop.f32.mrb[0].mxu0
      %v1485 = vadd.f32 0.0, %v1484
      %v1486 = vpop.f32.mrb[0].mxu0
      %1487 = vmatprep.mubr.bf16.mxu0 0
      %1488 = vmatmul.mubr.bf16.gmra.mrb[0].mxu0 %v1431
      %v1489 = vpop.f32.mrb[0].mxu0
      %v1490 = vadd.f32 0.0, %v1489
      %v1491 = vpop.f32.mrb[0].mxu0
      %v1492 = vpop.f32.mrb[0].mxu0
      %v1493 = vadd.f32 0.0, %v1492
      %v1494 = vpop.f32.mrb[0].mxu0
      %1495 = vmatprep.mubr.bf16.mxu0 0
      %1496 = vmatmul.mubr.bf16.gmra.mrb[0].mxu0 %v1434
      %v1497 = vpop.f32.mrb[0].mxu0
      %v1498 = vadd.f32 0.0, %v1497
      %v1499 = vpop.f32.mrb[0].mxu0
      %v1500 = vpop.f32.mrb[0].mxu0
      %v1501 = vadd.f32 0.0, %v1500
      %v1502 = vpop.f32.mrb[0].mxu0
      %1503 = vdwg.mxu0
      %v1504 = vadd.f32 %v1378, %v1474
      %v1505 = vadd.f32 %v1379, %v1477
      %v1506 = vadd.f32 %v1380, %v1482
      %v1507 = vadd.f32 %v1381, %v1485
      %v1508 = vadd.f32 %v1382, %v1490
      %v1509 = vadd.f32 %v1383, %v1493
      %v1510 = vadd.f32 %v1384, %v1498
      %v1511 = vadd.f32 %v1385, %v1501
      %vm1512 = vcmask 64512
      %1513 = vst.msk [vmem:[%s375] sm:$0xff] %vm1512, %v1504
      %1514 = vst.msk [vmem:[%s375 + $0x8] sm:$0xff] %vm1512, %v1505
      %1515 = vst.msk [vmem:[%s375 + $0x10] sm:$0xff] %vm1512, %v1506
      %1516 = vst.msk [vmem:[%s375 + $0x18] sm:$0xff] %vm1512, %v1507
      %1517 = vst.msk [vmem:[%s375 + $0x20] sm:$0xff] %vm1512, %v1508
      %1518 = vst.msk [vmem:[%s375 + $0x28] sm:$0xff] %vm1512, %v1509
      %1519 = vst.msk [vmem:[%s375 + $0x30] sm:$0xff] %vm1512, %v1510
      %1520 = vst.msk [vmem:[%s375 + $0x38] sm:$0xff] %vm1512, %v1511
      %p1521 = scmp.lt.s32.totalorder %s22, 1
      %s1522 = scalar_select %p1521, %s22, 1
      %p1523 = scmp.lt.s32.totalorder %s23, 0
      %s1524 = scalar_select %p1523, %s23, 0
      %s1525 = smul.addr %s1522, 8
      %s1526 = sadd.s32 %s1524, %s1525
      %s1527 = smul.addr %s1526, 8
      %s1528 = scalar_lea.vmem %s7, %s1527
      // Predicated region
      $region49: #{network_block_forward.5} parent=47 // pred_check
        %p1529 = pneg %p222
      $region50: #{network_block_forward.5} parent=47 // pred_check_branch
        %1531 = sbr.rel (%p1529) target = $region52
      $region51: #{network_block_forward.5} parent=47 // pred_region
        _
      $region52: #{network_block_forward.5} parent=47 // pred_fallthru
        _
    $region48: #{network_block_forward.5} parent=5 // pred_fallthru
      _
    %p1532 = scmp.le.s32.totalorder 2, %s13
    // Predicated region
    $region53: #{network_block_forward.5} parent=5 // pred_check
      %p1533 = pneg %p1532
    $region54: #{network_block_forward.5} parent=5 // pred_check_branch
      %1535 = sbr.rel (%p1533) target = $region56
    $region55: #{network_block_forward.5} parent=5 // pred_region
      %s1536 = ssub.s32 %s13, 2
      // Predicated region
      $region57: #{network_block_forward.5} parent=55 // pred_check
        %p1537 = pneg %p228
      $region58: #{network_block_forward.5} parent=55 // pred_check_branch
        %1539 = sbr.rel (%p1537) target = $region60
      $region59: #{network_block_forward.5} parent=55 // pred_region
        %p1540 = scmp.lt.s32.totalorder %s24, 1
        %s1541 = scalar_select %p1540, %s24, 1
        %p1542 = scmp.lt.s32.totalorder %s25, 0
        %s1543 = scalar_select %p1542, %s25, 0
        %s1544 = smul.addr %s1541, 8
        %s1545 = sadd.s32 %s1543, %s1544
        %s1546 = smul.addr %s1545, 8
        %s1547 = scalar_lea.vmem %s7, %s1546
      $region60: #{network_block_forward.5} parent=55 // pred_fallthru
        _
    $region56: #{network_block_forward.5} parent=5 // pred_fallthru
      _
  $region6: #{network_block_forward.5} parent=0 // loop_footer
    %s17 = sadd.s32 1, %s13
  $region7: #{network_block_forward.5} parent=0 // loop_footer_branch
    %12 = sbr.rel target = $region3
  $region8: #{network_block_forward.5} parent=0 // loop_exit
    _

// kernel: network_block_forward.7
$region0: #{network_block_forward.7}
  #allocation0 [shape = 'u32[]', space=smem, size = 0x4, offset = 0x4, fixed_abs, tag = 'smem constant byte address 0x4 - core index']
  #allocation1 [shape = 'u32[144,128]{1,0:T(1,128)}', space=vmem, size = 0x12000, scoped, tag = 'internal scratch']
  %s0 = inlined_call_operand.vmem [shape: f32[2,10,10,8], index: 0, kind: input, shape index: {}]
  %s1 = inlined_call_operand.vmem [shape: bf16[9,8,8], index: 1, kind: input, shape index: {}]
  %s2 = inlined_call_operand.vmem [shape: f32[1,8], index: 2, kind: input, shape index: {}]
  %s3 = inlined_call_operand.vmem [shape: f32[1,8], index: 3, kind: input, shape index: {}]
  %s4 = inlined_call_operand.vmem [shape: f32[2,64,8], index: 4, kind: input, shape index: {}]
  %s5 = inlined_call_operand.vmem [shape: f32[2,64,8], index: 5, kind: output, shape index: {}]
  %s6 = sld [smem:[#allocation0]]
  $region53: #{network_block_forward.7} parent=0
    _
  %s8 = ssub.s32 1, %s6
  %s9 = scalar_select 0, %s8, %s6
  loop: start=0, step=1, limit=4
  $region2: #{network_block_forward.7} parent=0 // loop_pre_header
    _
  $region3: #{network_block_forward.7} parent=0 // loop_header
    %s11 = sphi 0, %s15
    %p12 = scmp.ge.s32.totalorder %s11, 4
    %s18 = sphi 0, %s30
    %s19 = sphi 0, %s26
    %s20 = sphi 0, %s18
    %s21 = sphi 0, %s19
    %s22 = sphi 0, %s20
    %s23 = sphi 0, %s21
    %s33 = sphi 0, %s35
    %s36 = sphi 0, %s33
    %s37 = sphi 0, %s36
    %s53 = sphi 0, %s37
    %s59 = sphi 0, %s61
    %s62 = sphi 0, %s59
    %s63 = sphi 0, %s62
    %s79 = sphi 0, %s63
    %s83 = sphi 0, %s83
    %s85 = sphi 0, %s83
    %s86 = sphi 0, %s85
    %s100 = sphi 0, %s86
    %s104 = sphi 0, %s104
    %s106 = sphi 0, %s104
    %s107 = sphi 0, %s106
    %s121 = sphi 0, %s107
    %s129 = sphi 0, %s131
    %s132 = sphi 0, %s129
    %s133 = sphi 0, %s132
    %s149 = sphi 0, %s133
    %s157 = sphi 0, %s159
    %s160 = sphi 0, %s157
    %s161 = sphi 0, %s160
    %s177 = sphi 0, %s161
  $region4: #{network_block_forward.7} parent=0 // loop_header_branch
    %14 = sbr.rel (%p12) target = $region8
  $region5: #{network_block_forward.7} parent=0 // loop_body
    %s16 = ssub.s32 %s11, 1
    %s17 = ssub.s32 %s11, 2
    %s24 = sadd.s32 1, %s19
    %p25 = scmp.ge.s32.totalorder %s24, 1
    %s26 = scalar_select %p25, 0, %s24
    %s27 = sadd.s32 1, %s18
    %s28 = scalar_select %p25, %s27, %s18
    %p29 = scmp.ge.s32.totalorder %s28, 2
    %s30 = scalar_select %p29, 0, %s28
    %s31 = ssub.s32 %s18, %s30
    %p32 = scmp.eq.s32.totalorder %s31, 0
    %s34 = sadd.s32 %s33, 1
    %s35 = scalar_select %p32, %s33, %s34
    %p38 = pneg %p32
    %p39 = scmp.eq.s32.totalorder %s11, 1
    %p40 = por %p38, %p39
    %p41 = scmp.ne.s32.totalorder %s33, %s36
    %p42 = scmp.eq.s32.totalorder %s11, 0
    %p43 = por %p41, %p42
    %p44 = scmp.ne.s32.totalorder %s33, %s36
    %p45 = scmp.eq.s32.totalorder %s16, 1
    %p46 = por %p44, %p45
    %p47 = scmp.ne.s32.totalorder %s36, %s37
    %p48 = scmp.eq.s32.totalorder %s16, 0
    %p49 = por %p47, %p48
    %p50 = scmp.ne.s32.totalorder %s36, %s37
    %p51 = scmp.eq.s32.totalorder %s17, 1
    %p52 = por %p50, %p51
    %p54 = scmp.ne.s32.totalorder %s37, %s53
    %p55 = scmp.eq.s32.totalorder %s17, 0
    %p56 = por %p54, %p55
    %s57 = ssub.s32 %s19, %s26
    %p58 = scmp.eq.s32.totalorder %s57, 0
    %s60 = sadd.s32 %s59, 1
    %s61 = scalar_select %p58, %s59, %s60
    %p64 = pneg %p58
    %p65 = scmp.eq.s32.totalorder %s11, 1
    %p66 = por %p64, %p65
    %p67 = scmp.ne.s32.totalorder %s59, %s62
    %p68 = scmp.eq.s32.totalorder %s11, 0
    %p69 = por %p67, %p68
    %p70 = scmp.ne.s32.totalorder %s59, %s62
    %p71 = scmp.eq.s32.totalorder %s16, 1
    %p72 = por %p70, %p71
    %p73 = scmp.ne.s32.totalorder %s62, %s63
    %p74 = scmp.eq.s32.totalorder %s16, 0
    %p75 = por %p73, %p74
    %p76 = scmp.ne.s32.totalorder %s62, %s63
    %p77 = scmp.eq.s32.totalorder %s17, 1
    %p78 = por %p76, %p77
    %p80 = scmp.ne.s32.totalorder %s63, %s79
    %p81 = scmp.eq.s32.totalorder %s17, 0
    %p82 = por %p80, %p81
    %s84 = sadd.s32 %s83, 1
    %p87 = scmp.eq.s32.totalorder %s11, 1
    %p88 = scmp.ne.s32.totalorder %s83, %s85
    %p89 = scmp.eq.s32.totalorder %s11, 0
    %p90 = por %p88, %p89
    %p91 = scmp.ne.s32.totalorder %s83, %s85
    %p92 = scmp.eq.s32.totalorder %s16, 1
    %p93 = por %p91, %p92
    %p94 = scmp.ne.s32.totalorder %s85, %s86
    %p95 = scmp.eq.s32.totalorder %s16, 0
    %p96 = por %p94, %p95
    %p97 = scmp.ne.s32.totalorder %s85, %s86
    %p98 = scmp.eq.s32.totalorder %s17, 1
    %p99 = por %p97, %p98
    %p101 = scmp.ne.s32.totalorder %s86, %s100
    %p102 = scmp.eq.s32.totalorder %s17, 0
    %p103 = por %p101, %p102
    %s105 = sadd.s32 %s104, 1
    %p108 = scmp.eq.s32.totalorder %s11, 1
    %p109 = scmp.ne.s32.totalorder %s104, %s106
    %p110 = scmp.eq.s32.totalorder %s11, 0
    %p111 = por %p109, %p110
    %p112 = scmp.ne.s32.totalorder %s104, %s106
    %p113 = scmp.eq.s32.totalorder %s16, 1
    %p114 = por %p112, %p113
    %p115 = scmp.ne.s32.totalorder %s106, %s107
    %p116 = scmp.eq.s32.totalorder %s16, 0
    %p117 = por %p115, %p116
    %p118 = scmp.ne.s32.totalorder %s106, %s107
    %p119 = scmp.eq.s32.totalorder %s17, 1
    %p120 = por %p118, %p119
    %p122 = scmp.ne.s32.totalorder %s107, %s121
    %p123 = scmp.eq.s32.totalorder %s17, 0
    %p124 = por %p122, %p123
    %s125 = ssub.s32 %s18, %s30
    %s126 = ssub.s32 %s19, %s26
    %s127 = sor.u32 %s125, %s126
    %p128 = scmp.eq.s32.totalorder %s127, 0
    %s130 = sadd.s32 %s129, 1
    %s131 = scalar_select %p128, %s129, %s130
    %p134 = pneg %p128
    %p135 = scmp.eq.s32.totalorder %s11, 1
    %p136 = por %p134, %p135
    %p137 = scmp.ne.s32.totalorder %s129, %s132
    %p138 = scmp.eq.s32.totalorder %s11, 0
    %p139 = por %p137, %p138
    %p140 = scmp.ne.s32.totalorder %s129, %s132
    %p141 = scmp.eq.s32.totalorder %s16, 1
    %p142 = por %p140, %p141
    %p143 = scmp.ne.s32.totalorder %s132, %s133
    %p144 = scmp.eq.s32.totalorder %s16, 0
    %p145 = por %p143, %p144
    %p146 = scmp.ne.s32.totalorder %s132, %s133
    %p147 = scmp.eq.s32.totalorder %s17, 1
    %p148 = por %p146, %p147
    %p150 = scmp.ne.s32.totalorder %s133, %s149
    %p151 = scmp.eq.s32.totalorder %s17, 0
    %p152 = por %p150, %p151
    %s153 = ssub.s32 %s18, %s30
    %s154 = ssub.s32 %s19, %s26
    %s155 = sor.u32 %s153, %s154
    %p156 = scmp.eq.s32.totalorder %s155, 0
    %s158 = sadd.s32 %s157, 1
    %s159 = scalar_select %p156, %s157, %s158
    %p162 = pneg %p156
    %p163 = scmp.eq.s32.totalorder %s11, 1
    %p164 = por %p162, %p163
    %p165 = scmp.ne.s32.totalorder %s157, %s160
    %p166 = scmp.eq.s32.totalorder %s11, 0
    %p167 = por %p165, %p166
    %p168 = scmp.ne.s32.totalorder %s157, %s160
    %p169 = scmp.eq.s32.totalorder %s16, 1
    %p170 = por %p168, %p169
    %p171 = scmp.ne.s32.totalorder %s160, %s161
    %p172 = scmp.eq.s32.totalorder %s16, 0
    %p173 = por %p171, %p172
    %p174 = scmp.ne.s32.totalorder %s160, %s161
    %p175 = scmp.eq.s32.totalorder %s17, 1
    %p176 = por %p174, %p175
    %p178 = scmp.ne.s32.totalorder %s161, %s177
    %p179 = scmp.eq.s32.totalorder %s17, 0
    %p180 = por %p178, %p179
    %p181 = scmp.le.s32.totalorder 1, %s11
    %p182 = scmp.lt.s32.totalorder %s11, 3
    %p183 = pnand %p181, %p182
    %p184 = pneg %p183
    // Predicated region
    $region9: #{network_block_forward.7} parent=5 // pred_check
      _
    $region10: #{network_block_forward.7} parent=5 // pred_check_branch
      %186 = sbr.rel (%p183) target = $region12
    $region11: #{network_block_forward.7} parent=5 // pred_region
      %s187 = ssub.s32 %s11, 1
      // Predicated region
      $region13: #{network_block_forward.7} parent=11 // pred_check
        %p188 = pneg %p75
      $region14: #{network_block_forward.7} parent=11 // pred_check_branch
        %190 = sbr.rel (%p188) target = $region16
      $region15: #{network_block_forward.7} parent=11 // pred_region
        %p191 = scmp.lt.s32.totalorder %s21, 0
        %s192 = scalar_select %p191, %s21, 0
        %s193 = smul.addr %s192, 4
        %s194 = scalar_lea.vmem %s1, %s193
      $region16: #{network_block_forward.7} parent=11 // pred_fallthru
        _
      // Predicated region
      $region17: #{network_block_forward.7} parent=11 // pred_check
        %p195 = pneg %p96
      $region18: #{network_block_forward.7} parent=11 // pred_check_branch
        %197 = sbr.rel (%p195) target = $region20
      $region19: #{network_block_forward.7} parent=11 // pred_region
        _
      $region20: #{network_block_forward.7} parent=11 // pred_fallthru
        _
      // Predicated region
      $region21: #{network_block_forward.7} parent=11 // pred_check
        %p198 = pneg %p117
      $region22: #{network_block_forward.7} parent=11 // pred_check_branch
        %200 = sbr.rel (%p198) target = $region24
      $region23: #{network_block_forward.7} parent=11 // pred_region
        _
      $region24: #{network_block_forward.7} parent=11 // pred_fallthru
        _
    $region12: #{network_block_forward.7} parent=5 // pred_fallthru
      _
    %p201 = scmp.lt.s32.totalorder %s11, 2
    // Predicated region
    $region25: #{network_block_forward.7} parent=5 // pred_check
      %p202 = pneg %p201
    $region26: #{network_block_forward.7} parent=5 // pred_check_branch
      %204 = sbr.rel (%p202) target = $region28
    $region27: #{network_block_forward.7} parent=5 // pred_region
      // Predicated region
      $region29: #{network_block_forward.7} parent=27 // pred_check
        %p205 = pneg %p43
      $region30: #{network_block_forward.7} parent=27 // pred_check_branch
        %207 = sbr.rel (%p205) target = $region32
      $region31: #{network_block_forward.7} parent=27 // pred_region
        %p208 = scmp.lt.s32.totalorder %s18, 1
        %s209 = scalar_select %p208, %s18, 1
        %s210 = smul.addr %s209, 20
        %s211 = smul.addr %s210, 8
        %s212 = scalar_lea.vmem %s0, %s211
      $region32: #{network_block_forward.7} parent=27 // pred_fallthru
        _
      // Predicated region
      $region33: #{network_block_forward.7} parent=27 // pred_check
        %p213 = pneg %p139
      $region34: #{network_block_forward.7} parent=27 // pred_check_branch
        %215 = sbr.rel (%p213) target = $region36
      $region35: #{network_block_forward.7} parent=27 // pred_region
        %p216 = scmp.lt.s32.totalorder %s18, 1
        %s217 = scalar_select %p216, %s18, 1
        %p218 = scmp.lt.s32.totalorder %s19, 0
        %s219 = scalar_select %p218, %s19, 0
        %s220 = smul.addr %s217, 8
        %s221 = sadd.s32 %s219, %s220
        %s222 = smul.addr %s221, 8
        %s223 = scalar_lea.vmem %s4, %s222
      $region36: #{network_block_forward.7} parent=27 // pred_fallthru
        _
    $region28: #{network_block_forward.7} parent=5 // pred_fallthru
      _
    %p224 = scmp.le.s32.totalorder 1, %s11
    %p225 = scmp.lt.s32.totalorder %s11, 3
    %p226 = pnand %p224, %p225
    %p227 = pneg %p226
    // Predicated region
    $region37: #{network_block_forward.7} parent=5 // pred_check
      _
    $region38: #{network_block_forward.7} parent=5 // pred_check_branch
      %229 = sbr.rel (%p226) target = $region40
    $region39: #{network_block_forward.7} parent=5 // pred_region
      %s230 = ssub.s32 %s11, 1
      %p231 = scmp.lt.s32.totalorder %s20, 1
      %s232 = scalar_select %p231, %s20, 1
      %s233 = smul.addr %s232, 20
      %s234 = smul.addr %s233, 8
      %s235 = scalar_lea.vmem %s0, %s234
      %p236 = pneg %p49
      %p237 = pneg %p46
      %p238 = scmp.lt.s32.totalorder %s21, 0
      %s239 = scalar_select %p238, %s21, 0
      %s240 = smul.addr %s239, 4
      %s241 = scalar_lea.vmem %s1, %s240
      %p242 = pneg %p75
      %p243 = pneg %p72
      %p244 = pneg %p96
      %p245 = pneg %p93
      %p246 = pneg %p117
      %p247 = pneg %p114
      %p248 = scmp.lt.s32.totalorder %s20, 1
      %s249 = scalar_select %p248, %s20, 1
      %p250 = scmp.lt.s32.totalorder %s21, 0
      %s251 = scalar_select %p250, %s21, 0
      %s252 = smul.addr %s249, 8
      %s253 = sadd.s32 %s251, %s252
      %s254 = smul.addr %s253, 8
      %s255 = scalar_lea.vmem %s4, %s254
      %p256 = pneg %p145
      %p257 = pneg %p142
      %p258 = pneg %p173
      %p259 = pneg %p170
      %p260 = scmp.lt.s32.totalorder %s20, 1
      %s261 = scalar_select %p260, %s20, 1
      %p262 = scmp.lt.s32.totalorder %s21, 0
      %s263 = scalar_select %p262, %s21, 0
      %s264 = smul.addr %s261, 8
      %s265 = sadd.s32 %s263, %s264
      %s266 = smul.addr %s265, 8
      %s267 = scalar_lea.vmem %s5, %s266
      %p268 = scmp.lt.s32.totalorder %s20, 1
      %s269 = scalar_select %p268, %s20, 1
      %s270 = smul.addr %s269, 20
      %s271 = smul.addr %s270, 8
      %s272 = scalar_lea.vmem %s0, %s271
      %p273 = scmp.lt.s32.totalorder %s21, 0
      %s274 = scalar_select %p273, %s21, 0
      %s275 = smul.addr %s274, 4
      %s276 = scalar_lea.vmem %s1, %s275
      %p277 = scmp.lt.s32.totalorder %s20, 1
      %s278 = scalar_select %p277, %s20, 1
      %p279 = scmp.lt.s32.totalorder %s21, 0
      %s280 = scalar_select %p279, %s21, 0
      %s281 = smul.addr %s278, 8
      %s282 = sadd.s32 %s280, %s281
      %s283 = smul.addr %s282, 8
      %s284 = scalar_lea.vmem %s4, %s283
      %p285 = scmp.lt.s32.totalorder %s20, 1
      %s286 = scalar_select %p285, %s20, 1
      %p287 = scmp.lt.s32.totalorder %s21, 0
      %s288 = scalar_select %p287, %s21, 0
      %s289 = smul.addr %s286, 8
      %s290 = sadd.s32 %s288, %s289
      %s291 = smul.addr %s290, 8
      %s292 = scalar_lea.vmem %s5, %s291
      %v294 = vld [vmem:[%s284] sm:$0xff]
      %v295 = vld [vmem:[%s284 + $0x8] sm:$0xff]
      %v296 = vld [vmem:[%s284 + $0x10] sm:$0xff]
      %v297 = vld [vmem:[%s284 + $0x18] sm:$0xff]
      %v298 = vld [vmem:[%s284 + $0x20] sm:$0xff]
      %v299 = vld [vmem:[%s284 + $0x28] sm:$0xff]
      %v300 = vld [vmem:[%s284 + $0x30] sm:$0xff]
      %v301 = vld [vmem:[%s284 + $0x38] sm:$0xff]
      %v302 = vld [vmem:[%s2] sm:$0x1]
      %v303 = vld [vmem:[%s3] sm:$0x1]
      %v304 = vld [vmem:[%s272] sm:$0xff]
      %v305 = vld [vmem:[%s272 + $0x10] sm:$0xff]
      %v306 = vld [vmem:[%s272 + $0x20] sm:$0xff]
      %v307 = vld [vmem:[%s272 + $0x30] sm:$0xff]
      %v308 = vld [vmem:[%s272 + $0x40] sm:$0xff]
      %v309 = vld [vmem:[%s272 + $0x50] sm:$0xff]
      %v310 = vld [vmem:[%s272 + $0x60] sm:$0xff]
      %v311 = vld [vmem:[%s272 + $0x70] sm:$0xff]
      %v313 = vlaneseq
      %v314 = vshrl.u32 %v313, 7
      %v315 = vsub.s32 0, %v314
      %v316 = vrot.slane %v302, %v315
      %v318 = vmul.f32 %v304, %v316
      %v319 = vmul.f32 %v305, %v316
      %v320 = vmul.f32 %v306, %v316
      %v321 = vmul.f32 %v307, %v316
      %v322 = vmul.f32 %v308, %v316
      %v323 = vmul.f32 %v309, %v316
      %v324 = vmul.f32 %v310, %v316
      %v325 = vmul.f32 %v311, %v316
      %v327 = vlaneseq
      %v328 = vshrl.u32 %v327, 7
      %v329 = vsub.s32 0, %v328
      %v330 = vrot.slane %v303, %v329
      %v332 = vadd.f32 %v318, %v330
      %v333 = vadd.f32 %v319, %v330
      %v334 = vadd.f32 %v320, %v330
      %v335 = vadd.f32 %v321, %v330
      %v336 = vadd.f32 %v322, %v330
      %v337 = vadd.f32 %v323, %v330
      %v338 = vadd.f32 %v324, %v330
      %v339 = vadd.f32 %v325, %v330
      %v340 = vmax.f32 %v332, 0.0
      %v341 = vmax.f32 %v333, 0.0
      %v342 = vmax.f32 %v334, 0.0
      %v343 = vmax.f32 %v335, 0.0
      %v344 = vmax.f32 %v336, 0.0
      %v345 = vmax.f32 %v337, 0.0
      %v346 = vmax.f32 %v338, 0.0
      %v347 = vmax.f32 %v339, 0.0
      %v348 = vpack.c.bf16 %v341, %v340
      %v349 = vpack.c.bf16 %v343, %v342
      %v350 = vpack.c.bf16 %v345, %v344
      %v351 = vpack.c.bf16 %v347, %v346
      %v352 = vld [vmem:[%s276] sm:$0xf]
      %vm353 = vcmask 64512
      %v355 = vsel %vm353, %v348, 0
      %v358 = vsel %vm353, %v349, 0
      %v361 = vsel %vm353, %v350, 0
      %v364 = vsel %vm353, %v351, 0
      %vm366 = vcmask 1043456
      %v368 = vsel %vm366, %v352, 0
      %370 = vmatprep.subr.bf16.mxu0 0
      %371 = vmatpush1.bf16.msra.mxu0 %v368
      %372 = vmatprep.subr.bf16.mxu0 0
      %373 = vmatpush1.bf16.msra.mxu0 0
      %374 = vmatprep.subr.bf16.mxu0 0
      %375 = vmatpush1.bf16.msra.mxu0 0
      %376 = vmatprep.subr.bf16.mxu0 0
      %377 = vmatpush1.bf16.msra.mxu0 0
      %378 = vmatprep.subr.bf16.mxu0 0
      %379 = vmatpush1.bf16.msra.mxu0 0
      %380 = vmatprep.subr.bf16.mxu0 0
      %381 = vmatpush1.bf16.msra.mxu0 0
      %382 = vmatprep.subr.bf16.mxu0 0
      %383 = vmatpush1.bf16.msra.mxu0 0
      %384 = vmatprep.subr.bf16.mxu0 0
      %385 = vmatpush1.bf16.msra.mxu0 0
      %386 = vmatprep.subr.bf16.mxu0 0
      %387 = vmatpush1.bf16.msra.mxu0 0
      %388 = vmatprep.subr.bf16.mxu0 0
      %389 = vmatpush1.bf16.msra.mxu0 0
      %390 = vmatprep.subr.bf16.mxu0 0
      %391 = vmatpush1.bf16.msra.mxu0 0
      %392 = vmatprep.subr.bf16.mxu0 0
      %393 = vmatpush1.bf16.msra.mxu0 0
      %394 = vmatprep.subr.bf16.mxu0 0
      %395 = vmatpush1.bf16.msra.mxu0 0
      %396 = vmatprep.subr.bf16.mxu0 0
      %397 = vmatpush1.bf16.msra.mxu0 0
      %398 = vmatprep.subr.bf16.mxu0 0
      %399 = vmatpush1.bf16.msra.mxu0 0
      %400 = vmatprep.subr.bf16.mxu0 0
      %401 = vmatpush1.bf16.msra.mxu0 0
      %402 = vmatprep.mubr.bf16.mxu0 0
      %403 = vmatmul.mubr.bf16.gmra.mrb[0].mxu0 %v355
      %v404 = vpop.f32.mrb[0].mxu0
      %v405 = vadd.f32 0.0, %v404
      %v406 = vpop.f32.mrb[0].mxu0
      %v407 = vpop.f32.mrb[0].mxu0
      %v408 = vadd.f32 0.0, %v407
      %v409 = vpop.f32.mrb[0].mxu0
      %410 = vmatprep.mubr.bf16.mxu0 0
      %411 = vmatmul.mubr.bf16.gmra.mrb[0].mxu0 %v358
      %v412 = vpop.f32.mrb[0].mxu0
      %v413 = vadd.f32 0.0, %v412
      %v414 = vpop.f32.mrb[0].mxu0
      %v415 = vpop.f32.mrb[0].mxu0
      %v416 = vadd.f32 0.0, %v415
      %v417 = vpop.f32.mrb[0].mxu0
      %418 = vmatprep.mubr.bf16.mxu0 0
      %419 = vmatmul.mubr.bf16.gmra.mrb[0].mxu0 %v361
      %v420 = vpop.f32.mrb[0].mxu0
      %v421 = vadd.f32 0.0, %v420
      %v422 = vpop.f32.mrb[0].mxu0
      %v423 = vpop.f32.mrb[0].mxu0
      %v424 = vadd.f32 0.0, %v423
      %v425 = vpop.f32.mrb[0].mxu0
      %426 = vmatprep.mubr.bf16.mxu0 0
      %427 = vmatmul.mubr.bf16.gmra.mrb[0].mxu0 %v364
      %v428 = vpop.f32.mrb[0].mxu0
      %v429 = vadd.f32 0.0, %v428
      %v430 = vpop.f32.mrb[0].mxu0
      %v431 = vpop.f32.mrb[0].mxu0
      %v432 = vadd.f32 0.0, %v431
      %v433 = vpop.f32.mrb[0].mxu0
      %434 = vdwg.mxu0
      %v435 = vadd.f32 %v294, %v405
      %v436 = vadd.f32 %v295, %v408
      %v437 = vadd.f32 %v296, %v413
      %v438 = vadd.f32 %v297, %v416
      %v439 = vadd.f32 %v298, %v421
      %v440 = vadd.f32 %v299, %v424
      %v441 = vadd.f32 %v300, %v429
      %v442 = vadd.f32 %v301, %v432
      %v443 = vld [vmem:[%s272 + $0x1] sm:$0xff]
      %v444 = vld [vmem:[%s272 + $0x11] sm:$0xff]
      %v445 = vld [vmem:[%s272 + $0x21] sm:$0xff]
      %v446 = vld [vmem:[%s272 + $0x31] sm:$0xff]
      %v447 = vld [vmem:[%s272 + $0x41] sm:$0xff]
      %v448 = vld [vmem:[%s272 + $0x51] sm:$0xff]
      %v449 = vld [vmem:[%s272 + $0x61] sm:$0xff]
      %v450 = vld [vmem:[%s272 + $0x71] sm:$0xff]
      %v451 = vmul.f32 %v443, %v316
      %v452 = vmul.f32 %v444, %v316
      %v453 = vmul.f32 %v445, %v316
      %v454 = vmul.f32 %v446, %v316
      %v455 = vmul.f32 %v447, %v316
      %v456 = vmul.f32 %v448, %v316
      %v457 = vmul.f32 %v449, %v316
      %v458 = vmul.f32 %v450, %v316
      %v459 = vadd.f32 %v451, %v330
      %v460 = vadd.f32 %v452, %v330
      %v461 = vadd.f32 %v453, %v330
      %v462 = vadd.f32 %v454, %v330
      %v463 = vadd.f32 %v455, %v330
      %v464 = vadd.f32 %v456, %v330
      %v465 = vadd.f32 %v457, %v330
      %v466 = vadd.f32 %v458, %v330
      %v467 = vmax.f32 %v459, 0.0
      %v468 = vmax.f32 %v460, 0.0
      %v469 = vmax.f32 %v461, 0.0
      %v470 = vmax.f32 %v462, 0.0
      %v471 = vmax.f32 %v463, 0.0
      %v472 = vmax.f32 %v464, 0.0
      %v473 = vmax.f32 %v465, 0.0
      %v474 = vmax.f32 %v466, 0.0
      %v475 = vpack.c.bf16 %v468, %v467
      %v476 = vpack.c.bf16 %v470, %v469
      %v477 = vpack.c.bf16 %v472, %v471
      %v478 = vpack.c.bf16 %v474, %v473
      %s479 = scalar_lea.vmem %s276, 4
      %v480 = vld [vmem:[%s479] sm:$0xf]
      %v482 = vsel %vm353, %v475, 0
      %v485 = vsel %vm353, %v476, 0
      %v488 = vsel %vm353, %v477, 0
      %v491 = vsel %vm353, %v478, 0
      %v494 = vsel %vm366, %v480, 0
      %496 = vmatprep.subr.bf16.mxu0 0
      %497 = vmatpush1.bf16.msra.mxu0 %v494
      %498 = vmatprep.subr.bf16.mxu0 0
      %499 = vmatpush1.bf16.msra.mxu0 0
      %500 = vmatprep.subr.bf16.mxu0 0
      %501 = vmatpush1.bf16.msra.mxu0 0
      %502 = vmatprep.subr.bf16.mxu0 0
      %503 = vmatpush1.bf16.msra.mxu0 0
      %504 = vmatprep.subr.bf16.mxu0 0
      %505 = vmatpush1.bf16.msra.mxu0 0
      %506 = vmatprep.subr.bf16.mxu0 0
      %507 = vmatpush1.bf16.msra.mxu0 0
      %508 = vmatprep.subr.bf16.mxu0 0
      %509 = vmatpush1.bf16.msra.mxu0 0
      %510 = vmatprep.subr.bf16.mxu0 0
      %511 = vmatpush1.bf16.msra.mxu0 0
      %512 = vmatprep.subr.bf16.mxu0 0
      %513 = vmatpush1.bf16.msra.mxu0 0
      %514 = vmatprep.subr.bf16.mxu0 0
      %515 = vmatpush1.bf16.msra.mxu0 0
      %516 = vmatprep.subr.bf16.mxu0 0
      %517 = vmatpush1.bf16.msra.mxu0 0
      %518 = vmatprep.subr.bf16.mxu0 0
      %519 = vmatpush1.bf16.msra.mxu0 0
      %520 = vmatprep.subr.bf16.mxu0 0
      %521 = vmatpush1.bf16.msra.mxu0 0
      %522 = vmatprep.subr.bf16.mxu0 0
      %523 = vmatpush1.bf16.msra.mxu0 0
      %524 = vmatprep.subr.bf16.mxu0 0
      %525 = vmatpush1.bf16.msra.mxu0 0
      %526 = vmatprep.subr.bf16.mxu0 0
      %527 = vmatpush1.bf16.msra.mxu0 0
      %528 = vmatprep.mubr.bf16.mxu0 0
      %529 = vmatmul.mubr.bf16.gmra.mrb[0].mxu0 %v482
      %v530 = vpop.f32.mrb[0].mxu0
      %v531 = vadd.f32 0.0, %v530
      %v532 = vpop.f32.mrb[0].mxu0
      %v533 = vpop.f32.mrb[0].mxu0
      %v534 = vadd.f32 0.0, %v533
      %v535 = vpop.f32.mrb[0].mxu0
      %536 = vmatprep.mubr.bf16.mxu0 0
      %537 = vmatmul.mubr.bf16.gmra.mrb[0].mxu0 %v485
      %v538 = vpop.f32.mrb[0].mxu0
      %v539 = vadd.f32 0.0, %v538
      %v540 = vpop.f32.mrb[0].mxu0
      %v541 = vpop.f32.mrb[0].mxu0
      %v542 = vadd.f32 0.0, %v541
      %v543 = vpop.f32.mrb[0].mxu0
      %544 = vmatprep.mubr.bf16.mxu0 0
      %545 = vmatmul.mubr.bf16.gmra.mrb[0].mxu0 %v488
      %v546 = vpop.f32.mrb[0].mxu0
      %v547 = vadd.f32 0.0, %v546
      %v548 = vpop.f32.mrb[0].mxu0
      %v549 = vpop.f32.mrb[0].mxu0
      %v550 = vadd.f32 0.0, %v549
      %v551 = vpop.f32.mrb[0].mxu0
      %552 = vmatprep.mubr.bf16.mxu0 0
      %553 = vmatmul.mubr.bf16.gmra.mrb[0].mxu0 %v491
      %v554 = vpop.f32.mrb[0].mxu0
      %v555 = vadd.f32 0.0, %v554
      %v556 = vpop.f32.mrb[0].mxu0
      %v557 = vpop.f32.mrb[0].mxu0
      %v558 = vadd.f32 0.0, %v557
      %v559 = vpop.f32.mrb[0].mxu0
      %560 = vdwg.mxu0
      %v561 = vadd.f32 %v435, %v531
      %v562 = vadd.f32 %v436, %v534
      %v563 = vadd.f32 %v437, %v539
      %v564 = vadd.f32 %v438, %v542
      %v565 = vadd.f32 %v439, %v547
      %v566 = vadd.f32 %v440, %v550
      %v567 = vadd.f32 %v441, %v555
      %v568 = vadd.f32 %v442, %v558
      %v569 = vld [vmem:[%s272 + $0x2] sm:$0xff]
      %v570 = vld [vmem:[%s272 + $0x12] sm:$0xff]
      %v571 = vld [vmem:[%s272 + $0x22] sm:$0xff]
      %v572 = vld [vmem:[%s272 + $0x32] sm:$0xff]
      %v573 = vld [vmem:[%s272 + $0x42] sm:$0xff]
      %v574 = vld [vmem:[%s272 + $0x52] sm:$0xff]
      %v575 = vld [vmem:[%s272 + $0x62] sm:$0xff]
      %v576 = vld [vmem:[%s272 + $0x72] sm:$0xff]
      %v577 = vmul.f32 %v569, %v316
      %v578 = vmul.f32 %v570, %v316
      %v579 = vmul.f32 %v571, %v316
      %v580 = vmul.f32 %v572, %v316
      %v581 = vmul.f32 %v573, %v316
      %v582 = vmul.f32 %v574, %v316
      %v583 = vmul.f32 %v575, %v316
      %v584 = vmul.f32 %v576, %v316
      %v585 = vadd.f32 %v577, %v330
      %v586 = vadd.f32 %v578, %v330
      %v587 = vadd.f32 %v579, %v330
      %v588 = vadd.f32 %v580, %v330
      %v589 = vadd.f32 %v581, %v330
      %v590 = vadd.f32 %v582, %v330
      %v591 = vadd.f32 %v583, %v330
      %v592 = vadd.f32 %v584, %v330
      %v593 = vmax.f32 %v585, 0.0
      %v594 = vmax.f32 %v586, 0.0
      %v595 = vmax.f32 %v587, 0.0
      %v596 = vmax.f32 %v588, 0.0
      %v597 = vmax.f32 %v589, 0.0
      %v598 = vmax.f32 %v590, 0.0
      %v599 = vmax.f32 %v591, 0.0
      %v600 = vmax.f32 %v592, 0.0
      %v601 = vpack.c.bf16 %v594, %v593
      %v602 = vpack.c.bf16 %v596, %v595
      %v603 = vpack.c.bf16 %v598, %v597
      %v604 = vpack.c.bf16 %v600, %v599
      %s605 = scalar_lea.vmem %s276, 8
      %v606 = vld [vmem:[%s605] sm:$0xf]
      %v608 = vsel %vm353, %v601, 0
      %v611 = vsel %vm353, %v602, 0
      %v614 = vsel %vm353, %v603, 0
      %v617 = vsel %vm353, %v604, 0
      %v620 = vsel %vm366, %v606, 0
      %622 = vmatprep.subr.bf16.mxu0 0
      %623 = vmatpush1.bf16.msra.mxu0 %v620
      %624 = vmatprep.subr.bf16.mxu0 0
      %625 = vmatpush1.bf16.msra.mxu0 0
      %626 = vmatprep.subr.bf16.mxu0 0
      %627 = vmatpush1.bf16.msra.mxu0 0
      %628 = vmatprep.subr.bf16.mxu0 0
      %629 = vmatpush1.bf16.msra.mxu0 0
      %630 = vmatprep.subr.bf16.mxu0 0
      %631 = vmatpush1.bf16.msra.mxu0 0
      %632 = vmatprep.subr.bf16.mxu0 0
      %633 = vmatpush1.bf16.msra.mxu0 0
      %634 = vmatprep.subr.bf16.mxu0 0
      %635 = vmatpush1.bf16.msra.mxu0 0
      %636 = vmatprep.subr.bf16.mxu0 0
      %637 = vmatpush1.bf16.msra.mxu0 0
      %638 = vmatprep.subr.bf16.mxu0 0
      %639 = vmatpush1.bf16.msra.mxu0 0
      %640 = vmatprep.subr.bf16.mxu0 0
      %641 = vmatpush1.bf16.msra.mxu0 0
      %642 = vmatprep.subr.bf16.mxu0 0
      %643 = vmatpush1.bf16.msra.mxu0 0
      %644 = vmatprep.subr.bf16.mxu0 0
      %645 = vmatpush1.bf16.msra.mxu0 0
      %646 = vmatprep.subr.bf16.mxu0 0
      %647 = vmatpush1.bf16.msra.mxu0 0
      %648 = vmatprep.subr.bf16.mxu0 0
      %649 = vmatpush1.bf16.msra.mxu0 0
      %650 = vmatprep.subr.bf16.mxu0 0
      %651 = vmatpush1.bf16.msra.mxu0 0
      %652 = vmatprep.subr.bf16.mxu0 0
      %653 = vmatpush1.bf16.msra.mxu0 0
      %654 = vmatprep.mubr.bf16.mxu0 0
      %655 = vmatmul.mubr.bf16.gmra.mrb[0].mxu0 %v608
      %v656 = vpop.f32.mrb[0].mxu0
      %v657 = vadd.f32 0.0, %v656
      %v658 = vpop.f32.mrb[0].mxu0
      %v659 = vpop.f32.mrb[0].mxu0
      %v660 = vadd.f32 0.0, %v659
      %v661 = vpop.f32.mrb[0].mxu0
      %662 = vmatprep.mubr.bf16.mxu0 0
      %663 = vmatmul.mubr.bf16.gmra.mrb[0].mxu0 %v611
      %v664 = vpop.f32.mrb[0].mxu0
      %v665 = vadd.f32 0.0, %v664
      %v666 = vpop.f32.mrb[0].mxu0
      %v667 = vpop.f32.mrb[0].mxu0
      %v668 = vadd.f32 0.0, %v667
      %v669 = vpop.f32.mrb[0].mxu0
      %670 = vmatprep.mubr.bf16.mxu0 0
      %671 = vmatmul.mubr.bf16.gmra.mrb[0].mxu0 %v614
      %v672 = vpop.f32.mrb[0].mxu0
      %v673 = vadd.f32 0.0, %v672
      %v674 = vpop.f32.mrb[0].mxu0
      %v675 = vpop.f32.mrb[0].mxu0
      %v676 = vadd.f32 0.0, %v675
      %v677 = vpop.f32.mrb[0].mxu0
      %678 = vmatprep.mubr.bf16.mxu0 0
      %679 = vmatmul.mubr.bf16.gmra.mrb[0].mxu0 %v617
      %v680 = vpop.f32.mrb[0].mxu0
      %v681 = vadd.f32 0.0, %v680
      %v682 = vpop.f32.mrb[0].mxu0
      %v683 = vpop.f32.mrb[0].mxu0
      %v684 = vadd.f32 0.0, %v683
      %v685 = vpop.f32.mrb[0].mxu0
      %686 = vdwg.mxu0
      %v687 = vadd.f32 %v561, %v657
      %v688 = vadd.f32 %v562, %v660
      %v689 = vadd.f32 %v563, %v665
      %v690 = vadd.f32 %v564, %v668
      %v691 = vadd.f32 %v565, %v673
      %v692 = vadd.f32 %v566, %v676
      %v693 = vadd.f32 %v567, %v681
      %v694 = vadd.f32 %v568, %v684
      %s695 = scalar_lea.vmem %s272, 16
      %v696 = vld [vmem:[%s695] sm:$0xff]
      %v697 = vld [vmem:[%s695 + $0x10] sm:$0xff]
      %v698 = vld [vmem:[%s695 + $0x20] sm:$0xff]
      %v699 = vld [vmem:[%s695 + $0x30] sm:$0xff]
      %v700 = vld [vmem:[%s695 + $0x40] sm:$0xff]
      %v701 = vld [vmem:[%s695 + $0x50] sm:$0xff]
      %v702 = vld [vmem:[%s695 + $0x60] sm:$0xff]
      %v703 = vld [vmem:[%s695 + $0x70] sm:$0xff]
      %v704 = vmul.f32 %v696, %v316
      %v705 = vmul.f32 %v697, %v316
      %v706 = vmul.f32 %v698, %v316
      %v707 = vmul.f32 %v699, %v316
      %v708 = vmul.f32 %v700, %v316
      %v709 = vmul.f32 %v701, %v316
      %v710 = vmul.f32 %v702, %v316
      %v711 = vmul.f32 %v703, %v316
      %v712 = vadd.f32 %v704, %v330
      %v713 = vadd.f32 %v705, %v330
      %v714 = vadd.f32 %v706, %v330
      %v715 = vadd.f32 %v707, %v330
      %v716 = vadd.f32 %v708, %v330
      %v717 = vadd.f32 %v709, %v330
      %v718 = vadd.f32 %v710, %v330
      %v719 = vadd.f32 %v711, %v330
      %v720 = vmax.f32 %v712, 0.0
      %v721 = vmax.f32 %v713, 0.0
      %v722 = vmax.f32 %v714, 0.0
      %v723 = vmax.f32 %v715, 0.0
      %v724 = vmax.f32 %v716, 0.0
      %v725 = vmax.f32 %v717, 0.0
      %v726 = vmax.f32 %v718, 0.0
      %v727 = vmax.f32 %v719, 0.0
      %v728 = vpack.c.bf16 %v721, %v720
      %v729 = vpack.c.bf16 %v723, %v722
      %v730 = vpack.c.bf16 %v725, %v724
      %v731 = vpack.c.bf16 %v727, %v726
      %s732 = scalar_lea.vmem %s276, 12
      %v733 = vld [vmem:[%s732] sm:$0xf]
      %v735 = vsel %vm353, %v728, 0
      %v738 = vsel %vm353, %v729, 0
      %v741 = vsel %vm353, %v730, 0
      %v744 = vsel %vm353, %v731, 0
      %v747 = vsel %vm366, %v733, 0
      %749 = vmatprep.subr.bf16.mxu0 0
      %750 = vmatpush1.bf16.msra.mxu0 %v747
      %751 = vmatprep.subr.bf16.mxu0 0
      %752 = vmatpush1.bf16.msra.mxu0 0
      %753 = vmatprep.subr.bf16.mxu0 0
      %754 = vmatpush1.bf16.msra.mxu0 0
      %755 = vmatprep.subr.bf16.mxu0 0
      %756 = vmatpush1.bf16.msra.mxu0 0
      %757 = vmatprep.subr.bf16.mxu0 0
      %758 = vmatpush1.bf16.msra.mxu0 0
      %759 = vmatprep.subr.bf16.mxu0 0
      %760 = vmatpush1.bf16.msra.mxu0 0
      %761 = vmatprep.subr.bf16.mxu0 0
      %762 = vmatpush1.bf16.msra.mxu0 0
      %763 = vmatprep.subr.bf16.mxu0 0
      %764 = vmatpush1.bf16.msra.mxu0 0
      %765 = vmatprep.subr.bf16.mxu0 0
      %766 = vmatpush1.bf16.msra.mxu0 0
      %767 = vmatprep.subr.bf16.mxu0 0
      %768 = vmatpush1.bf16.msra.mxu0 0
      %769 = vmatprep.subr.bf16.mxu0 0
      %770 = vmatpush1.bf16.msra.mxu0 0
      %771 = vmatprep.subr.bf16.mxu0 0
      %772 = vmatpush1.bf16.msra.mxu0 0
      %773 = vmatprep.subr.bf16.mxu0 0
      %774 = vmatpush1.bf16.msra.mxu0 0
      %775 = vmatprep.subr.bf16.mxu0 0
      %776 = vmatpush1.bf16.msra.mxu0 0
      %777 = vmatprep.subr.bf16.mxu0 0
      %778 = vmatpush1.bf16.msra.mxu0 0
      %779 = vmatprep.subr.bf16.mxu0 0
      %780 = vmatpush1.bf16.msra.mxu0 0
      %781 = vmatprep.mubr.bf16.mxu0 0
      %782 = vmatmul.mubr.bf16.gmra.mrb[0].mxu0 %v735
      %v783 = vpop.f32.mrb[0].mxu0
      %v784 = vadd.f32 0.0, %v783
      %v785 = vpop.f32.mrb[0].mxu0
      %v786 = vpop.f32.mrb[0].mxu0
      %v787 = vadd.f32 0.0, %v786
      %v788 = vpop.f32.mrb[0].mxu0
      %789 = vmatprep.mubr.bf16.mxu0 0
      %790 = vmatmul.mubr.bf16.gmra.mrb[0].mxu0 %v738
      %v791 = vpop.f32.mrb[0].mxu0
      %v792 = vadd.f32 0.0, %v791
      %v793 = vpop.f32.mrb[0].mxu0
      %v794 = vpop.f32.mrb[0].mxu0
      %v795 = vadd.f32 0.0, %v794
      %v796 = vpop.f32.mrb[0].mxu0
      %797 = vmatprep.mubr.bf16.mxu0 0
      %798 = vmatmul.mubr.bf16.gmra.mrb[0].mxu0 %v741
      %v799 = vpop.f32.mrb[0].mxu0
      %v800 = vadd.f32 0.0, %v799
      %v801 = vpop.f32.mrb[0].mxu0
      %v802 = vpop.f32.mrb[0].mxu0
      %v803 = vadd.f32 0.0, %v802
      %v804 = vpop.f32.mrb[0].mxu0
      %805 = vmatprep.mubr.bf16.mxu0 0
      %806 = vmatmul.mubr.bf16.gmra.mrb[0].mxu0 %v744
      %v807 = vpop.f32.mrb[0].mxu0
      %v808 = vadd.f32 0.0, %v807
      %v809 = vpop.f32.mrb[0].mxu0
      %v810 = vpop.f32.mrb[0].mxu0
      %v811 = vadd.f32 0.0, %v810
      %v812 = vpop.f32.mrb[0].mxu0
      %813 = vdwg.mxu0
      %v814 = vadd.f32 %v687, %v784
      %v815 = vadd.f32 %v688, %v787
      %v816 = vadd.f32 %v689, %v792
      %v817 = vadd.f32 %v690, %v795
      %v818 = vadd.f32 %v691, %v800
      %v819 = vadd.f32 %v692, %v803
      %v820 = vadd.f32 %v693, %v808
      %v821 = vadd.f32 %v694, %v811
      %v822 = vld [vmem:[%s695 + $0x1] sm:$0xff]
      %v823 = vld [vmem:[%s695 + $0x11] sm:$0xff]
      %v824 = vld [vmem:[%s695 + $0x21] sm:$0xff]
      %v825 = vld [vmem:[%s695 + $0x31] sm:$0xff]
      %v826 = vld [vmem:[%s695 + $0x41] sm:$0xff]
      %v827 = vld [vmem:[%s695 + $0x51] sm:$0xff]
      %v828 = vld [vmem:[%s695 + $0x61] sm:$0xff]
      %v829 = vld [vmem:[%s695 + $0x71] sm:$0xff]
      %v830 = vmul.f32 %v822, %v316
      %v831 = vmul.f32 %v823, %v316
      %v832 = vmul.f32 %v824, %v316
      %v833 = vmul.f32 %v825, %v316
      %v834 = vmul.f32 %v826, %v316
      %v835 = vmul.f32 %v827, %v316
      %v836 = vmul.f32 %v828, %v316
      %v837 = vmul.f32 %v829, %v316
      %v838 = vadd.f32 %v830, %v330
      %v839 = vadd.f32 %v831, %v330
      %v840 = vadd.f32 %v832, %v330
      %v841 = vadd.f32 %v833, %v330
      %v842 = vadd.f32 %v834, %v330
      %v843 = vadd.f32 %v835, %v330
      %v844 = vadd.f32 %v836, %v330
      %v845 = vadd.f32 %v837, %v330
      %v846 = vmax.f32 %v838, 0.0
      %v847 = vmax.f32 %v839, 0.0
      %v848 = vmax.f32 %v840, 0.0
      %v849 = vmax.f32 %v841, 0.0
      %v850 = vmax.f32 %v842, 0.0
      %v851 = vmax.f32 %v843, 0.0
      %v852 = vmax.f32 %v844, 0.0
      %v853 = vmax.f32 %v845, 0.0
      %v854 = vpack.c.bf16 %v847, %v846
      %v855 = vpack.c.bf16 %v849, %v848
      %v856 = vpack.c.bf16 %v851, %v850
      %v857 = vpack.c.bf16 %v853, %v852
      %s858 = scalar_lea.vmem %s276, 16
      %v859 = vld [vmem:[%s858] sm:$0xf]
      %v861 = vsel %vm353, %v854, 0
      %v864 = vsel %vm353, %v855, 0
      %v867 = vsel %vm353, %v856, 0
      %v870 = vsel %vm353, %v857, 0
      %v873 = vsel %vm366, %v859, 0
      %875 = vmatprep.subr.bf16.mxu0 0
      %876 = vmatpush1.bf16.msra.mxu0 %v873
      %877 = vmatprep.subr.bf16.mxu0 0
      %878 = vmatpush1.bf16.msra.mxu0 0
      %879 = vmatprep.subr.bf16.mxu0 0
      %880 = vmatpush1.bf16.msra.mxu0 0
      %881 = vmatprep.subr.bf16.mxu0 0
      %882 = vmatpush1.bf16.msra.mxu0 0
      %883 = vmatprep.subr.bf16.mxu0 0
      %884 = vmatpush1.bf16.msra.mxu0 0
      %885 = vmatprep.subr.bf16.mxu0 0
      %886 = vmatpush1.bf16.msra.mxu0 0
      %887 = vmatprep.subr.bf16.mxu0 0
      %888 = vmatpush1.bf16.msra.mxu0 0
      %889 = vmatprep.subr.bf16.mxu0 0
      %890 = vmatpush1.bf16.msra.mxu0 0
      %891 = vmatprep.subr.bf16.mxu0 0
      %892 = vmatpush1.bf16.msra.mxu0 0
      %893 = vmatprep.subr.bf16.mxu0 0
      %894 = vmatpush1.bf16.msra.mxu0 0
      %895 = vmatprep.subr.bf16.mxu0 0
      %896 = vmatpush1.bf16.msra.mxu0 0
      %897 = vmatprep.subr.bf16.mxu0 0
      %898 = vmatpush1.bf16.msra.mxu0 0
      %899 = vmatprep.subr.bf16.mxu0 0
      %900 = vmatpush1.bf16.msra.mxu0 0
      %901 = vmatprep.subr.bf16.mxu0 0
      %902 = vmatpush1.bf16.msra.mxu0 0
      %903 = vmatprep.subr.bf16.mxu0 0
      %904 = vmatpush1.bf16.msra.mxu0 0
      %905 = vmatprep.subr.bf16.mxu0 0
      %906 = vmatpush1.bf16.msra.mxu0 0
      %907 = vmatprep.mubr.bf16.mxu0 0
      %908 = vmatmul.mubr.bf16.gmra.mrb[0].mxu0 %v861
      %v909 = vpop.f32.mrb[0].mxu0
      %v910 = vadd.f32 0.0, %v909
      %v911 = vpop.f32.mrb[0].mxu0
      %v912 = vpop.f32.mrb[0].mxu0
      %v913 = vadd.f32 0.0, %v912
      %v914 = vpop.f32.mrb[0].mxu0
      %915 = vmatprep.mubr.bf16.mxu0 0
      %916 = vmatmul.mubr.bf16.gmra.mrb[0].mxu0 %v864
      %v917 = vpop.f32.mrb[0].mxu0
      %v918 = vadd.f32 0.0, %v917
      %v919 = vpop.f32.mrb[0].mxu0
      %v920 = vpop.f32.mrb[0].mxu0
      %v921 = vadd.f32 0.0, %v920
      %v922 = vpop.f32.mrb[0].mxu0
      %923 = vmatprep.mubr.bf16.mxu0 0
      %924 = vmatmul.mubr.bf16.gmra.mrb[0].mxu0 %v867
      %v925 = vpop.f32.mrb[0].mxu0
      %v926 = vadd.f32 0.0, %v925
      %v927 = vpop.f32.mrb[0].mxu0
      %v928 = vpop.f32.mrb[0].mxu0
      %v929 = vadd.f32 0.0, %v928
      %v930 = vpop.f32.mrb[0].mxu0
      %931 = vmatprep.mubr.bf16.mxu0 0
      %932 = vmatmul.mubr.bf16.gmra.mrb[0].mxu0 %v870
      %v933 = vpop.f32.mrb[0].mxu0
      %v934 = vadd.f32 0.0, %v933
      %v935 = vpop.f32.mrb[0].mxu0
      %v936 = vpop.f32.mrb[0].mxu0
      %v937 = vadd.f32 0.0, %v936
      %v938 = vpop.f32.mrb[0].mxu0
      %939 = vdwg.mxu0
      %v940 = vadd.f32 %v814, %v910
      %v941 = vadd.f32 %v815, %v913
      %v942 = vadd.f32 %v816, %v918
      %v943 = vadd.f32 %v817, %v921
      %v944 = vadd.f32 %v818, %v926
      %v945 = vadd.f32 %v819, %v929
      %v946 = vadd.f32 %v820, %v934
      %v947 = vadd.f32 %v821, %v937
      %v948 = vld [vmem:[%s695 + $0x2] sm:$0xff]
      %v949 = vld [vmem:[%s695 + $0x12] sm:$0xff]
      %v950 = vld [vmem:[%s695 + $0x22] sm:$0xff]
      %v951 = vld [vmem:[%s695 + $0x32] sm:$0xff]
      %v952 = vld [vmem:[%s695 + $0x42] sm:$0xff]
      %v953 = vld [vmem:[%s695 + $0x52] sm:$0xff]
      %v954 = vld [vmem:[%s695 + $0x62] sm:$0xff]
      %v955 = vld [vmem:[%s695 + $0x72] sm:$0xff]
      %v956 = vmul.f32 %v948, %v316
      %v957 = vmul.f32 %v949, %v316
      %v958 = vmul.f32 %v950, %v316
      %v959 = vmul.f32 %v951, %v316
      %v960 = vmul.f32 %v952, %v316
      %v961 = vmul.f32 %v953, %v316
      %v962 = vmul.f32 %v954, %v316
      %v963 = vmul.f32 %v955, %v316
      %v964 = vadd.f32 %v956, %v330
      %v965 = vadd.f32 %v957, %v330
      %v966 = vadd.f32 %v958, %v330
      %v967 = vadd.f32 %v959, %v330
      %v968 = vadd.f32 %v960, %v330
      %v969 = vadd.f32 %v961, %v330
      %v970 = vadd.f32 %v962, %v330
      %v971 = vadd.f32 %v963, %v330
      %v972 = vmax.f32 %v964, 0.0
      %v973 = vmax.f32 %v965, 0.0
      %v974 = vmax.f32 %v966, 0.0
      %v975 = vmax.f32 %v967, 0.0
      %v976 = vmax.f32 %v968, 0.0
      %v977 = vmax.f32 %v969, 0.0
      %v978 = vmax.f32 %v970, 0.0
      %v979 = vmax.f32 %v971, 0.0
      %v980 = vpack.c.bf16 %v973, %v972
      %v981 = vpack.c.bf16 %v975, %v974
      %v982 = vpack.c.bf16 %v977, %v976
      %v983 = vpack.c.bf16 %v979, %v978
      %s984 = scalar_lea.vmem %s276, 20
      %v985 = vld [vmem:[%s984] sm:$0xf]
      %v987 = vsel %vm353, %v980, 0
      %v990 = vsel %vm353, %v981, 0
      %v993 = vsel %vm353, %v982, 0
      %v996 = vsel %vm353, %v983, 0
      %v999 = vsel %vm366, %v985, 0
      %1001 = vmatprep.subr.bf16.mxu0 0
      %1002 = vmatpush1.bf16.msra.mxu0 %v999
      %1003 = vmatprep.subr.bf16.mxu0 0
      %1004 = vmatpush1.bf16.msra.mxu0 0
      %1005 = vmatprep.subr.bf16.mxu0 0
      %1006 = vmatpush1.bf16.msra.mxu0 0
      %1007 = vmatprep.subr.bf16.mxu0 0
      %1008 = vmatpush1.bf16.msra.mxu0 0
      %1009 = vmatprep.subr.bf16.mxu0 0
      %1010 = vmatpush1.bf16.msra.mxu0 0
      %1011 = vmatprep.subr.bf16.mxu0 0
      %1012 = vmatpush1.bf16.msra.mxu0 0
      %1013 = vmatprep.subr.bf16.mxu0 0
      %1014 = vmatpush1.bf16.msra.mxu0 0
      %1015 = vmatprep.subr.bf16.mxu0 0
      %1016 = vmatpush1.bf16.msra.mxu0 0
      %1017 = vmatprep.subr.bf16.mxu0 0
      %1018 = vmatpush1.bf16.msra.mxu0 0
      %1019 = vmatprep.subr.bf16.mxu0 0
      %1020 = vmatpush1.bf16.msra.mxu0 0
      %1021 = vmatprep.subr.bf16.mxu0 0
      %1022 = vmatpush1.bf16.msra.mxu0 0
      %1023 = vmatprep.subr.bf16.mxu0 0
      %1024 = vmatpush1.bf16.msra.mxu0 0
      %1025 = vmatprep.subr.bf16.mxu0 0
      %1026 = vmatpush1.bf16.msra.mxu0 0
      %1027 = vmatprep.subr.bf16.mxu0 0
      %1028 = vmatpush1.bf16.msra.mxu0 0
      %1029 = vmatprep.subr.bf16.mxu0 0
      %1030 = vmatpush1.bf16.msra.mxu0 0
      %1031 = vmatprep.subr.bf16.mxu0 0
      %1032 = vmatpush1.bf16.msra.mxu0 0
      %1033 = vmatprep.mubr.bf16.mxu0 0
      %1034 = vmatmul.mubr.bf16.gmra.mrb[0].mxu0 %v987
      %v1035 = vpop.f32.mrb[0].mxu0
      %v1036 = vadd.f32 0.0, %v1035
      %v1037 = vpop.f32.mrb[0].mxu0
      %v1038 = vpop.f32.mrb[0].mxu0
      %v1039 = vadd.f32 0.0, %v1038
      %v1040 = vpop.f32.mrb[0].mxu0
      %1041 = vmatprep.mubr.bf16.mxu0 0
      %1042 = vmatmul.mubr.bf16.gmra.mrb[0].mxu0 %v990
      %v1043 = vpop.f32.mrb[0].mxu0
      %v1044 = vadd.f32 0.0, %v1043
      %v1045 = vpop.f32.mrb[0].mxu0
      %v1046 = vpop.f32.mrb[0].mxu0
      %v1047 = vadd.f32 0.0, %v1046
      %v1048 = vpop.f32.mrb[0].mxu0
      %1049 = vmatprep.mubr.bf16.mxu0 0
      %1050 = vmatmul.mubr.bf16.gmra.mrb[0].mxu0 %v993
      %v1051 = vpop.f32.mrb[0].mxu0
      %v1052 = vadd.f32 0.0, %v1051
      %v1053 = vpop.f32.mrb[0].mxu0
      %v1054 = vpop.f32.mrb[0].mxu0
      %v1055 = vadd.f32 0.0, %v1054
      %v1056 = vpop.f32.mrb[0].mxu0
      %1057 = vmatprep.mubr.bf16.mxu0 0
      %1058 = vmatmul.mubr.bf16.gmra.mrb[0].mxu0 %v996
      %v1059 = vpop.f32.mrb[0].mxu0
      %v1060 = vadd.f32 0.0, %v1059
      %v1061 = vpop.f32.mrb[0].mxu0
      %v1062 = vpop.f32.mrb[0].mxu0
      %v1063 = vadd.f32 0.0, %v1062
      %v1064 = vpop.f32.mrb[0].mxu0
      %1065 = vdwg.mxu0
      %v1066 = vadd.f32 %v940, %v1036
      %v1067 = vadd.f32 %v941, %v1039
      %v1068 = vadd.f32 %v942, %v1044
      %v1069 = vadd.f32 %v943, %v1047
      %v1070 = vadd.f32 %v944, %v1052
      %v1071 = vadd.f32 %v945, %v1055
      %v1072 = vadd.f32 %v946, %v1060
      %v1073 = vadd.f32 %v947, %v1063
      %s1074 = scalar_lea.vmem %s272, 32
      %v1075 = vld [vmem:[%s1074] sm:$0xff]
      %v1076 = vld [vmem:[%s1074 + $0x10] sm:$0xff]
      %v1077 = vld [vmem:[%s1074 + $0x20] sm:$0xff]
      %v1078 = vld [vmem:[%s1074 + $0x30] sm:$0xff]
      %v1079 = vld [vmem:[%s1074 + $0x40] sm:$0xff]
      %v1080 = vld [vmem:[%s1074 + $0x50] sm:$0xff]
      %v1081 = vld [vmem:[%s1074 + $0x60] sm:$0xff]
      %v1082 = vld [vmem:[%s1074 + $0x70] sm:$0xff]
      %v1083 = vmul.f32 %v1075, %v316
      %v1084 = vmul.f32 %v1076, %v316
      %v1085 = vmul.f32 %v1077, %v316
      %v1086 = vmul.f32 %v1078, %v316
      %v1087 = vmul.f32 %v1079, %v316
      %v1088 = vmul.f32 %v1080, %v316
      %v1089 = vmul.f32 %v1081, %v316
      %v1090 = vmul.f32 %v1082, %v316
      %v1091 = vadd.f32 %v1083, %v330
      %v1092 = vadd.f32 %v1084, %v330
      %v1093 = vadd.f32 %v1085, %v330
      %v1094 = vadd.f32 %v1086, %v330
      %v1095 = vadd.f32 %v1087, %v330
      %v1096 = vadd.f32 %v1088, %v330
      %v1097 = vadd.f32 %v1089, %v330
      %v1098 = vadd.f32 %v1090, %v330
      %v1099 = vmax.f32 %v1091, 0.0
      %v1100 = vmax.f32 %v1092, 0.0
      %v1101 = vmax.f32 %v1093, 0.0
      %v1102 = vmax.f32 %v1094, 0.0
      %v1103 = vmax.f32 %v1095, 0.0
      %v1104 = vmax.f32 %v1096, 0.0
      %v1105 = vmax.f32 %v1097, 0.0
      %v1106 = vmax.f32 %v1098, 0.0
      %v1107 = vpack.c.bf16 %v1100, %v1099
      %v1108 = vpack.c.bf16 %v1102, %v1101
      %v1109 = vpack.c.bf16 %v1104, %v1103
      %v1110 = vpack.c.bf16 %v1106, %v1105
      %s1111 = scalar_lea.vmem %s276, 24
      %v1112 = vld [vmem:[%s1111] sm:$0xf]
      %v1114 = vsel %vm353, %v1107, 0
      %v1117 = vsel %vm353, %v1108, 0
      %v1120 = vsel %vm353, %v1109, 0
      %v1123 = vsel %vm353, %v1110, 0
      %v1126 = vsel %vm366, %v1112, 0
      %1128 = vmatprep.subr.bf16.mxu0 0
      %1129 = vmatpush1.bf16.msra.mxu0 %v1126
      %1130 = vmatprep.subr.bf16.mxu0 0
      %1131 = vmatpush1.bf16.msra.mxu0 0
      %1132 = vmatprep.subr.bf16.mxu0 0
      %1133 = vmatpush1.bf16.msra.mxu0 0
      %1134 = vmatprep.subr.bf16.mxu0 0
      %1135 = vmatpush1.bf16.msra.mxu0 0
      %1136 = vmatprep.subr.bf16.mxu0 0
      %1137 = vmatpush1.bf16.msra.mxu0 0
      %1138 = vmatprep.subr.bf16.mxu0 0
      %1139 = vmatpush1.bf16.msra.mxu0 0
      %1140 = vmatprep.subr.bf16.mxu0 0
      %1141 = vmatpush1.bf16.msra.mxu0 0
      %1142 = vmatprep.subr.bf16.mxu0 0
      %1143 = vmatpush1.bf16.msra.mxu0 0
      %1144 = vmatprep.subr.bf16.mxu0 0
      %1145 = vmatpush1.bf16.msra.mxu0 0
      %1146 = vmatprep.subr.bf16.mxu0 0
      %1147 = vmatpush1.bf16.msra.mxu0 0
      %1148 = vmatprep.subr.bf16.mxu0 0
      %1149 = vmatpush1.bf16.msra.mxu0 0
      %1150 = vmatprep.subr.bf16.mxu0 0
      %1151 = vmatpush1.bf16.msra.mxu0 0
      %1152 = vmatprep.subr.bf16.mxu0 0
      %1153 = vmatpush1.bf16.msra.mxu0 0
      %1154 = vmatprep.subr.bf16.mxu0 0
      %1155 = vmatpush1.bf16.msra.mxu0 0
      %1156 = vmatprep.subr.bf16.mxu0 0
      %1157 = vmatpush1.bf16.msra.mxu0 0
      %1158 = vmatprep.subr.bf16.mxu0 0
      %1159 = vmatpush1.bf16.msra.mxu0 0
      %1160 = vmatprep.mubr.bf16.mxu0 0
      %1161 = vmatmul.mubr.bf16.gmra.mrb[0].mxu0 %v1114
      %v1162 = vpop.f32.mrb[0].mxu0
      %v1163 = vadd.f32 0.0, %v1162
      %v1164 = vpop.f32.mrb[0].mxu0
      %v1165 = vpop.f32.mrb[0].mxu0
      %v1166 = vadd.f32 0.0, %v1165
      %v1167 = vpop.f32.mrb[0].mxu0
      %1168 = vmatprep.mubr.bf16.mxu0 0
      %1169 = vmatmul.mubr.bf16.gmra.mrb[0].mxu0 %v1117
      %v1170 = vpop.f32.mrb[0].mxu0
      %v1171 = vadd.f32 0.0, %v1170
      %v1172 = vpop.f32.mrb[0].mxu0
      %v1173 = vpop.f32.mrb[0].mxu0
      %v1174 = vadd.f32 0.0, %v1173
      %v1175 = vpop.f32.mrb[0].mxu0
      %1176 = vmatprep.mubr.bf16.mxu0 0
      %1177 = vmatmul.mubr.bf16.gmra.mrb[0].mxu0 %v1120
      %v1178 = vpop.f32.mrb[0].mxu0
      %v1179 = vadd.f32 0.0, %v1178
      %v1180 = vpop.f32.mrb[0].mxu0
      %v1181 = vpop.f32.mrb[0].mxu0
      %v1182 = vadd.f32 0.0, %v1181
      %v1183 = vpop.f32.mrb[0].mxu0
      %1184 = vmatprep.mubr.bf16.mxu0 0
      %1185 = vmatmul.mubr.bf16.gmra.mrb[0].mxu0 %v1123
      %v1186 = vpop.f32.mrb[0].mxu0
      %v1187 = vadd.f32 0.0, %v1186
      %v1188 = vpop.f32.mrb[0].mxu0
      %v1189 = vpop.f32.mrb[0].mxu0
      %v1190 = vadd.f32 0.0, %v1189
      %v1191 = vpop.f32.mrb[0].mxu0
      %1192 = vdwg.mxu0
      %v1193 = vadd.f32 %v1066, %v1163
      %v1194 = vadd.f32 %v1067, %v1166
      %v1195 = vadd.f32 %v1068, %v1171
      %v1196 = vadd.f32 %v1069, %v1174
      %v1197 = vadd.f32 %v1070, %v1179
      %v1198 = vadd.f32 %v1071, %v1182
      %v1199 = vadd.f32 %v1072, %v1187
      %v1200 = vadd.f32 %v1073, %v1190
      %v1201 = vld [vmem:[%s1074 + $0x1] sm:$0xff]
      %v1202 = vld [vmem:[%s1074 + $0x11] sm:$0xff]
      %v1203 = vld [vmem:[%s1074 + $0x21] sm:$0xff]
      %v1204 = vld [vmem:[%s1074 + $0x31] sm:$0xff]
      %v1205 = vld [vmem:[%s1074 + $0x41] sm:$0xff]
      %v1206 = vld [vmem:[%s1074 + $0x51] sm:$0xff]
      %v1207 = vld [vmem:[%s1074 + $0x61] sm:$0xff]
      %v1208 = vld [vmem:[%s1074 + $0x71] sm:$0xff]
      %v1209 = vmul.f32 %v1201, %v316
      %v1210 = vmul.f32 %v1202, %v316
      %v1211 = vmul.f32 %v1203, %v316
      %v1212 = vmul.f32 %v1204, %v316
      %v1213 = vmul.f32 %v1205, %v316
      %v1214 = vmul.f32 %v1206, %v316
      %v1215 = vmul.f32 %v1207, %v316
      %v1216 = vmul.f32 %v1208, %v316
      %v1217 = vadd.f32 %v1209, %v330
      %v1218 = vadd.f32 %v1210, %v330
      %v1219 = vadd.f32 %v1211, %v330
      %v1220 = vadd.f32 %v1212, %v330
      %v1221 = vadd.f32 %v1213, %v330
      %v1222 = vadd.f32 %v1214, %v330
      %v1223 = vadd.f32 %v1215, %v330
      %v1224 = vadd.f32 %v1216, %v330
      %v1225 = vmax.f32 %v1217, 0.0
      %v1226 = vmax.f32 %v1218, 0.0
      %v1227 = vmax.f32 %v1219, 0.0
      %v1228 = vmax.f32 %v1220, 0.0
      %v1229 = vmax.f32 %v1221, 0.0
      %v1230 = vmax.f32 %v1222, 0.0
      %v1231 = vmax.f32 %v1223, 0.0
      %v1232 = vmax.f32 %v1224, 0.0
      %v1233 = vpack.c.bf16 %v1226, %v1225
      %v1234 = vpack.c.bf16 %v1228, %v1227
      %v1235 = vpack.c.bf16 %v1230, %v1229
      %v1236 = vpack.c.bf16 %v1232, %v1231
      %s1237 = scalar_lea.vmem %s276, 28
      %v1238 = vld [vmem:[%s1237] sm:$0xf]
      %v1240 = vsel %vm353, %v1233, 0
      %v1243 = vsel %vm353, %v1234, 0
      %v1246 = vsel %vm353, %v1235, 0
      %v1249 = vsel %vm353, %v1236, 0
      %v1252 = vsel %vm366, %v1238, 0
      %1254 = vmatprep.subr.bf16.mxu0 0
      %1255 = vmatpush1.bf16.msra.mxu0 %v1252
      %1256 = vmatprep.subr.bf16.mxu0 0
      %1257 = vmatpush1.bf16.msra.mxu0 0
      %1258 = vmatprep.subr.bf16.mxu0 0
      %1259 = vmatpush1.bf16.msra.mxu0 0
      %1260 = vmatprep.subr.bf16.mxu0 0
      %1261 = vmatpush1.bf16.msra.mxu0 0
      %1262 = vmatprep.subr.bf16.mxu0 0
      %1263 = vmatpush1.bf16.msra.mxu0 0
      %1264 = vmatprep.subr.bf16.mxu0 0
      %1265 = vmatpush1.bf16.msra.mxu0 0
      %1266 = vmatprep.subr.bf16.mxu0 0
      %1267 = vmatpush1.bf16.msra.mxu0 0
      %1268 = vmatprep.subr.bf16.mxu0 0
      %1269 = vmatpush1.bf16.msra.mxu0 0
      %1270 = vmatprep.subr.bf16.mxu0 0
      %1271 = vmatpush1.bf16.msra.mxu0 0
      %1272 = vmatprep.subr.bf16.mxu0 0
      %1273 = vmatpush1.bf16.msra.mxu0 0
      %1274 = vmatprep.subr.bf16.mxu0 0
      %1275 = vmatpush1.bf16.msra.mxu0 0
      %1276 = vmatprep.subr.bf16.mxu0 0
      %1277 = vmatpush1.bf16.msra.mxu0 0
      %1278 = vmatprep.subr.bf16.mxu0 0
      %1279 = vmatpush1.bf16.msra.mxu0 0
      %1280 = vmatprep.subr.bf16.mxu0 0
      %1281 = vmatpush1.bf16.msra.mxu0 0
      %1282 = vmatprep.subr.bf16.mxu0 0
      %1283 = vmatpush1.bf16.msra.mxu0 0
      %1284 = vmatprep.subr.bf16.mxu0 0
      %1285 = vmatpush1.bf16.msra.mxu0 0
      %1286 = vmatprep.mubr.bf16.mxu0 0
      %1287 = vmatmul.mubr.bf16.gmra.mrb[0].mxu0 %v1240
      %v1288 = vpop.f32.mrb[0].mxu0
      %v1289 = vadd.f32 0.0, %v1288
      %v1290 = vpop.f32.mrb[0].mxu0
      %v1291 = vpop.f32.mrb[0].mxu0
      %v1292 = vadd.f32 0.0, %v1291
      %v1293 = vpop.f32.mrb[0].mxu0
      %1294 = vmatprep.mubr.bf16.mxu0 0
      %1295 = vmatmul.mubr.bf16.gmra.mrb[0].mxu0 %v1243
      %v1296 = vpop.f32.mrb[0].mxu0
      %v1297 = vadd.f32 0.0, %v1296
      %v1298 = vpop.f32.mrb[0].mxu0
      %v1299 = vpop.f32.mrb[0].mxu0
      %v1300 = vadd.f32 0.0, %v1299
      %v1301 = vpop.f32.mrb[0].mxu0
      %1302 = vmatprep.mubr.bf16.mxu0 0
      %1303 = vmatmul.mubr.bf16.gmra.mrb[0].mxu0 %v1246
      %v1304 = vpop.f32.mrb[0].mxu0
      %v1305 = vadd.f32 0.0, %v1304
      %v1306 = vpop.f32.mrb[0].mxu0
      %v1307 = vpop.f32.mrb[0].mxu0
      %v1308 = vadd.f32 0.0, %v1307
      %v1309 = vpop.f32.mrb[0].mxu0
      %1310 = vmatprep.mubr.bf16.mxu0 0
      %1311 = vmatmul.mubr.bf16.gmra.mrb[0].mxu0 %v1249
      %v1312 = vpop.f32.mrb[0].mxu0
      %v1313 = vadd.f32 0.0, %v1312
      %v1314 = vpop.f32.mrb[0].mxu0
      %v1315 = vpop.f32.mrb[0].mxu0
      %v1316 = vadd.f32 0.0, %v1315
      %v1317 = vpop.f32.mrb[0].mxu0
      %1318 = vdwg.mxu0
      %v1319 = vadd.f32 %v1193, %v1289
      %v1320 = vadd.f32 %v1194, %v1292
      %v1321 = vadd.f32 %v1195, %v1297
      %v1322 = vadd.f32 %v1196, %v1300
      %v1323 = vadd.f32 %v1197, %v1305
      %v1324 = vadd.f32 %v1198, %v1308
      %v1325 = vadd.f32 %v1199, %v1313
      %v1326 = vadd.f32 %v1200, %v1316
      %v1327 = vld [vmem:[%s1074 + $0x2] sm:$0xff]
      %v1328 = vld [vmem:[%s1074 + $0x12] sm:$0xff]
      %v1329 = vld [vmem:[%s1074 + $0x22] sm:$0xff]
      %v1330 = vld [vmem:[%s1074 + $0x32] sm:$0xff]
      %v1331 = vld [vmem:[%s1074 + $0x42] sm:$0xff]
      %v1332 = vld [vmem:[%s1074 + $0x52] sm:$0xff]
      %v1333 = vld [vmem:[%s1074 + $0x62] sm:$0xff]
      %v1334 = vld [vmem:[%s1074 + $0x72] sm:$0xff]
      %v1335 = vmul.f32 %v1327, %v316
      %v1336 = vmul.f32 %v1328, %v316
      %v1337 = vmul.f32 %v1329, %v316
      %v1338 = vmul.f32 %v1330, %v316
      %v1339 = vmul.f32 %v1331, %v316
      %v1340 = vmul.f32 %v1332, %v316
      %v1341 = vmul.f32 %v1333, %v316
      %v1342 = vmul.f32 %v1334, %v316
      %v1343 = vadd.f32 %v1335, %v330
      %v1344 = vadd.f32 %v1336, %v330
      %v1345 = vadd.f32 %v1337, %v330
      %v1346 = vadd.f32 %v1338, %v330
      %v1347 = vadd.f32 %v1339, %v330
      %v1348 = vadd.f32 %v1340, %v330
      %v1349 = vadd.f32 %v1341, %v330
      %v1350 = vadd.f32 %v1342, %v330
      %v1351 = vmax.f32 %v1343, 0.0
      %v1352 = vmax.f32 %v1344, 0.0
      %v1353 = vmax.f32 %v1345, 0.0
      %v1354 = vmax.f32 %v1346, 0.0
      %v1355 = vmax.f32 %v1347, 0.0
      %v1356 = vmax.f32 %v1348, 0.0
      %v1357 = vmax.f32 %v1349, 0.0
      %v1358 = vmax.f32 %v1350, 0.0
      %v1359 = vpack.c.bf16 %v1352, %v1351
      %v1360 = vpack.c.bf16 %v1354, %v1353
      %v1361 = vpack.c.bf16 %v1356, %v1355
      %v1362 = vpack.c.bf16 %v1358, %v1357
      %s1363 = scalar_lea.vmem %s276, 32
      %v1364 = vld [vmem:[%s1363] sm:$0xf]
      %v1366 = vsel %vm353, %v1359, 0
      %v1369 = vsel %vm353, %v1360, 0
      %v1372 = vsel %vm353, %v1361, 0
      %v1375 = vsel %vm353, %v1362, 0
      %v1378 = vsel %vm366, %v1364, 0
      %1380 = vmatprep.subr.bf16.mxu0 0
      %1381 = vmatpush1.bf16.msra.mxu0 %v1378
      %1382 = vmatprep.subr.bf16.mxu0 0
      %1383 = vmatpush1.bf16.msra.mxu0 0
      %1384 = vmatprep.subr.bf16.mxu0 0
      %1385 = vmatpush1.bf16.msra.mxu0 0
      %1386 = vmatprep.subr.bf16.mxu0 0
      %1387 = vmatpush1.bf16.msra.mxu0 0
      %1388 = vmatprep.subr.bf16.mxu0 0
      %1389 = vmatpush1.bf16.msra.mxu0 0
      %1390 = vmatprep.subr.bf16.mxu0 0
      %1391 = vmatpush1.bf16.msra.mxu0 0
      %1392 = vmatprep.subr.bf16.mxu0 0
      %1393 = vmatpush1.bf16.msra.mxu0 0
      %1394 = vmatprep.subr.bf16.mxu0 0
      %1395 = vmatpush1.bf16.msra.mxu0 0
      %1396 = vmatprep.subr.bf16.mxu0 0
      %1397 = vmatpush1.bf16.msra.mxu0 0
      %1398 = vmatprep.subr.bf16.mxu0 0
      %1399 = vmatpush1.bf16.msra.mxu0 0
      %1400 = vmatprep.subr.bf16.mxu0 0
      %1401 = vmatpush1.bf16.msra.mxu0 0
      %1402 = vmatprep.subr.bf16.mxu0 0
      %1403 = vmatpush1.bf16.msra.mxu0 0
      %1404 = vmatprep.subr.bf16.mxu0 0
      %1405 = vmatpush1.bf16.msra.mxu0 0
      %1406 = vmatprep.subr.bf16.mxu0 0
      %1407 = vmatpush1.bf16.msra.mxu0 0
      %1408 = vmatprep.subr.bf16.mxu0 0
      %1409 = vmatpush1.bf16.msra.mxu0 0
      %1410 = vmatprep.subr.bf16.mxu0 0
      %1411 = vmatpush1.bf16.msra.mxu0 0
      %1412 = vmatprep.mubr.bf16.mxu0 0
      %1413 = vmatmul.mubr.bf16.gmra.mrb[0].mxu0 %v1366
      %v1414 = vpop.f32.mrb[0].mxu0
      %v1415 = vadd.f32 0.0, %v1414
      %v1416 = vpop.f32.mrb[0].mxu0
      %v1417 = vpop.f32.mrb[0].mxu0
      %v1418 = vadd.f32 0.0, %v1417
      %v1419 = vpop.f32.mrb[0].mxu0
      %1420 = vmatprep.mubr.bf16.mxu0 0
      %1421 = vmatmul.mubr.bf16.gmra.mrb[0].mxu0 %v1369
      %v1422 = vpop.f32.mrb[0].mxu0
      %v1423 = vadd.f32 0.0, %v1422
      %v1424 = vpop.f32.mrb[0].mxu0
      %v1425 = vpop.f32.mrb[0].mxu0
      %v1426 = vadd.f32 0.0, %v1425
      %v1427 = vpop.f32.mrb[0].mxu0
      %1428 = vmatprep.mubr.bf16.mxu0 0
      %1429 = vmatmul.mubr.bf16.gmra.mrb[0].mxu0 %v1372
      %v1430 = vpop.f32.mrb[0].mxu0
      %v1431 = vadd.f32 0.0, %v1430
      %v1432 = vpop.f32.mrb[0].mxu0
      %v1433 = vpop.f32.mrb[0].mxu0
      %v1434 = vadd.f32 0.0, %v1433
      %v1435 = vpop.f32.mrb[0].mxu0
      %1436 = vmatprep.mubr.bf16.mxu0 0
      %1437 = vmatmul.mubr.bf16.gmra.mrb[0].mxu0 %v1375
      %v1438 = vpop.f32.mrb[0].mxu0
      %v1439 = vadd.f32 0.0, %v1438
      %v1440 = vpop.f32.mrb[0].mxu0
      %v1441 = vpop.f32.mrb[0].mxu0
      %v1442 = vadd.f32 0.0, %v1441
      %v1443 = vpop.f32.mrb[0].mxu0
      %1444 = vdwg.mxu0
      %v1445 = vadd.f32 %v1319, %v1415
      %v1446 = vadd.f32 %v1320, %v1418
      %v1447 = vadd.f32 %v1321, %v1423
      %v1448 = vadd.f32 %v1322, %v1426
      %v1449 = vadd.f32 %v1323, %v1431
      %v1450 = vadd.f32 %v1324, %v1434
      %v1451 = vadd.f32 %v1325, %v1439
      %v1452 = vadd.f32 %v1326, %v1442
      %1453 = vst.msk [vmem:[%s292] sm:$0xff] %vm353, %v1445
      %1454 = vst.msk [vmem:[%s292 + $0x8] sm:$0xff] %vm353, %v1446
      %1455 = vst.msk [vmem:[%s292 + $0x10] sm:$0xff] %vm353, %v1447
      %1456 = vst.msk [vmem:[%s292 + $0x18] sm:$0xff] %vm353, %v1448
      %1457 = vst.msk [vmem:[%s292 + $0x20] sm:$0xff] %vm353, %v1449
      %1458 = vst.msk [vmem:[%s292 + $0x28] sm:$0xff] %vm353, %v1450
      %1459 = vst.msk [vmem:[%s292 + $0x30] sm:$0xff] %vm353, %v1451
      %1460 = vst.msk [vmem:[%s292 + $0x38] sm:$0xff] %vm353, %v1452
      %p1461 = scmp.lt.s32.totalorder %s20, 1
      %s1462 = scalar_select %p1461, %s20, 1
      %p1463 = scmp.lt.s32.totalorder %s21, 0
      %s1464 = scalar_select %p1463, %s21, 0
      %s1465 = smul.addr %s1462, 8
      %s1466 = sadd.s32 %s1464, %s1465
      %s1467 = smul.addr %s1466, 8
      %s1468 = scalar_lea.vmem %s5, %s1467
      // Predicated region
      $region41: #{network_block_forward.7} parent=39 // pred_check
        %p1469 = pneg %p170
      $region42: #{network_block_forward.7} parent=39 // pred_check_branch
        %1471 = sbr.rel (%p1469) target = $region44
      $region43: #{network_block_forward.7} parent=39 // pred_region
        _
      $region44: #{network_block_forward.7} parent=39 // pred_fallthru
        _
    $region40: #{network_block_forward.7} parent=5 // pred_fallthru
      _
    %p1472 = scmp.le.s32.totalorder 2, %s11
    // Predicated region
    $region45: #{network_block_forward.7} parent=5 // pred_check
      %p1473 = pneg %p1472
    $region46: #{network_block_forward.7} parent=5 // pred_check_branch
      %1475 = sbr.rel (%p1473) target = $region48
    $region47: #{network_block_forward.7} parent=5 // pred_region
      %s1476 = ssub.s32 %s11, 2
      // Predicated region
      $region49: #{network_block_forward.7} parent=47 // pred_check
        %p1477 = pneg %p176
      $region50: #{network_block_forward.7} parent=47 // pred_check_branch
        %1479 = sbr.rel (%p1477) target = $region52
      $region51: #{network_block_forward.7} parent=47 // pred_region
        %p1480 = scmp.lt.s32.totalorder %s22, 1
        %s1481 = scalar_select %p1480, %s22, 1
        %p1482 = scmp.lt.s32.totalorder %s23, 0
        %s1483 = scalar_select %p1482, %s23, 0
        %s1484 = smul.addr %s1481, 8
        %s1485 = sadd.s32 %s1483, %s1484
        %s1486 = smul.addr %s1485, 8
        %s1487 = scalar_lea.vmem %s5, %s1486
      $region52: #{network_block_forward.7} parent=47 // pred_fallthru
        _
    $region48: #{network_block_forward.7} parent=5 // pred_fallthru
      _
  $region6: #{network_block_forward.7} parent=0 // loop_footer
    %s15 = sadd.s32 1, %s11
  $region7: #{network_block_forward.7} parent=0 // loop_footer_branch
    %10 = sbr.rel target = $region3
  $region8: #{network_block_forward.7} parent=0 // loop_exit
    _

// kernel: network_block_forward.8
$region0: #{network_block_forward.8}
  #allocation0 [shape = 'u32[]', space=smem, size = 0x4, offset = 0x4, fixed_abs, tag = 'smem constant byte address 0x4 - core index']
  #allocation1 [shape = 'u32[144,128]{1,0:T(1,128)}', space=vmem, size = 0x12000, scoped, tag = 'internal scratch']
  %s0 = inlined_call_operand.vmem [shape: f32[2,10,10,8], index: 0, kind: input, shape index: {}]
  %s1 = inlined_call_operand.vmem [shape: bf16[9,8,8], index: 1, kind: input, shape index: {}]
  %s2 = inlined_call_operand.vmem [shape: f32[1,8], index: 2, kind: input, shape index: {}]
  %s3 = inlined_call_operand.vmem [shape: f32[1,8], index: 3, kind: input, shape index: {}]
  %s4 = inlined_call_operand.vmem [shape: f32[2,64,8], index: 4, kind: output, shape index: {}]
  %s5 = sld [smem:[#allocation0]]
  $region49: #{network_block_forward.8} parent=0
    _
  %s7 = ssub.s32 1, %s5
  %s8 = scalar_select 0, %s7, %s5
  loop: start=0, step=1, limit=4
  $region2: #{network_block_forward.8} parent=0 // loop_pre_header
    _
  $region3: #{network_block_forward.8} parent=0 // loop_header
    %s10 = sphi 0, %s14
    %p11 = scmp.ge.s32.totalorder %s10, 4
    %s17 = sphi 0, %s29
    %s18 = sphi 0, %s25
    %s19 = sphi 0, %s17
    %s20 = sphi 0, %s18
    %s21 = sphi 0, %s19
    %s22 = sphi 0, %s20
    %s32 = sphi 0, %s34
    %s35 = sphi 0, %s32
    %s36 = sphi 0, %s35
    %s52 = sphi 0, %s36
    %s58 = sphi 0, %s60
    %s61 = sphi 0, %s58
    %s62 = sphi 0, %s61
    %s78 = sphi 0, %s62
    %s82 = sphi 0, %s82
    %s84 = sphi 0, %s82
    %s85 = sphi 0, %s84
    %s99 = sphi 0, %s85
    %s103 = sphi 0, %s103
    %s105 = sphi 0, %s103
    %s106 = sphi 0, %s105
    %s120 = sphi 0, %s106
    %s128 = sphi 0, %s130
    %s131 = sphi 0, %s128
    %s132 = sphi 0, %s131
    %s148 = sphi 0, %s132
  $region4: #{network_block_forward.8} parent=0 // loop_header_branch
    %13 = sbr.rel (%p11) target = $region8
  $region5: #{network_block_forward.8} parent=0 // loop_body
    %s15 = ssub.s32 %s10, 1
    %s16 = ssub.s32 %s10, 2
    %s23 = sadd.s32 1, %s18
    %p24 = scmp.ge.s32.totalorder %s23, 1
    %s25 = scalar_select %p24, 0, %s23
    %s26 = sadd.s32 1, %s17
    %s27 = scalar_select %p24, %s26, %s17
    %p28 = scmp.ge.s32.totalorder %s27, 2
    %s29 = scalar_select %p28, 0, %s27
    %s30 = ssub.s32 %s17, %s29
    %p31 = scmp.eq.s32.totalorder %s30, 0
    %s33 = sadd.s32 %s32, 1
    %s34 = scalar_select %p31, %s32, %s33
    %p37 = pneg %p31
    %p38 = scmp.eq.s32.totalorder %s10, 1
    %p39 = por %p37, %p38
    %p40 = scmp.ne.s32.totalorder %s32, %s35
    %p41 = scmp.eq.s32.totalorder %s10, 0
    %p42 = por %p40, %p41
    %p43 = scmp.ne.s32.totalorder %s32, %s35
    %p44 = scmp.eq.s32.totalorder %s15, 1
    %p45 = por %p43, %p44
    %p46 = scmp.ne.s32.totalorder %s35, %s36
    %p47 = scmp.eq.s32.totalorder %s15, 0
    %p48 = por %p46, %p47
    %p49 = scmp.ne.s32.totalorder %s35, %s36
    %p50 = scmp.eq.s32.totalorder %s16, 1
    %p51 = por %p49, %p50
    %p53 = scmp.ne.s32.totalorder %s36, %s52
    %p54 = scmp.eq.s32.totalorder %s16, 0
    %p55 = por %p53, %p54
    %s56 = ssub.s32 %s18, %s25
    %p57 = scmp.eq.s32.totalorder %s56, 0
    %s59 = sadd.s32 %s58, 1
    %s60 = scalar_select %p57, %s58, %s59
    %p63 = pneg %p57
    %p64 = scmp.eq.s32.totalorder %s10, 1
    %p65 = por %p63, %p64
    %p66 = scmp.ne.s32.totalorder %s58, %s61
    %p67 = scmp.eq.s32.totalorder %s10, 0
    %p68 = por %p66, %p67
    %p69 = scmp.ne.s32.totalorder %s58, %s61
    %p70 = scmp.eq.s32.totalorder %s15, 1
    %p71 = por %p69, %p70
    %p72 = scmp.ne.s32.totalorder %s61, %s62
    %p73 = scmp.eq.s32.totalorder %s15, 0
    %p74 = por %p72, %p73
    %p75 = scmp.ne.s32.totalorder %s61, %s62
    %p76 = scmp.eq.s32.totalorder %s16, 1
    %p77 = por %p75, %p76
    %p79 = scmp.ne.s32.totalorder %s62, %s78
    %p80 = scmp.eq.s32.totalorder %s16, 0
    %p81 = por %p79, %p80
    %s83 = sadd.s32 %s82, 1
    %p86 = scmp.eq.s32.totalorder %s10, 1
    %p87 = scmp.ne.s32.totalorder %s82, %s84
    %p88 = scmp.eq.s32.totalorder %s10, 0
    %p89 = por %p87, %p88
    %p90 = scmp.ne.s32.totalorder %s82, %s84
    %p91 = scmp.eq.s32.totalorder %s15, 1
    %p92 = por %p90, %p91
    %p93 = scmp.ne.s32.totalorder %s84, %s85
    %p94 = scmp.eq.s32.totalorder %s15, 0
    %p95 = por %p93, %p94
    %p96 = scmp.ne.s32.totalorder %s84, %s85
    %p97 = scmp.eq.s32.totalorder %s16, 1
    %p98 = por %p96, %p97
    %p100 = scmp.ne.s32.totalorder %s85, %s99
    %p101 = scmp.eq.s32.totalorder %s16, 0
    %p102 = por %p100, %p101
    %s104 = sadd.s32 %s103, 1
    %p107 = scmp.eq.s32.totalorder %s10, 1
    %p108 = scmp.ne.s32.totalorder %s103, %s105
    %p109 = scmp.eq.s32.totalorder %s10, 0
    %p110 = por %p108, %p109
    %p111 = scmp.ne.s32.totalorder %s103, %s105
    %p112 = scmp.eq.s32.totalorder %s15, 1
    %p113 = por %p111, %p112
    %p114 = scmp.ne.s32.totalorder %s105, %s106
    %p115 = scmp.eq.s32.totalorder %s15, 0
    %p116 = por %p114, %p115
    %p117 = scmp.ne.s32.totalorder %s105, %s106
    %p118 = scmp.eq.s32.totalorder %s16, 1
    %p119 = por %p117, %p118
    %p121 = scmp.ne.s32.totalorder %s106, %s120
    %p122 = scmp.eq.s32.totalorder %s16, 0
    %p123 = por %p121, %p122
    %s124 = ssub.s32 %s17, %s29
    %s125 = ssub.s32 %s18, %s25
    %s126 = sor.u32 %s124, %s125
    %p127 = scmp.eq.s32.totalorder %s126, 0
    %s129 = sadd.s32 %s128, 1
    %s130 = scalar_select %p127, %s128, %s129
    %p133 = pneg %p127
    %p134 = scmp.eq.s32.totalorder %s10, 1
    %p135 = por %p133, %p134
    %p136 = scmp.ne.s32.totalorder %s128, %s131
    %p137 = scmp.eq.s32.totalorder %s10, 0
    %p138 = por %p136, %p137
    %p139 = scmp.ne.s32.totalorder %s128, %s131
    %p140 = scmp.eq.s32.totalorder %s15, 1
    %p141 = por %p139, %p140
    %p142 = scmp.ne.s32.totalorder %s131, %s132
    %p143 = scmp.eq.s32.totalorder %s15, 0
    %p144 = por %p142, %p143
    %p145 = scmp.ne.s32.totalorder %s131, %s132
    %p146 = scmp.eq.s32.totalorder %s16, 1
    %p147 = por %p145, %p146
    %p149 = scmp.ne.s32.totalorder %s132, %s148
    %p150 = scmp.eq.s32.totalorder %s16, 0
    %p151 = por %p149, %p150
    %p152 = scmp.le.s32.totalorder 1, %s10
    %p153 = scmp.lt.s32.totalorder %s10, 3
    %p154 = pnand %p152, %p153
    %p155 = pneg %p154
    // Predicated region
    $region9: #{network_block_forward.8} parent=5 // pred_check
      _
    $region10: #{network_block_forward.8} parent=5 // pred_check_branch
      %157 = sbr.rel (%p154) target = $region12
    $region11: #{network_block_forward.8} parent=5 // pred_region
      %s158 = ssub.s32 %s10, 1
      // Predicated region
      $region13: #{network_block_forward.8} parent=11 // pred_check
        %p159 = pneg %p74
      $region14: #{network_block_forward.8} parent=11 // pred_check_branch
        %161 = sbr.rel (%p159) target = $region16
      $region15: #{network_block_forward.8} parent=11 // pred_region
        %p162 = scmp.lt.s32.totalorder %s20, 0
        %s163 = scalar_select %p162, %s20, 0
        %s164 = smul.addr %s163, 4
        %s165 = scalar_lea.vmem %s1, %s164
      $region16: #{network_block_forward.8} parent=11 // pred_fallthru
        _
      // Predicated region
      $region17: #{network_block_forward.8} parent=11 // pred_check
        %p166 = pneg %p95
      $region18: #{network_block_forward.8} parent=11 // pred_check_branch
        %168 = sbr.rel (%p166) target = $region20
      $region19: #{network_block_forward.8} parent=11 // pred_region
        _
      $region20: #{network_block_forward.8} parent=11 // pred_fallthru
        _
      // Predicated region
      $region21: #{network_block_forward.8} parent=11 // pred_check
        %p169 = pneg %p116
      $region22: #{network_block_forward.8} parent=11 // pred_check_branch
        %171 = sbr.rel (%p169) target = $region24
      $region23: #{network_block_forward.8} parent=11 // pred_region
        _
      $region24: #{network_block_forward.8} parent=11 // pred_fallthru
        _
    $region12: #{network_block_forward.8} parent=5 // pred_fallthru
      _
    %p172 = scmp.lt.s32.totalorder %s10, 2
    // Predicated region
    $region25: #{network_block_forward.8} parent=5 // pred_check
      %p173 = pneg %p172
    $region26: #{network_block_forward.8} parent=5 // pred_check_branch
      %175 = sbr.rel (%p173) target = $region28
    $region27: #{network_block_forward.8} parent=5 // pred_region
      // Predicated region
      $region29: #{network_block_forward.8} parent=27 // pred_check
        %p176 = pneg %p42
      $region30: #{network_block_forward.8} parent=27 // pred_check_branch
        %178 = sbr.rel (%p176) target = $region32
      $region31: #{network_block_forward.8} parent=27 // pred_region
        %p179 = scmp.lt.s32.totalorder %s17, 1
        %s180 = scalar_select %p179, %s17, 1
        %s181 = smul.addr %s180, 20
        %s182 = smul.addr %s181, 8
        %s183 = scalar_lea.vmem %s0, %s182
      $region32: #{network_block_forward.8} parent=27 // pred_fallthru
        _
    $region28: #{network_block_forward.8} parent=5 // pred_fallthru
      _
    %p184 = scmp.le.s32.totalorder 1, %s10
    %p185 = scmp.lt.s32.totalorder %s10, 3
    %p186 = pnand %p184, %p185
    %p187 = pneg %p186
    // Predicated region
    $region33: #{network_block_forward.8} parent=5 // pred_check
      _
    $region34: #{network_block_forward.8} parent=5 // pred_check_branch
      %189 = sbr.rel (%p186) target = $region36
    $region35: #{network_block_forward.8} parent=5 // pred_region
      %s190 = ssub.s32 %s10, 1
      %p191 = scmp.lt.s32.totalorder %s19, 1
      %s192 = scalar_select %p191, %s19, 1
      %s193 = smul.addr %s192, 20
      %s194 = smul.addr %s193, 8
      %s195 = scalar_lea.vmem %s0, %s194
      %p196 = pneg %p48
      %p197 = pneg %p45
      %p198 = scmp.lt.s32.totalorder %s20, 0
      %s199 = scalar_select %p198, %s20, 0
      %s200 = smul.addr %s199, 4
      %s201 = scalar_lea.vmem %s1, %s200
      %p202 = pneg %p74
      %p203 = pneg %p71
      %p204 = pneg %p95
      %p205 = pneg %p92
      %p206 = pneg %p116
      %p207 = pneg %p113
      %p208 = pneg %p144
      %p209 = pneg %p141
      %p210 = scmp.lt.s32.totalorder %s19, 1
      %s211 = scalar_select %p210, %s19, 1
      %p212 = scmp.lt.s32.totalorder %s20, 0
      %s213 = scalar_select %p212, %s20, 0
      %s214 = smul.addr %s211, 8
      %s215 = sadd.s32 %s213, %s214
      %s216 = smul.addr %s215, 8
      %s217 = scalar_lea.vmem %s4, %s216
      %p218 = scmp.lt.s32.totalorder %s19, 1
      %s219 = scalar_select %p218, %s19, 1
      %s220 = smul.addr %s219, 20
      %s221 = smul.addr %s220, 8
      %s222 = scalar_lea.vmem %s0, %s221
      %p223 = scmp.lt.s32.totalorder %s20, 0
      %s224 = scalar_select %p223, %s20, 0
      %s225 = smul.addr %s224, 4
      %s226 = scalar_lea.vmem %s1, %s225
      %p227 = scmp.lt.s32.totalorder %s19, 1
      %s228 = scalar_select %p227, %s19, 1
      %p229 = scmp.lt.s32.totalorder %s20, 0
      %s230 = scalar_select %p229, %s20, 0
      %s231 = smul.addr %s228, 8
      %s232 = sadd.s32 %s230, %s231
      %s233 = smul.addr %s232, 8
      %s234 = scalar_lea.vmem %s4, %s233
      %v236 = vld [vmem:[%s2] sm:$0x1]
      %v237 = vld [vmem:[%s3] sm:$0x1]
      %v238 = vld [vmem:[%s222] sm:$0xff]
      %v239 = vld [vmem:[%s222 + $0x10] sm:$0xff]
      %v240 = vld [vmem:[%s222 + $0x20] sm:$0xff]
      %v241 = vld [vmem:[%s222 + $0x30] sm:$0xff]
      %v242 = vld [vmem:[%s222 + $0x40] sm:$0xff]
      %v243 = vld [vmem:[%s222 + $0x50] sm:$0xff]
      %v244 = vld [vmem:[%s222 + $0x60] sm:$0xff]
      %v245 = vld [vmem:[%s222 + $0x70] sm:$0xff]
      %v247 = vlaneseq
      %v248 = vshrl.u32 %v247, 7
      %v249 = vsub.s32 0, %v248
      %v250 = vrot.slane %v236, %v249
      %v252 = vmul.f32 %v238, %v250
      %v253 = vmul.f32 %v239, %v250
      %v254 = vmul.f32 %v240, %v250
      %v255 = vmul.f32 %v241, %v250
      %v256 = vmul.f32 %v242, %v250
      %v257 = vmul.f32 %v243, %v250
      %v258 = vmul.f32 %v244, %v250
      %v259 = vmul.f32 %v245, %v250
      %v261 = vlaneseq
      %v262 = vshrl.u32 %v261, 7
      %v263 = vsub.s32 0, %v262
      %v264 = vrot.slane %v237, %v263
      %v266 = vadd.f32 %v252, %v264
      %v267 = vadd.f32 %v253, %v264
      %v268 = vadd.f32 %v254, %v264
      %v269 = vadd.f32 %v255, %v264
      %v270 = vadd.f32 %v256, %v264
      %v271 = vadd.f32 %v257, %v264
      %v272 = vadd.f32 %v258, %v264
      %v273 = vadd.f32 %v259, %v264
      %v274 = vmax.f32 %v266, 0.0
      %v275 = vmax.f32 %v267, 0.0
      %v276 = vmax.f32 %v268, 0.0
      %v277 = vmax.f32 %v269, 0.0
      %v278 = vmax.f32 %v270, 0.0
      %v279 = vmax.f32 %v271, 0.0
      %v280 = vmax.f32 %v272, 0.0
      %v281 = vmax.f32 %v273, 0.0
      %v282 = vpack.c.bf16 %v275, %v274
      %v283 = vpack.c.bf16 %v277, %v276
      %v284 = vpack.c.bf16 %v279, %v278
      %v285 = vpack.c.bf16 %v281, %v280
      %v286 = vld [vmem:[%s226] sm:$0xf]
      %v287 = vld [vmem:[%s222 + $0x1] sm:$0xff]
      %v288 = vld [vmem:[%s222 + $0x11] sm:$0xff]
      %v289 = vld [vmem:[%s222 + $0x21] sm:$0xff]
      %v290 = vld [vmem:[%s222 + $0x31] sm:$0xff]
      %v291 = vld [vmem:[%s222 + $0x41] sm:$0xff]
      %v292 = vld [vmem:[%s222 + $0x51] sm:$0xff]
      %v293 = vld [vmem:[%s222 + $0x61] sm:$0xff]
      %v294 = vld [vmem:[%s222 + $0x71] sm:$0xff]
      %v295 = vmul.f32 %v287, %v250
      %v296 = vmul.f32 %v288, %v250
      %v297 = vmul.f32 %v289, %v250
      %v298 = vmul.f32 %v290, %v250
      %v299 = vmul.f32 %v291, %v250
      %v300 = vmul.f32 %v292, %v250
      %v301 = vmul.f32 %v293, %v250
      %v302 = vmul.f32 %v294, %v250
      %v303 = vadd.f32 %v295, %v264
      %v304 = vadd.f32 %v296, %v264
      %v305 = vadd.f32 %v297, %v264
      %v306 = vadd.f32 %v298, %v264
      %v307 = vadd.f32 %v299, %v264
      %v308 = vadd.f32 %v300, %v264
      %v309 = vadd.f32 %v301, %v264
      %v310 = vadd.f32 %v302, %v264
      %v311 = vmax.f32 %v303, 0.0
      %v312 = vmax.f32 %v304, 0.0
      %v313 = vmax.f32 %v305, 0.0
      %v314 = vmax.f32 %v306, 0.0
      %v315 = vmax.f32 %v307, 0.0
      %v316 = vmax.f32 %v308, 0.0
      %v317 = vmax.f32 %v309, 0.0
      %v318 = vmax.f32 %v310, 0.0
      %v319 = vpack.c.bf16 %v312, %v311
      %v320 = vpack.c.bf16 %v314, %v313
      %v321 = vpack.c.bf16 %v316, %v315
      %v322 = vpack.c.bf16 %v318, %v317
      %s323 = scalar_lea.vmem %s226, 4
      %v324 = vld [vmem:[%s323] sm:$0xf]
      %vm325 = vcmask 64512
      %v327 = vsel %vm325, %v319, 0
      %v330 = vsel %vm325, %v320, 0
      %v333 = vsel %vm325, %v321, 0
      %v336 = vsel %vm325, %v322, 0
      %vm338 = vcmask 1043456
      %v340 = vsel %vm338, %v324, 0
      %342 = vmatprep.subr.bf16.mxu0 0
      %343 = vmatpush1.bf16.msra.mxu0 %v340
      %344 = vmatprep.subr.bf16.mxu0 0
      %345 = vmatpush1.bf16.msra.mxu0 0
      %346 = vmatprep.subr.bf16.mxu0 0
      %347 = vmatpush1.bf16.msra.mxu0 0
      %348 = vmatprep.subr.bf16.mxu0 0
      %349 = vmatpush1.bf16.msra.mxu0 0
      %350 = vmatprep.subr.bf16.mxu0 0
      %351 = vmatpush1.bf16.msra.mxu0 0
      %352 = vmatprep.subr.bf16.mxu0 0
      %353 = vmatpush1.bf16.msra.mxu0 0
      %354 = vmatprep.subr.bf16.mxu0 0
      %355 = vmatpush1.bf16.msra.mxu0 0
      %356 = vmatprep.subr.bf16.mxu0 0
      %357 = vmatpush1.bf16.msra.mxu0 0
      %358 = vmatprep.subr.bf16.mxu0 0
      %359 = vmatpush1.bf16.msra.mxu0 0
      %360 = vmatprep.subr.bf16.mxu0 0
      %361 = vmatpush1.bf16.msra.mxu0 0
      %362 = vmatprep.subr.bf16.mxu0 0
      %363 = vmatpush1.bf16.msra.mxu0 0
      %364 = vmatprep.subr.bf16.mxu0 0
      %365 = vmatpush1.bf16.msra.mxu0 0
      %366 = vmatprep.subr.bf16.mxu0 0
      %367 = vmatpush1.bf16.msra.mxu0 0
      %368 = vmatprep.subr.bf16.mxu0 0
      %369 = vmatpush1.bf16.msra.mxu0 0
      %370 = vmatprep.subr.bf16.mxu0 0
      %371 = vmatpush1.bf16.msra.mxu0 0
      %372 = vmatprep.subr.bf16.mxu0 0
      %373 = vmatpush1.bf16.msra.mxu0 0
      %374 = vmatprep.mubr.bf16.mxu0 0
      %375 = vmatmul.mubr.bf16.gmra.mrb[0].mxu0 %v327
      %v376 = vpop.f32.mrb[0].mxu0
      %v377 = vadd.f32 0.0, %v376
      %v378 = vpop.f32.mrb[0].mxu0
      %v379 = vpop.f32.mrb[0].mxu0
      %v380 = vadd.f32 0.0, %v379
      %v381 = vpop.f32.mrb[0].mxu0
      %382 = vmatprep.mubr.bf16.mxu0 0
      %383 = vmatmul.mubr.bf16.gmra.mrb[0].mxu0 %v330
      %v384 = vpop.f32.mrb[0].mxu0
      %v385 = vadd.f32 0.0, %v384
      %v386 = vpop.f32.mrb[0].mxu0
      %v387 = vpop.f32.mrb[0].mxu0
      %v388 = vadd.f32 0.0, %v387
      %v389 = vpop.f32.mrb[0].mxu0
      %390 = vmatprep.mubr.bf16.mxu0 0
      %391 = vmatmul.mubr.bf16.gmra.mrb[0].mxu0 %v333
      %v392 = vpop.f32.mrb[0].mxu0
      %v393 = vadd.f32 0.0, %v392
      %v394 = vpop.f32.mrb[0].mxu0
      %v395 = vpop.f32.mrb[0].mxu0
      %v396 = vadd.f32 0.0, %v395
      %v397 = vpop.f32.mrb[0].mxu0
      %398 = vmatprep.mubr.bf16.mxu0 0
      %399 = vmatmul.mubr.bf16.gmra.mrb[0].mxu0 %v336
      %v400 = vpop.f32.mrb[0].mxu0
      %v401 = vadd.f32 0.0, %v400
      %v402 = vpop.f32.mrb[0].mxu0
      %v403 = vpop.f32.mrb[0].mxu0
      %v404 = vadd.f32 0.0, %v403
      %v405 = vpop.f32.mrb[0].mxu0
      %406 = vdwg.mxu0
      %v408 = vsel %vm325, %v282, 0
      %v411 = vsel %vm325, %v283, 0
      %v414 = vsel %vm325, %v284, 0
      %v417 = vsel %vm325, %v285, 0
      %v420 = vsel %vm338, %v286, 0
      %422 = vmatprep.subr.bf16.mxu0 0
      %423 = vmatpush1.bf16.msra.mxu0 %v420
      %424 = vmatprep.subr.bf16.mxu0 0
      %425 = vmatpush1.bf16.msra.mxu0 0
      %426 = vmatprep.subr.bf16.mxu0 0
      %427 = vmatpush1.bf16.msra.mxu0 0
      %428 = vmatprep.subr.bf16.mxu0 0
      %429 = vmatpush1.bf16.msra.mxu0 0
      %430 = vmatprep.subr.bf16.mxu0 0
      %431 = vmatpush1.bf16.msra.mxu0 0
      %432 = vmatprep.subr.bf16.mxu0 0
      %433 = vmatpush1.bf16.msra.mxu0 0
      %434 = vmatprep.subr.bf16.mxu0 0
      %435 = vmatpush1.bf16.msra.mxu0 0
      %436 = vmatprep.subr.bf16.mxu0 0
      %437 = vmatpush1.bf16.msra.mxu0 0
      %438 = vmatprep.subr.bf16.mxu0 0
      %439 = vmatpush1.bf16.msra.mxu0 0
      %440 = vmatprep.subr.bf16.mxu0 0
      %441 = vmatpush1.bf16.msra.mxu0 0
      %442 = vmatprep.subr.bf16.mxu0 0
      %443 = vmatpush1.bf16.msra.mxu0 0
      %444 = vmatprep.subr.bf16.mxu0 0
      %445 = vmatpush1.bf16.msra.mxu0 0
      %446 = vmatprep.subr.bf16.mxu0 0
      %447 = vmatpush1.bf16.msra.mxu0 0
      %448 = vmatprep.subr.bf16.mxu0 0
      %449 = vmatpush1.bf16.msra.mxu0 0
      %450 = vmatprep.subr.bf16.mxu0 0
      %451 = vmatpush1.bf16.msra.mxu0 0
      %452 = vmatprep.subr.bf16.mxu0 0
      %453 = vmatpush1.bf16.msra.mxu0 0
      %454 = vmatprep.mubr.bf16.mxu0 0
      %455 = vmatmul.mubr.bf16.gmra.mrb[0].mxu0 %v408
      %v456 = vpop.f32.mrb[0].mxu0
      %v457 = vadd.f32 %v377, %v456
      %v458 = vpop.f32.mrb[0].mxu0
      %v459 = vpop.f32.mrb[0].mxu0
      %v460 = vadd.f32 %v380, %v459
      %v461 = vpop.f32.mrb[0].mxu0
      %462 = vmatprep.mubr.bf16.mxu0 0
      %463 = vmatmul.mubr.bf16.gmra.mrb[0].mxu0 %v411
      %v464 = vpop.f32.mrb[0].mxu0
      %v465 = vadd.f32 %v385, %v464
      %v466 = vpop.f32.mrb[0].mxu0
      %v467 = vpop.f32.mrb[0].mxu0
      %v468 = vadd.f32 %v388, %v467
      %v469 = vpop.f32.mrb[0].mxu0
      %470 = vmatprep.mubr.bf16.mxu0 0
      %471 = vmatmul.mubr.bf16.gmra.mrb[0].mxu0 %v414
      %v472 = vpop.f32.mrb[0].mxu0
      %v473 = vadd.f32 %v393, %v472
      %v474 = vpop.f32.mrb[0].mxu0
      %v475 = vpop.f32.mrb[0].mxu0
      %v476 = vadd.f32 %v396, %v475
      %v477 = vpop.f32.mrb[0].mxu0
      %478 = vmatprep.mubr.bf16.mxu0 0
      %479 = vmatmul.mubr.bf16.gmra.mrb[0].mxu0 %v417
      %v480 = vpop.f32.mrb[0].mxu0
      %v481 = vadd.f32 %v401, %v480
      %v482 = vpop.f32.mrb[0].mxu0
      %v483 = vpop.f32.mrb[0].mxu0
      %v484 = vadd.f32 %v404, %v483
      %v485 = vpop.f32.mrb[0].mxu0
      %486 = vdwg.mxu0
      %v487 = vld [vmem:[%s222 + $0x2] sm:$0xff]
      %v488 = vld [vmem:[%s222 + $0x12] sm:$0xff]
      %v489 = vld [vmem:[%s222 + $0x22] sm:$0xff]
      %v490 = vld [vmem:[%s222 + $0x32] sm:$0xff]
      %v491 = vld [vmem:[%s222 + $0x42] sm:$0xff]
      %v492 = vld [vmem:[%s222 + $0x52] sm:$0xff]
      %v493 = vld [vmem:[%s222 + $0x62] sm:$0xff]
      %v494 = vld [vmem:[%s222 + $0x72] sm:$0xff]
      %v495 = vmul.f32 %v487, %v250
      %v496 = vmul.f32 %v488, %v250
      %v497 = vmul.f32 %v489, %v250
      %v498 = vmul.f32 %v490, %v250
      %v499 = vmul.f32 %v491, %v250
      %v500 = vmul.f32 %v492, %v250
      %v501 = vmul.f32 %v493, %v250
      %v502 = vmul.f32 %v494, %v250
      %v503 = vadd.f32 %v495, %v264
      %v504 = vadd.f32 %v496, %v264
      %v505 = vadd.f32 %v497, %v264
      %v506 = vadd.f32 %v498, %v264
      %v507 = vadd.f32 %v499, %v264
      %v508 = vadd.f32 %v500, %v264
      %v509 = vadd.f32 %v501, %v264
      %v510 = vadd.f32 %v502, %v264
      %v511 = vmax.f32 %v503, 0.0
      %v512 = vmax.f32 %v504, 0.0
      %v513 = vmax.f32 %v505, 0.0
      %v514 = vmax.f32 %v506, 0.0
      %v515 = vmax.f32 %v507, 0.0
      %v516 = vmax.f32 %v508, 0.0
      %v517 = vmax.f32 %v509, 0.0
      %v518 = vmax.f32 %v510, 0.0
      %v519 = vpack.c.bf16 %v512, %v511
      %v520 = vpack.c.bf16 %v514, %v513
      %v521 = vpack.c.bf16 %v516, %v515
      %v522 = vpack.c.bf16 %v518, %v517
      %s523 = scalar_lea.vmem %s226, 8
      %v524 = vld [vmem:[%s523] sm:$0xf]
      %v526 = vsel %vm325, %v519, 0
      %v529 = vsel %vm325, %v520, 0
      %v532 = vsel %vm325, %v521, 0
      %v535 = vsel %vm325, %v522, 0
      %v538 = vsel %vm338, %v524, 0
      %540 = vmatprep.subr.bf16.mxu0 0
      %541 = vmatpush1.bf16.msra.mxu0 %v538
      %542 = vmatprep.subr.bf16.mxu0 0
      %543 = vmatpush1.bf16.msra.mxu0 0
      %544 = vmatprep.subr.bf16.mxu0 0
      %545 = vmatpush1.bf16.msra.mxu0 0
      %546 = vmatprep.subr.bf16.mxu0 0
      %547 = vmatpush1.bf16.msra.mxu0 0
      %548 = vmatprep.subr.bf16.mxu0 0
      %549 = vmatpush1.bf16.msra.mxu0 0
      %550 = vmatprep.subr.bf16.mxu0 0
      %551 = vmatpush1.bf16.msra.mxu0 0
      %552 = vmatprep.subr.bf16.mxu0 0
      %553 = vmatpush1.bf16.msra.mxu0 0
      %554 = vmatprep.subr.bf16.mxu0 0
      %555 = vmatpush1.bf16.msra.mxu0 0
      %556 = vmatprep.subr.bf16.mxu0 0
      %557 = vmatpush1.bf16.msra.mxu0 0
      %558 = vmatprep.subr.bf16.mxu0 0
      %559 = vmatpush1.bf16.msra.mxu0 0
      %560 = vmatprep.subr.bf16.mxu0 0
      %561 = vmatpush1.bf16.msra.mxu0 0
      %562 = vmatprep.subr.bf16.mxu0 0
      %563 = vmatpush1.bf16.msra.mxu0 0
      %564 = vmatprep.subr.bf16.mxu0 0
      %565 = vmatpush1.bf16.msra.mxu0 0
      %566 = vmatprep.subr.bf16.mxu0 0
      %567 = vmatpush1.bf16.msra.mxu0 0
      %568 = vmatprep.subr.bf16.mxu0 0
      %569 = vmatpush1.bf16.msra.mxu0 0
      %570 = vmatprep.subr.bf16.mxu0 0
      %571 = vmatpush1.bf16.msra.mxu0 0
      %572 = vmatprep.mubr.bf16.mxu0 0
      %573 = vmatmul.mubr.bf16.gmra.mrb[0].mxu0 %v526
      %v574 = vpop.f32.mrb[0].mxu0
      %v575 = vadd.f32 0.0, %v574
      %v576 = vpop.f32.mrb[0].mxu0
      %v577 = vpop.f32.mrb[0].mxu0
      %v578 = vadd.f32 0.0, %v577
      %v579 = vpop.f32.mrb[0].mxu0
      %580 = vmatprep.mubr.bf16.mxu0 0
      %581 = vmatmul.mubr.bf16.gmra.mrb[0].mxu0 %v529
      %v582 = vpop.f32.mrb[0].mxu0
      %v583 = vadd.f32 0.0, %v582
      %v584 = vpop.f32.mrb[0].mxu0
      %v585 = vpop.f32.mrb[0].mxu0
      %v586 = vadd.f32 0.0, %v585
      %v587 = vpop.f32.mrb[0].mxu0
      %588 = vmatprep.mubr.bf16.mxu0 0
      %589 = vmatmul.mubr.bf16.gmra.mrb[0].mxu0 %v532
      %v590 = vpop.f32.mrb[0].mxu0
      %v591 = vadd.f32 0.0, %v590
      %v592 = vpop.f32.mrb[0].mxu0
      %v593 = vpop.f32.mrb[0].mxu0
      %v594 = vadd.f32 0.0, %v593
      %v595 = vpop.f32.mrb[0].mxu0
      %596 = vmatprep.mubr.bf16.mxu0 0
      %597 = vmatmul.mubr.bf16.gmra.mrb[0].mxu0 %v535
      %v598 = vpop.f32.mrb[0].mxu0
      %v599 = vadd.f32 0.0, %v598
      %v600 = vpop.f32.mrb[0].mxu0
      %v601 = vpop.f32.mrb[0].mxu0
      %v602 = vadd.f32 0.0, %v601
      %v603 = vpop.f32.mrb[0].mxu0
      %604 = vdwg.mxu0
      %v605 = vadd.f32 %v457, %v575
      %v606 = vadd.f32 %v460, %v578
      %v607 = vadd.f32 %v465, %v583
      %v608 = vadd.f32 %v468, %v586
      %v609 = vadd.f32 %v473, %v591
      %v610 = vadd.f32 %v476, %v594
      %v611 = vadd.f32 %v481, %v599
      %v612 = vadd.f32 %v484, %v602
      %s613 = scalar_lea.vmem %s222, 16
      %v614 = vld [vmem:[%s613] sm:$0xff]
      %v615 = vld [vmem:[%s613 + $0x10] sm:$0xff]
      %v616 = vld [vmem:[%s613 + $0x20] sm:$0xff]
      %v617 = vld [vmem:[%s613 + $0x30] sm:$0xff]
      %v618 = vld [vmem:[%s613 + $0x40] sm:$0xff]
      %v619 = vld [vmem:[%s613 + $0x50] sm:$0xff]
      %v620 = vld [vmem:[%s613 + $0x60] sm:$0xff]
      %v621 = vld [vmem:[%s613 + $0x70] sm:$0xff]
      %v622 = vmul.f32 %v614, %v250
      %v623 = vmul.f32 %v615, %v250
      %v624 = vmul.f32 %v616, %v250
      %v625 = vmul.f32 %v617, %v250
      %v626 = vmul.f32 %v618, %v250
      %v627 = vmul.f32 %v619, %v250
      %v628 = vmul.f32 %v620, %v250
      %v629 = vmul.f32 %v621, %v250
      %v630 = vadd.f32 %v622, %v264
      %v631 = vadd.f32 %v623, %v264
      %v632 = vadd.f32 %v624, %v264
      %v633 = vadd.f32 %v625, %v264
      %v634 = vadd.f32 %v626, %v264
      %v635 = vadd.f32 %v627, %v264
      %v636 = vadd.f32 %v628, %v264
      %v637 = vadd.f32 %v629, %v264
      %v638 = vmax.f32 %v630, 0.0
      %v639 = vmax.f32 %v631, 0.0
      %v640 = vmax.f32 %v632, 0.0
      %v641 = vmax.f32 %v633, 0.0
      %v642 = vmax.f32 %v634, 0.0
      %v643 = vmax.f32 %v635, 0.0
      %v644 = vmax.f32 %v636, 0.0
      %v645 = vmax.f32 %v637, 0.0
      %v646 = vpack.c.bf16 %v639, %v638
      %v647 = vpack.c.bf16 %v641, %v640
      %v648 = vpack.c.bf16 %v643, %v642
      %v649 = vpack.c.bf16 %v645, %v644
      %s650 = scalar_lea.vmem %s226, 12
      %v651 = vld [vmem:[%s650] sm:$0xf]
      %v653 = vsel %vm325, %v646, 0
      %v656 = vsel %vm325, %v647, 0
      %v659 = vsel %vm325, %v648, 0
      %v662 = vsel %vm325, %v649, 0
      %v665 = vsel %vm338, %v651, 0
      %667 = vmatprep.subr.bf16.mxu0 0
      %668 = vmatpush1.bf16.msra.mxu0 %v665
      %669 = vmatprep.subr.bf16.mxu0 0
      %670 = vmatpush1.bf16.msra.mxu0 0
      %671 = vmatprep.subr.bf16.mxu0 0
      %672 = vmatpush1.bf16.msra.mxu0 0
      %673 = vmatprep.subr.bf16.mxu0 0
      %674 = vmatpush1.bf16.msra.mxu0 0
      %675 = vmatprep.subr.bf16.mxu0 0
      %676 = vmatpush1.bf16.msra.mxu0 0
      %677 = vmatprep.subr.bf16.mxu0 0
      %678 = vmatpush1.bf16.msra.mxu0 0
      %679 = vmatprep.subr.bf16.mxu0 0
      %680 = vmatpush1.bf16.msra.mxu0 0
      %681 = vmatprep.subr.bf16.mxu0 0
      %682 = vmatpush1.bf16.msra.mxu0 0
      %683 = vmatprep.subr.bf16.mxu0 0
      %684 = vmatpush1.bf16.msra.mxu0 0
      %685 = vmatprep.subr.bf16.mxu0 0
      %686 = vmatpush1.bf16.msra.mxu0 0
      %687 = vmatprep.subr.bf16.mxu0 0
      %688 = vmatpush1.bf16.msra.mxu0 0
      %689 = vmatprep.subr.bf16.mxu0 0
      %690 = vmatpush1.bf16.msra.mxu0 0
      %691 = vmatprep.subr.bf16.mxu0 0
      %692 = vmatpush1.bf16.msra.mxu0 0
      %693 = vmatprep.subr.bf16.mxu0 0
      %694 = vmatpush1.bf16.msra.mxu0 0
      %695 = vmatprep.subr.bf16.mxu0 0
      %696 = vmatpush1.bf16.msra.mxu0 0
      %697 = vmatprep.subr.bf16.mxu0 0
      %698 = vmatpush1.bf16.msra.mxu0 0
      %699 = vmatprep.mubr.bf16.mxu0 0
      %700 = vmatmul.mubr.bf16.gmra.mrb[0].mxu0 %v653
      %v701 = vpop.f32.mrb[0].mxu0
      %v702 = vadd.f32 0.0, %v701
      %v703 = vpop.f32.mrb[0].mxu0
      %v704 = vpop.f32.mrb[0].mxu0
      %v705 = vadd.f32 0.0, %v704
      %v706 = vpop.f32.mrb[0].mxu0
      %707 = vmatprep.mubr.bf16.mxu0 0
      %708 = vmatmul.mubr.bf16.gmra.mrb[0].mxu0 %v656
      %v709 = vpop.f32.mrb[0].mxu0
      %v710 = vadd.f32 0.0, %v709
      %v711 = vpop.f32.mrb[0].mxu0
      %v712 = vpop.f32.mrb[0].mxu0
      %v713 = vadd.f32 0.0, %v712
      %v714 = vpop.f32.mrb[0].mxu0
      %715 = vmatprep.mubr.bf16.mxu0 0
      %716 = vmatmul.mubr.bf16.gmra.mrb[0].mxu0 %v659
      %v717 = vpop.f32.mrb[0].mxu0
      %v718 = vadd.f32 0.0, %v717
      %v719 = vpop.f32.mrb[0].mxu0
      %v720 = vpop.f32.mrb[0].mxu0
      %v721 = vadd.f32 0.0, %v720
      %v722 = vpop.f32.mrb[0].mxu0
      %723 = vmatprep.mubr.bf16.mxu0 0
      %724 = vmatmul.mubr.bf16.gmra.mrb[0].mxu0 %v662
      %v725 = vpop.f32.mrb[0].mxu0
      %v726 = vadd.f32 0.0, %v725
      %v727 = vpop.f32.mrb[0].mxu0
      %v728 = vpop.f32.mrb[0].mxu0
      %v729 = vadd.f32 0.0, %v728
      %v730 = vpop.f32.mrb[0].mxu0
      %731 = vdwg.mxu0
      %v732 = vadd.f32 %v605, %v702
      %v733 = vadd.f32 %v606, %v705
      %v734 = vadd.f32 %v607, %v710
      %v735 = vadd.f32 %v608, %v713
      %v736 = vadd.f32 %v609, %v718
      %v737 = vadd.f32 %v610, %v721
      %v738 = vadd.f32 %v611, %v726
      %v739 = vadd.f32 %v612, %v729
      %v740 = vld [vmem:[%s613 + $0x1] sm:$0xff]
      %v741 = vld [vmem:[%s613 + $0x11] sm:$0xff]
      %v742 = vld [vmem:[%s613 + $0x21] sm:$0xff]
      %v743 = vld [vmem:[%s613 + $0x31] sm:$0xff]
      %v744 = vld [vmem:[%s613 + $0x41] sm:$0xff]
      %v745 = vld [vmem:[%s613 + $0x51] sm:$0xff]
      %v746 = vld [vmem:[%s613 + $0x61] sm:$0xff]
      %v747 = vld [vmem:[%s613 + $0x71] sm:$0xff]
      %v748 = vmul.f32 %v740, %v250
      %v749 = vmul.f32 %v741, %v250
      %v750 = vmul.f32 %v742, %v250
      %v751 = vmul.f32 %v743, %v250
      %v752 = vmul.f32 %v744, %v250
      %v753 = vmul.f32 %v745, %v250
      %v754 = vmul.f32 %v746, %v250
      %v755 = vmul.f32 %v747, %v250
      %v756 = vadd.f32 %v748, %v264
      %v757 = vadd.f32 %v749, %v264
      %v758 = vadd.f32 %v750, %v264
      %v759 = vadd.f32 %v751, %v264
      %v760 = vadd.f32 %v752, %v264
      %v761 = vadd.f32 %v753, %v264
      %v762 = vadd.f32 %v754, %v264
      %v763 = vadd.f32 %v755, %v264
      %v764 = vmax.f32 %v756, 0.0
      %v765 = vmax.f32 %v757, 0.0
      %v766 = vmax.f32 %v758, 0.0
      %v767 = vmax.f32 %v759, 0.0
      %v768 = vmax.f32 %v760, 0.0
      %v769 = vmax.f32 %v761, 0.0
      %v770 = vmax.f32 %v762, 0.0
      %v771 = vmax.f32 %v763, 0.0
      %v772 = vpack.c.bf16 %v765, %v764
      %v773 = vpack.c.bf16 %v767, %v766
      %v774 = vpack.c.bf16 %v769, %v768
      %v775 = vpack.c.bf16 %v771, %v770
      %s776 = scalar_lea.vmem %s226, 16
      %v777 = vld [vmem:[%s776] sm:$0xf]
      %v779 = vsel %vm325, %v772, 0
      %v782 = vsel %vm325, %v773, 0
      %v785 = vsel %vm325, %v774, 0
      %v788 = vsel %vm325, %v775, 0
      %v791 = vsel %vm338, %v777, 0
      %793 = vmatprep.subr.bf16.mxu0 0
      %794 = vmatpush1.bf16.msra.mxu0 %v791
      %795 = vmatprep.subr.bf16.mxu0 0
      %796 = vmatpush1.bf16.msra.mxu0 0
      %797 = vmatprep.subr.bf16.mxu0 0
      %798 = vmatpush1.bf16.msra.mxu0 0
      %799 = vmatprep.subr.bf16.mxu0 0
      %800 = vmatpush1.bf16.msra.mxu0 0
      %801 = vmatprep.subr.bf16.mxu0 0
      %802 = vmatpush1.bf16.msra.mxu0 0
      %803 = vmatprep.subr.bf16.mxu0 0
      %804 = vmatpush1.bf16.msra.mxu0 0
      %805 = vmatprep.subr.bf16.mxu0 0
      %806 = vmatpush1.bf16.msra.mxu0 0
      %807 = vmatprep.subr.bf16.mxu0 0
      %808 = vmatpush1.bf16.msra.mxu0 0
      %809 = vmatprep.subr.bf16.mxu0 0
      %810 = vmatpush1.bf16.msra.mxu0 0
      %811 = vmatprep.subr.bf16.mxu0 0
      %812 = vmatpush1.bf16.msra.mxu0 0
      %813 = vmatprep.subr.bf16.mxu0 0
      %814 = vmatpush1.bf16.msra.mxu0 0
      %815 = vmatprep.subr.bf16.mxu0 0
      %816 = vmatpush1.bf16.msra.mxu0 0
      %817 = vmatprep.subr.bf16.mxu0 0
      %818 = vmatpush1.bf16.msra.mxu0 0
      %819 = vmatprep.subr.bf16.mxu0 0
      %820 = vmatpush1.bf16.msra.mxu0 0
      %821 = vmatprep.subr.bf16.mxu0 0
      %822 = vmatpush1.bf16.msra.mxu0 0
      %823 = vmatprep.subr.bf16.mxu0 0
      %824 = vmatpush1.bf16.msra.mxu0 0
      %825 = vmatprep.mubr.bf16.mxu0 0
      %826 = vmatmul.mubr.bf16.gmra.mrb[0].mxu0 %v779
      %v827 = vpop.f32.mrb[0].mxu0
      %v828 = vadd.f32 0.0, %v827
      %v829 = vpop.f32.mrb[0].mxu0
      %v830 = vpop.f32.mrb[0].mxu0
      %v831 = vadd.f32 0.0, %v830
      %v832 = vpop.f32.mrb[0].mxu0
      %833 = vmatprep.mubr.bf16.mxu0 0
      %834 = vmatmul.mubr.bf16.gmra.mrb[0].mxu0 %v782
      %v835 = vpop.f32.mrb[0].mxu0
      %v836 = vadd.f32 0.0, %v835
      %v837 = vpop.f32.mrb[0].mxu0
      %v838 = vpop.f32.mrb[0].mxu0
      %v839 = vadd.f32 0.0, %v838
      %v840 = vpop.f32.mrb[0].mxu0
      %841 = vmatprep.mubr.bf16.mxu0 0
      %842 = vmatmul.mubr.bf16.gmra.mrb[0].mxu0 %v785
      %v843 = vpop.f32.mrb[0].mxu0
      %v844 = vadd.f32 0.0, %v843
      %v845 = vpop.f32.mrb[0].mxu0
      %v846 = vpop.f32.mrb[0].mxu0
      %v847 = vadd.f32 0.0, %v846
      %v848 = vpop.f32.mrb[0].mxu0
      %849 = vmatprep.mubr.bf16.mxu0 0
      %850 = vmatmul.mubr.bf16.gmra.mrb[0].mxu0 %v788
      %v851 = vpop.f32.mrb[0].mxu0
      %v852 = vadd.f32 0.0, %v851
      %v853 = vpop.f32.mrb[0].mxu0
      %v854 = vpop.f32.mrb[0].mxu0
      %v855 = vadd.f32 0.0, %v854
      %v856 = vpop.f32.mrb[0].mxu0
      %857 = vdwg.mxu0
      %v858 = vadd.f32 %v732, %v828
      %v859 = vadd.f32 %v733, %v831
      %v860 = vadd.f32 %v734, %v836
      %v861 = vadd.f32 %v735, %v839
      %v862 = vadd.f32 %v736, %v844
      %v863 = vadd.f32 %v737, %v847
      %v864 = vadd.f32 %v738, %v852
      %v865 = vadd.f32 %v739, %v855
      %v866 = vld [vmem:[%s613 + $0x2] sm:$0xff]
      %v867 = vld [vmem:[%s613 + $0x12] sm:$0xff]
      %v868 = vld [vmem:[%s613 + $0x22] sm:$0xff]
      %v869 = vld [vmem:[%s613 + $0x32] sm:$0xff]
      %v870 = vld [vmem:[%s613 + $0x42] sm:$0xff]
      %v871 = vld [vmem:[%s613 + $0x52] sm:$0xff]
      %v872 = vld [vmem:[%s613 + $0x62] sm:$0xff]
      %v873 = vld [vmem:[%s613 + $0x72] sm:$0xff]
      %v874 = vmul.f32 %v866, %v250
      %v875 = vmul.f32 %v867, %v250
      %v876 = vmul.f32 %v868, %v250
      %v877 = vmul.f32 %v869, %v250
      %v878 = vmul.f32 %v870, %v250
      %v879 = vmul.f32 %v871, %v250
      %v880 = vmul.f32 %v872, %v250
      %v881 = vmul.f32 %v873, %v250
      %v882 = vadd.f32 %v874, %v264
      %v883 = vadd.f32 %v875, %v264
      %v884 = vadd.f32 %v876, %v264
      %v885 = vadd.f32 %v877, %v264
      %v886 = vadd.f32 %v878, %v264
      %v887 = vadd.f32 %v879, %v264
      %v888 = vadd.f32 %v880, %v264
      %v889 = vadd.f32 %v881, %v264
      %v890 = vmax.f32 %v882, 0.0
      %v891 = vmax.f32 %v883, 0.0
      %v892 = vmax.f32 %v884, 0.0
      %v893 = vmax.f32 %v885, 0.0
      %v894 = vmax.f32 %v886, 0.0
      %v895 = vmax.f32 %v887, 0.0
      %v896 = vmax.f32 %v888, 0.0
      %v897 = vmax.f32 %v889, 0.0
      %v898 = vpack.c.bf16 %v891, %v890
      %v899 = vpack.c.bf16 %v893, %v892
      %v900 = vpack.c.bf16 %v895, %v894
      %v901 = vpack.c.bf16 %v897, %v896
      %s902 = scalar_lea.vmem %s226, 20
      %v903 = vld [vmem:[%s902] sm:$0xf]
      %v905 = vsel %vm325, %v898, 0
      %v908 = vsel %vm325, %v899, 0
      %v911 = vsel %vm325, %v900, 0
      %v914 = vsel %vm325, %v901, 0
      %v917 = vsel %vm338, %v903, 0
      %919 = vmatprep.subr.bf16.mxu0 0
      %920 = vmatpush1.bf16.msra.mxu0 %v917
      %921 = vmatprep.subr.bf16.mxu0 0
      %922 = vmatpush1.bf16.msra.mxu0 0
      %923 = vmatprep.subr.bf16.mxu0 0
      %924 = vmatpush1.bf16.msra.mxu0 0
      %925 = vmatprep.subr.bf16.mxu0 0
      %926 = vmatpush1.bf16.msra.mxu0 0
      %927 = vmatprep.subr.bf16.mxu0 0
      %928 = vmatpush1.bf16.msra.mxu0 0
      %929 = vmatprep.subr.bf16.mxu0 0
      %930 = vmatpush1.bf16.msra.mxu0 0
      %931 = vmatprep.subr.bf16.mxu0 0
      %932 = vmatpush1.bf16.msra.mxu0 0
      %933 = vmatprep.subr.bf16.mxu0 0
      %934 = vmatpush1.bf16.msra.mxu0 0
      %935 = vmatprep.subr.bf16.mxu0 0
      %936 = vmatpush1.bf16.msra.mxu0 0
      %937 = vmatprep.subr.bf16.mxu0 0
      %938 = vmatpush1.bf16.msra.mxu0 0
      %939 = vmatprep.subr.bf16.mxu0 0
      %940 = vmatpush1.bf16.msra.mxu0 0
      %941 = vmatprep.subr.bf16.mxu0 0
      %942 = vmatpush1.bf16.msra.mxu0 0
      %943 = vmatprep.subr.bf16.mxu0 0
      %944 = vmatpush1.bf16.msra.mxu0 0
      %945 = vmatprep.subr.bf16.mxu0 0
      %946 = vmatpush1.bf16.msra.mxu0 0
      %947 = vmatprep.subr.bf16.mxu0 0
      %948 = vmatpush1.bf16.msra.mxu0 0
      %949 = vmatprep.subr.bf16.mxu0 0
      %950 = vmatpush1.bf16.msra.mxu0 0
      %951 = vmatprep.mubr.bf16.mxu0 0
      %952 = vmatmul.mubr.bf16.gmra.mrb[0].mxu0 %v905
      %v953 = vpop.f32.mrb[0].mxu0
      %v954 = vadd.f32 0.0, %v953
      %v955 = vpop.f32.mrb[0].mxu0
      %v956 = vpop.f32.mrb[0].mxu0
      %v957 = vadd.f32 0.0, %v956
      %v958 = vpop.f32.mrb[0].mxu0
      %959 = vmatprep.mubr.bf16.mxu0 0
      %960 = vmatmul.mubr.bf16.gmra.mrb[0].mxu0 %v908
      %v961 = vpop.f32.mrb[0].mxu0
      %v962 = vadd.f32 0.0, %v961
      %v963 = vpop.f32.mrb[0].mxu0
      %v964 = vpop.f32.mrb[0].mxu0
      %v965 = vadd.f32 0.0, %v964
      %v966 = vpop.f32.mrb[0].mxu0
      %967 = vmatprep.mubr.bf16.mxu0 0
      %968 = vmatmul.mubr.bf16.gmra.mrb[0].mxu0 %v911
      %v969 = vpop.f32.mrb[0].mxu0
      %v970 = vadd.f32 0.0, %v969
      %v971 = vpop.f32.mrb[0].mxu0
      %v972 = vpop.f32.mrb[0].mxu0
      %v973 = vadd.f32 0.0, %v972
      %v974 = vpop.f32.mrb[0].mxu0
      %975 = vmatprep.mubr.bf16.mxu0 0
      %976 = vmatmul.mubr.bf16.gmra.mrb[0].mxu0 %v914
      %v977 = vpop.f32.mrb[0].mxu0
      %v978 = vadd.f32 0.0, %v977
      %v979 = vpop.f32.mrb[0].mxu0
      %v980 = vpop.f32.mrb[0].mxu0
      %v981 = vadd.f32 0.0, %v980
      %v982 = vpop.f32.mrb[0].mxu0
      %983 = vdwg.mxu0
      %v984 = vadd.f32 %v858, %v954
      %v985 = vadd.f32 %v859, %v957
      %v986 = vadd.f32 %v860, %v962
      %v987 = vadd.f32 %v861, %v965
      %v988 = vadd.f32 %v862, %v970
      %v989 = vadd.f32 %v863, %v973
      %v990 = vadd.f32 %v864, %v978
      %v991 = vadd.f32 %v865, %v981
      %s992 = scalar_lea.vmem %s222, 32
      %v993 = vld [vmem:[%s992] sm:$0xff]
      %v994 = vld [vmem:[%s992 + $0x10] sm:$0xff]
      %v995 = vld [vmem:[%s992 + $0x20] sm:$0xff]
      %v996 = vld [vmem:[%s992 + $0x30] sm:$0xff]
      %v997 = vld [vmem:[%s992 + $0x40] sm:$0xff]
      %v998 = vld [vmem:[%s992 + $0x50] sm:$0xff]
      %v999 = vld [vmem:[%s992 + $0x60] sm:$0xff]
      %v1000 = vld [vmem:[%s992 + $0x70] sm:$0xff]
      %v1001 = vmul.f32 %v993, %v250
      %v1002 = vmul.f32 %v994, %v250
      %v1003 = vmul.f32 %v995, %v250
      %v1004 = vmul.f32 %v996, %v250
      %v1005 = vmul.f32 %v997, %v250
      %v1006 = vmul.f32 %v998, %v250
      %v1007 = vmul.f32 %v999, %v250
      %v1008 = vmul.f32 %v1000, %v250
      %v1009 = vadd.f32 %v1001, %v264
      %v1010 = vadd.f32 %v1002, %v264
      %v1011 = vadd.f32 %v1003, %v264
      %v1012 = vadd.f32 %v1004, %v264
      %v1013 = vadd.f32 %v1005, %v264
      %v1014 = vadd.f32 %v1006, %v264
      %v1015 = vadd.f32 %v1007, %v264
      %v1016 = vadd.f32 %v1008, %v264
      %v1017 = vmax.f32 %v1009, 0.0
      %v1018 = vmax.f32 %v1010, 0.0
      %v1019 = vmax.f32 %v1011, 0.0
      %v1020 = vmax.f32 %v1012, 0.0
      %v1021 = vmax.f32 %v1013, 0.0
      %v1022 = vmax.f32 %v1014, 0.0
      %v1023 = vmax.f32 %v1015, 0.0
      %v1024 = vmax.f32 %v1016, 0.0
      %v1025 = vpack.c.bf16 %v1018, %v1017
      %v1026 = vpack.c.bf16 %v1020, %v1019
      %v1027 = vpack.c.bf16 %v1022, %v1021
      %v1028 = vpack.c.bf16 %v1024, %v1023
      %s1029 = scalar_lea.vmem %s226, 24
      %v1030 = vld [vmem:[%s1029] sm:$0xf]
      %v1032 = vsel %vm325, %v1025, 0
      %v1035 = vsel %vm325, %v1026, 0
      %v1038 = vsel %vm325, %v1027, 0
      %v1041 = vsel %vm325, %v1028, 0
      %v1044 = vsel %vm338, %v1030, 0
      %1046 = vmatprep.subr.bf16.mxu0 0
      %1047 = vmatpush1.bf16.msra.mxu0 %v1044
      %1048 = vmatprep.subr.bf16.mxu0 0
      %1049 = vmatpush1.bf16.msra.mxu0 0
      %1050 = vmatprep.subr.bf16.mxu0 0
      %1051 = vmatpush1.bf16.msra.mxu0 0
      %1052 = vmatprep.subr.bf16.mxu0 0
      %1053 = vmatpush1.bf16.msra.mxu0 0
      %1054 = vmatprep.subr.bf16.mxu0 0
      %1055 = vmatpush1.bf16.msra.mxu0 0
      %1056 = vmatprep.subr.bf16.mxu0 0
      %1057 = vmatpush1.bf16.msra.mxu0 0
      %1058 = vmatprep.subr.bf16.mxu0 0
      %1059 = vmatpush1.bf16.msra.mxu0 0
      %1060 = vmatprep.subr.bf16.mxu0 0
      %1061 = vmatpush1.bf16.msra.mxu0 0
      %1062 = vmatprep.subr.bf16.mxu0 0
      %1063 = vmatpush1.bf16.msra.mxu0 0
      %1064 = vmatprep.subr.bf16.mxu0 0
      %1065 = vmatpush1.bf16.msra.mxu0 0
      %1066 = vmatprep.subr.bf16.mxu0 0
      %1067 = vmatpush1.bf16.msra.mxu0 0
      %1068 = vmatprep.subr.bf16.mxu0 0
      %1069 = vmatpush1.bf16.msra.mxu0 0
      %1070 = vmatprep.subr.bf16.mxu0 0
      %1071 = vmatpush1.bf16.msra.mxu0 0
      %1072 = vmatprep.subr.bf16.mxu0 0
      %1073 = vmatpush1.bf16.msra.mxu0 0
      %1074 = vmatprep.subr.bf16.mxu0 0
      %1075 = vmatpush1.bf16.msra.mxu0 0
      %1076 = vmatprep.subr.bf16.mxu0 0
      %1077 = vmatpush1.bf16.msra.mxu0 0
      %1078 = vmatprep.mubr.bf16.mxu0 0
      %1079 = vmatmul.mubr.bf16.gmra.mrb[0].mxu0 %v1032
      %v1080 = vpop.f32.mrb[0].mxu0
      %v1081 = vadd.f32 0.0, %v1080
      %v1082 = vpop.f32.mrb[0].mxu0
      %v1083 = vpop.f32.mrb[0].mxu0
      %v1084 = vadd.f32 0.0, %v1083
      %v1085 = vpop.f32.mrb[0].mxu0
      %1086 = vmatprep.mubr.bf16.mxu0 0
      %1087 = vmatmul.mubr.bf16.gmra.mrb[0].mxu0 %v1035
      %v1088 = vpop.f32.mrb[0].mxu0
      %v1089 = vadd.f32 0.0, %v1088
      %v1090 = vpop.f32.mrb[0].mxu0
      %v1091 = vpop.f32.mrb[0].mxu0
      %v1092 = vadd.f32 0.0, %v1091
      %v1093 = vpop.f32.mrb[0].mxu0
      %1094 = vmatprep.mubr.bf16.mxu0 0
      %1095 = vmatmul.mubr.bf16.gmra.mrb[0].mxu0 %v1038
      %v1096 = vpop.f32.mrb[0].mxu0
      %v1097 = vadd.f32 0.0, %v1096
      %v1098 = vpop.f32.mrb[0].mxu0
      %v1099 = vpop.f32.mrb[0].mxu0
      %v1100 = vadd.f32 0.0, %v1099
      %v1101 = vpop.f32.mrb[0].mxu0
      %1102 = vmatprep.mubr.bf16.mxu0 0
      %1103 = vmatmul.mubr.bf16.gmra.mrb[0].mxu0 %v1041
      %v1104 = vpop.f32.mrb[0].mxu0
      %v1105 = vadd.f32 0.0, %v1104
      %v1106 = vpop.f32.mrb[0].mxu0
      %v1107 = vpop.f32.mrb[0].mxu0
      %v1108 = vadd.f32 0.0, %v1107
      %v1109 = vpop.f32.mrb[0].mxu0
      %1110 = vdwg.mxu0
      %v1111 = vadd.f32 %v984, %v1081
      %v1112 = vadd.f32 %v985, %v1084
      %v1113 = vadd.f32 %v986, %v1089
      %v1114 = vadd.f32 %v987, %v1092
      %v1115 = vadd.f32 %v988, %v1097
      %v1116 = vadd.f32 %v989, %v1100
      %v1117 = vadd.f32 %v990, %v1105
      %v1118 = vadd.f32 %v991, %v1108
      %v1119 = vld [vmem:[%s992 + $0x1] sm:$0xff]
      %v1120 = vld [vmem:[%s992 + $0x11] sm:$0xff]
      %v1121 = vld [vmem:[%s992 + $0x21] sm:$0xff]
      %v1122 = vld [vmem:[%s992 + $0x31] sm:$0xff]
      %v1123 = vld [vmem:[%s992 + $0x41] sm:$0xff]
      %v1124 = vld [vmem:[%s992 + $0x51] sm:$0xff]
      %v1125 = vld [vmem:[%s992 + $0x61] sm:$0xff]
      %v1126 = vld [vmem:[%s992 + $0x71] sm:$0xff]
      %v1127 = vmul.f32 %v1119, %v250
      %v1128 = vmul.f32 %v1120, %v250
      %v1129 = vmul.f32 %v1121, %v250
      %v1130 = vmul.f32 %v1122, %v250
      %v1131 = vmul.f32 %v1123, %v250
      %v1132 = vmul.f32 %v1124, %v250
      %v1133 = vmul.f32 %v1125, %v250
      %v1134 = vmul.f32 %v1126, %v250
      %v1135 = vadd.f32 %v1127, %v264
      %v1136 = vadd.f32 %v1128, %v264
      %v1137 = vadd.f32 %v1129, %v264
      %v1138 = vadd.f32 %v1130, %v264
      %v1139 = vadd.f32 %v1131, %v264
      %v1140 = vadd.f32 %v1132, %v264
      %v1141 = vadd.f32 %v1133, %v264
      %v1142 = vadd.f32 %v1134, %v264
      %v1143 = vmax.f32 %v1135, 0.0
      %v1144 = vmax.f32 %v1136, 0.0
      %v1145 = vmax.f32 %v1137, 0.0
      %v1146 = vmax.f32 %v1138, 0.0
      %v1147 = vmax.f32 %v1139, 0.0
      %v1148 = vmax.f32 %v1140, 0.0
      %v1149 = vmax.f32 %v1141, 0.0
      %v1150 = vmax.f32 %v1142, 0.0
      %v1151 = vpack.c.bf16 %v1144, %v1143
      %v1152 = vpack.c.bf16 %v1146, %v1145
      %v1153 = vpack.c.bf16 %v1148, %v1147
      %v1154 = vpack.c.bf16 %v1150, %v1149
      %s1155 = scalar_lea.vmem %s226, 28
      %v1156 = vld [vmem:[%s1155] sm:$0xf]
      %v1158 = vsel %vm325, %v1151, 0
      %v1161 = vsel %vm325, %v1152, 0
      %v1164 = vsel %vm325, %v1153, 0
      %v1167 = vsel %vm325, %v1154, 0
      %v1170 = vsel %vm338, %v1156, 0
      %1172 = vmatprep.subr.bf16.mxu0 0
      %1173 = vmatpush1.bf16.msra.mxu0 %v1170
      %1174 = vmatprep.subr.bf16.mxu0 0
      %1175 = vmatpush1.bf16.msra.mxu0 0
      %1176 = vmatprep.subr.bf16.mxu0 0
      %1177 = vmatpush1.bf16.msra.mxu0 0
      %1178 = vmatprep.subr.bf16.mxu0 0
      %1179 = vmatpush1.bf16.msra.mxu0 0
      %1180 = vmatprep.subr.bf16.mxu0 0
      %1181 = vmatpush1.bf16.msra.mxu0 0
      %1182 = vmatprep.subr.bf16.mxu0 0
      %1183 = vmatpush1.bf16.msra.mxu0 0
      %1184 = vmatprep.subr.bf16.mxu0 0
      %1185 = vmatpush1.bf16.msra.mxu0 0
      %1186 = vmatprep.subr.bf16.mxu0 0
      %1187 = vmatpush1.bf16.msra.mxu0 0
      %1188 = vmatprep.subr.bf16.mxu0 0
      %1189 = vmatpush1.bf16.msra.mxu0 0
      %1190 = vmatprep.subr.bf16.mxu0 0
      %1191 = vmatpush1.bf16.msra.mxu0 0
      %1192 = vmatprep.subr.bf16.mxu0 0
      %1193 = vmatpush1.bf16.msra.mxu0 0
      %1194 = vmatprep.subr.bf16.mxu0 0
      %1195 = vmatpush1.bf16.msra.mxu0 0
      %1196 = vmatprep.subr.bf16.mxu0 0
      %1197 = vmatpush1.bf16.msra.mxu0 0
      %1198 = vmatprep.subr.bf16.mxu0 0
      %1199 = vmatpush1.bf16.msra.mxu0 0
      %1200 = vmatprep.subr.bf16.mxu0 0
      %1201 = vmatpush1.bf16.msra.mxu0 0
      %1202 = vmatprep.subr.bf16.mxu0 0
      %1203 = vmatpush1.bf16.msra.mxu0 0
      %1204 = vmatprep.mubr.bf16.mxu0 0
      %1205 = vmatmul.mubr.bf16.gmra.mrb[0].mxu0 %v1158
      %v1206 = vpop.f32.mrb[0].mxu0
      %v1207 = vadd.f32 0.0, %v1206
      %v1208 = vpop.f32.mrb[0].mxu0
      %v1209 = vpop.f32.mrb[0].mxu0
      %v1210 = vadd.f32 0.0, %v1209
      %v1211 = vpop.f32.mrb[0].mxu0
      %1212 = vmatprep.mubr.bf16.mxu0 0
      %1213 = vmatmul.mubr.bf16.gmra.mrb[0].mxu0 %v1161
      %v1214 = vpop.f32.mrb[0].mxu0
      %v1215 = vadd.f32 0.0, %v1214
      %v1216 = vpop.f32.mrb[0].mxu0
      %v1217 = vpop.f32.mrb[0].mxu0
      %v1218 = vadd.f32 0.0, %v1217
      %v1219 = vpop.f32.mrb[0].mxu0
      %1220 = vmatprep.mubr.bf16.mxu0 0
      %1221 = vmatmul.mubr.bf16.gmra.mrb[0].mxu0 %v1164
      %v1222 = vpop.f32.mrb[0].mxu0
      %v1223 = vadd.f32 0.0, %v1222
      %v1224 = vpop.f32.mrb[0].mxu0
      %v1225 = vpop.f32.mrb[0].mxu0
      %v1226 = vadd.f32 0.0, %v1225
      %v1227 = vpop.f32.mrb[0].mxu0
      %1228 = vmatprep.mubr.bf16.mxu0 0
      %1229 = vmatmul.mubr.bf16.gmra.mrb[0].mxu0 %v1167
      %v1230 = vpop.f32.mrb[0].mxu0
      %v1231 = vadd.f32 0.0, %v1230
      %v1232 = vpop.f32.mrb[0].mxu0
      %v1233 = vpop.f32.mrb[0].mxu0
      %v1234 = vadd.f32 0.0, %v1233
      %v1235 = vpop.f32.mrb[0].mxu0
      %1236 = vdwg.mxu0
      %v1237 = vadd.f32 %v1111, %v1207
      %v1238 = vadd.f32 %v1112, %v1210
      %v1239 = vadd.f32 %v1113, %v1215
      %v1240 = vadd.f32 %v1114, %v1218
      %v1241 = vadd.f32 %v1115, %v1223
      %v1242 = vadd.f32 %v1116, %v1226
      %v1243 = vadd.f32 %v1117, %v1231
      %v1244 = vadd.f32 %v1118, %v1234
      %v1245 = vld [vmem:[%s992 + $0x2] sm:$0xff]
      %v1246 = vld [vmem:[%s992 + $0x12] sm:$0xff]
      %v1247 = vld [vmem:[%s992 + $0x22] sm:$0xff]
      %v1248 = vld [vmem:[%s992 + $0x32] sm:$0xff]
      %v1249 = vld [vmem:[%s992 + $0x42] sm:$0xff]
      %v1250 = vld [vmem:[%s992 + $0x52] sm:$0xff]
      %v1251 = vld [vmem:[%s992 + $0x62] sm:$0xff]
      %v1252 = vld [vmem:[%s992 + $0x72] sm:$0xff]
      %v1253 = vmul.f32 %v1245, %v250
      %v1254 = vmul.f32 %v1246, %v250
      %v1255 = vmul.f32 %v1247, %v250
      %v1256 = vmul.f32 %v1248, %v250
      %v1257 = vmul.f32 %v1249, %v250
      %v1258 = vmul.f32 %v1250, %v250
      %v1259 = vmul.f32 %v1251, %v250
      %v1260 = vmul.f32 %v1252, %v250
      %v1261 = vadd.f32 %v1253, %v264
      %v1262 = vadd.f32 %v1254, %v264
      %v1263 = vadd.f32 %v1255, %v264
      %v1264 = vadd.f32 %v1256, %v264
      %v1265 = vadd.f32 %v1257, %v264
      %v1266 = vadd.f32 %v1258, %v264
      %v1267 = vadd.f32 %v1259, %v264
      %v1268 = vadd.f32 %v1260, %v264
      %v1269 = vmax.f32 %v1261, 0.0
      %v1270 = vmax.f32 %v1262, 0.0
      %v1271 = vmax.f32 %v1263, 0.0
      %v1272 = vmax.f32 %v1264, 0.0
      %v1273 = vmax.f32 %v1265, 0.0
      %v1274 = vmax.f32 %v1266, 0.0
      %v1275 = vmax.f32 %v1267, 0.0
      %v1276 = vmax.f32 %v1268, 0.0
      %v1277 = vpack.c.bf16 %v1270, %v1269
      %v1278 = vpack.c.bf16 %v1272, %v1271
      %v1279 = vpack.c.bf16 %v1274, %v1273
      %v1280 = vpack.c.bf16 %v1276, %v1275
      %s1281 = scalar_lea.vmem %s226, 32
      %v1282 = vld [vmem:[%s1281] sm:$0xf]
      %v1284 = vsel %vm325, %v1277, 0
      %v1287 = vsel %vm325, %v1278, 0
      %v1290 = vsel %vm325, %v1279, 0
      %v1293 = vsel %vm325, %v1280, 0
      %v1296 = vsel %vm338, %v1282, 0
      %1298 = vmatprep.subr.bf16.mxu0 0
      %1299 = vmatpush1.bf16.msra.mxu0 %v1296
      %1300 = vmatprep.subr.bf16.mxu0 0
      %1301 = vmatpush1.bf16.msra.mxu0 0
      %1302 = vmatprep.subr.bf16.mxu0 0
      %1303 = vmatpush1.bf16.msra.mxu0 0
      %1304 = vmatprep.subr.bf16.mxu0 0
      %1305 = vmatpush1.bf16.msra.mxu0 0
      %1306 = vmatprep.subr.bf16.mxu0 0
      %1307 = vmatpush1.bf16.msra.mxu0 0
      %1308 = vmatprep.subr.bf16.mxu0 0
      %1309 = vmatpush1.bf16.msra.mxu0 0
      %1310 = vmatprep.subr.bf16.mxu0 0
      %1311 = vmatpush1.bf16.msra.mxu0 0
      %1312 = vmatprep.subr.bf16.mxu0 0
      %1313 = vmatpush1.bf16.msra.mxu0 0
      %1314 = vmatprep.subr.bf16.mxu0 0
      %1315 = vmatpush1.bf16.msra.mxu0 0
      %1316 = vmatprep.subr.bf16.mxu0 0
      %1317 = vmatpush1.bf16.msra.mxu0 0
      %1318 = vmatprep.subr.bf16.mxu0 0
      %1319 = vmatpush1.bf16.msra.mxu0 0
      %1320 = vmatprep.subr.bf16.mxu0 0
      %1321 = vmatpush1.bf16.msra.mxu0 0
      %1322 = vmatprep.subr.bf16.mxu0 0
      %1323 = vmatpush1.bf16.msra.mxu0 0
      %1324 = vmatprep.subr.bf16.mxu0 0
      %1325 = vmatpush1.bf16.msra.mxu0 0
      %1326 = vmatprep.subr.bf16.mxu0 0
      %1327 = vmatpush1.bf16.msra.mxu0 0
      %1328 = vmatprep.subr.bf16.mxu0 0
      %1329 = vmatpush1.bf16.msra.mxu0 0
      %1330 = vmatprep.mubr.bf16.mxu0 0
      %1331 = vmatmul.mubr.bf16.gmra.mrb[0].mxu0 %v1284
      %v1332 = vpop.f32.mrb[0].mxu0
      %v1333 = vadd.f32 0.0, %v1332
      %v1334 = vpop.f32.mrb[0].mxu0
      %v1335 = vpop.f32.mrb[0].mxu0
      %v1336 = vadd.f32 0.0, %v1335
      %v1337 = vpop.f32.mrb[0].mxu0
      %1338 = vmatprep.mubr.bf16.mxu0 0
      %1339 = vmatmul.mubr.bf16.gmra.mrb[0].mxu0 %v1287
      %v1340 = vpop.f32.mrb[0].mxu0
      %v1341 = vadd.f32 0.0, %v1340
      %v1342 = vpop.f32.mrb[0].mxu0
      %v1343 = vpop.f32.mrb[0].mxu0
      %v1344 = vadd.f32 0.0, %v1343
      %v1345 = vpop.f32.mrb[0].mxu0
      %1346 = vmatprep.mubr.bf16.mxu0 0
      %1347 = vmatmul.mubr.bf16.gmra.mrb[0].mxu0 %v1290
      %v1348 = vpop.f32.mrb[0].mxu0
      %v1349 = vadd.f32 0.0, %v1348
      %v1350 = vpop.f32.mrb[0].mxu0
      %v1351 = vpop.f32.mrb[0].mxu0
      %v1352 = vadd.f32 0.0, %v1351
      %v1353 = vpop.f32.mrb[0].mxu0
      %1354 = vmatprep.mubr.bf16.mxu0 0
      %1355 = vmatmul.mubr.bf16.gmra.mrb[0].mxu0 %v1293
      %v1356 = vpop.f32.mrb[0].mxu0
      %v1357 = vadd.f32 0.0, %v1356
      %v1358 = vpop.f32.mrb[0].mxu0
      %v1359 = vpop.f32.mrb[0].mxu0
      %v1360 = vadd.f32 0.0, %v1359
      %v1361 = vpop.f32.mrb[0].mxu0
      %1362 = vdwg.mxu0
      %v1363 = vadd.f32 %v1237, %v1333
      %v1364 = vadd.f32 %v1238, %v1336
      %v1365 = vadd.f32 %v1239, %v1341
      %v1366 = vadd.f32 %v1240, %v1344
      %v1367 = vadd.f32 %v1241, %v1349
      %v1368 = vadd.f32 %v1242, %v1352
      %v1369 = vadd.f32 %v1243, %v1357
      %v1370 = vadd.f32 %v1244, %v1360
      %1371 = vst.msk [vmem:[%s234] sm:$0xff] %vm325, %v1363
      %1372 = vst.msk [vmem:[%s234 + $0x8] sm:$0xff] %vm325, %v1364
      %1373 = vst.msk [vmem:[%s234 + $0x10] sm:$0xff] %vm325, %v1365
      %1374 = vst.msk [vmem:[%s234 + $0x18] sm:$0xff] %vm325, %v1366
      %1375 = vst.msk [vmem:[%s234 + $0x20] sm:$0xff] %vm325, %v1367
      %1376 = vst.msk [vmem:[%s234 + $0x28] sm:$0xff] %vm325, %v1368
      %1377 = vst.msk [vmem:[%s234 + $0x30] sm:$0xff] %vm325, %v1369
      %1378 = vst.msk [vmem:[%s234 + $0x38] sm:$0xff] %vm325, %v1370
      %p1379 = scmp.lt.s32.totalorder %s19, 1
      %s1380 = scalar_select %p1379, %s19, 1
      %p1381 = scmp.lt.s32.totalorder %s20, 0
      %s1382 = scalar_select %p1381, %s20, 0
      %s1383 = smul.addr %s1380, 8
      %s1384 = sadd.s32 %s1382, %s1383
      %s1385 = smul.addr %s1384, 8
      %s1386 = scalar_lea.vmem %s4, %s1385
      // Predicated region
      $region37: #{network_block_forward.8} parent=35 // pred_check
        %p1387 = pneg %p141
      $region38: #{network_block_forward.8} parent=35 // pred_check_branch
        %1389 = sbr.rel (%p1387) target = $region40
      $region39: #{network_block_forward.8} parent=35 // pred_region
        _
      $region40: #{network_block_forward.8} parent=35 // pred_fallthru
        _
    $region36: #{network_block_forward.8} parent=5 // pred_fallthru
      _
    %p1390 = scmp.le.s32.totalorder 2, %s10
    // Predicated region
    $region41: #{network_block_forward.8} parent=5 // pred_check
      %p1391 = pneg %p1390
    $region42: #{network_block_forward.8} parent=5 // pred_check_branch
      %1393 = sbr.rel (%p1391) target = $region44
    $region43: #{network_block_forward.8} parent=5 // pred_region
      %s1394 = ssub.s32 %s10, 2
      // Predicated region
      $region45: #{network_block_forward.8} parent=43 // pred_check
        %p1395 = pneg %p147
      $region46: #{network_block_forward.8} parent=43 // pred_check_branch
        %1397 = sbr.rel (%p1395) target = $region48
      $region47: #{network_block_forward.8} parent=43 // pred_region
        %p1398 = scmp.lt.s32.totalorder %s21, 1
        %s1399 = scalar_select %p1398, %s21, 1
        %p1400 = scmp.lt.s32.totalorder %s22, 0
        %s1401 = scalar_select %p1400, %s22, 0
        %s1402 = smul.addr %s1399, 8
        %s1403 = sadd.s32 %s1401, %s1402
        %s1404 = smul.addr %s1403, 8
        %s1405 = scalar_lea.vmem %s4, %s1404
      $region48: #{network_block_forward.8} parent=43 // pred_fallthru
        _
    $region44: #{network_block_forward.8} parent=5 // pred_fallthru
      _
  $region6: #{network_block_forward.8} parent=0 // loop_footer
    %s14 = sadd.s32 1, %s10
  $region7: #{network_block_forward.8} parent=0 // loop_footer_branch
    %9 = sbr.rel target = $region3
  $region8: #{network_block_forward.8} parent=0 // loop_exit
    _

</llo_original>
